<compile_context>
chip_gen: v6e
topology: v6e:2x2x1
jax: 0.10.0
libtpu: 0.0.40
codegen_flags: <defaults>
</compile_context>

<pallas_src>
import numpy as np
import jax
import jax.numpy as jnp
from jax.experimental import pallas as pl
from jax.experimental.pallas import tpu as pltpu

# ---------------- small shapes consistent with the module ----------------
B = 2              # batch
N_NODES = 16       # n_nodes
MAX_CORE = 4       # max_core (length of the adjacency list)
INPUT_DIM = 16     # embed_dim of x
HIDDEN_DIM = 32
OUTPUT_DIM = 32
DIFFUSION_NUM = 2


def cdn_layer_dims(input_dim, hidden_dim, output_dim, diffusion_num):
    if diffusion_num == 1:
        return [(input_dim, output_dim)]
    dims = [(input_dim, hidden_dim)]
    dims += [(hidden_dim, hidden_dim)] * (diffusion_num - 2)
    dims += [(hidden_dim, output_dim)]
    return dims


LAYER_DIMS = cdn_layer_dims(INPUT_DIM, HIDDEN_DIM, OUTPUT_DIM, DIFFUSION_NUM)


# ---------------- Pallas kernel ----------------
def make_cdn_kernel(Bb, N, C, layer_dims):
    n_layers = len(layer_dims)

    def kernel(x_ref, adj_ref, *refs):
        out_ref = refs[-1]
        w_refs = refs[:-1]
        assert len(w_refs) == 4 * n_layers

        x = x_ref[...].astype(jnp.float32)          # (B, N, d_in0)
        adj = adj_ref[...].astype(jnp.float32)      # (B, C, N, N)

        for l, (d_in, d_out) in enumerate(layer_dims):
            w_lin = w_refs[4 * l + 0][...]           # (d_in, d_out)
            w_ih = w_refs[4 * l + 1][...]            # (d_out, 3*d_out)  gate order [r|z|n]
            w_hh = w_refs[4 * l + 2][...]            # (d_out, 3*d_out)
            vecs = w_refs[4 * l + 3][...]            # (3, 3*d_out) packed biases
            b_lin = vecs[0:1, :d_out]
            b_ih = vecs[1:2, :]
            b_hh = vecs[2:3, :]

            # ---- k-core diffusion: hx[b, c] = adj[b, c] @ x[b]  (plain 2-D matmuls) ----
            hx_list = []
            for b in range(Bb):
                a2 = adj[b].reshape(C * N, N)                                    # (C*N, N)
                hx_list.append(jnp.dot(a2, x[b], preferred_element_type=jnp.float32))
            hx = jnp.concatenate(hx_list, axis=0)                                # (B*C*N, d_in)

            # ---- Linear(d_in -> d_out) ----
            hx = jnp.dot(hx, w_lin, preferred_element_type=jnp.float32) + b_lin  # (B*C*N, d_out)

            # ---- GRU over the core axis, per (batch, node) sequence ----
            # input projection for every core step in one matmul
            gi_all = jnp.dot(hx, w_ih, preferred_element_type=jnp.float32) + b_ih
            gi_all = gi_all.reshape(Bb, C, N, 3 * d_out)

            h = jnp.zeros((Bb * N, d_out), jnp.float32)
            acc = jnp.zeros((Bb * N, d_out), jnp.float32)
            for t in range(C):                                   # static, unrolled
                gi = gi_all[:, t].reshape(Bb * N, 3 * d_out)
                gh = jnp.dot(h, w_hh, preferred_element_type=jnp.float32) + b_hh
                r = jax.nn.sigmoid(gi[:, :d_out] + gh[:, :d_out])
                z = jax.nn.sigmoid(gi[:, d_out:2 * d_out] + gh[:, d_out:2 * d_out])
                n = jnp.tanh(gi[:, 2 * d_out:] + r * gh[:, 2 * d_out:])
                h = (1.0 - z) * n + z * h
                acc = acc + h                                    # sum of GRU outputs over cores

            x = jnp.maximum(acc, 0.0).reshape(Bb, N, d_out)

        out_ref[...] = x

    return kernel


# ---------------- host-side parameter packing ----------------
def pack_params(params):
    packed = []
    for p in params:
        d_out = p["W_lin"].shape[0]
        vecs = np.zeros((3, 3 * d_out), np.float32)
        vecs[0, :d_out] = np.asarray(p["b_lin"])
        vecs[1, :] = np.asarray(p["b_ih"])
        vecs[2, :] = np.asarray(p["b_hh"])
        packed += [
            jnp.asarray(p["W_lin"]).T,     # (d_in, d_out)
            jnp.asarray(p["W_ih"]).T,      # (d_out, 3*d_out)
            jnp.asarray(p["W_hh"]).T,      # (d_out, 3*d_out)
            jnp.asarray(vecs),             # (3, 3*d_out)
        ]
    return tuple(packed)


# ---------------- wrapper ----------------
def _full_spec(a):
    nd = a.ndim
    return pl.BlockSpec(a.shape, lambda i, _nd=nd: (0,) * _nd)


def cdn_forward(x, adj_list, packed, layer_dims):
    Bb, N, _ = x.shape
    C = adj_list.shape[1]
    d_out_last = layer_dims[-1][1]
    kernel = make_cdn_kernel(Bb, N, C, layer_dims)
    inputs = (x, adj_list) + tuple(packed)

    return pl.pallas_call(
        kernel,
        out_shape=jax.ShapeDtypeStruct((Bb, N, d_out_last), jnp.float32),
        grid=(1,),                                  # single invocation: whole batch in one step
        in_specs=[_full_spec(a) for a in inputs],
        out_specs=pl.BlockSpec((Bb, N, d_out_last), lambda i: (0, 0, 0)),
        compiler_params=pltpu.CompilerParams(dimension_semantics=("arbitrary",)),
    )(*inputs)


# ---------------- pure-JAX reference (mirrors the PyTorch semantics) ----------------
def reference(x, adj_list, params):
    for p in params:
        W_lin, b_lin = p["W_lin"], p["b_lin"]
        W_ih, b_ih = p["W_ih"], p["b_ih"]
        W_hh, b_hh = p["W_hh"], p["b_hh"]
        Bb, N, _ = x.shape
        C = adj_list.shape[1]
        d_out = W_lin.shape[0]

        hx = jnp.einsum("bcij,bjd->bcid", adj_list, x)          # (B, C, N, d_in)
        hx = hx @ W_lin.T + b_lin                                # (B, C, N, d_out)

        seq = hx.transpose(0, 2, 1, 3).reshape(Bb * N, C, d_out)
        h = jnp.zeros((Bb * N, d_out), jnp.float32)
        acc = jnp.zeros((Bb * N, d_out), jnp.float32)
        for t in range(C):
            xt = seq[:, t]
            gi = xt @ W_ih.T + b_ih
            gh = h @ W_hh.T + b_hh
            r = jax.nn.sigmoid(gi[:, :d_out] + gh[:, :d_out])
            z = jax.nn.sigmoid(gi[:, d_out:2 * d_out] + gh[:, d_out:2 * d_out])
            n = jnp.tanh(gi[:, 2 * d_out:] + r * gh[:, 2 * d_out:])
            h = (1.0 - z) * n + z * h
            acc = acc + h
        x = jax.nn.relu(acc).reshape(Bb, N, d_out)
    return x


# ---------------- deterministic parameter init (PyTorch-style uniform) ----------------
def init_params(key, layer_dims):
    params = []
    for (d_in, d_out) in layer_dims:
        key, k0, k1, k2, k3, k4, k5 = jax.random.split(key, 7)
        bl = 1.0 / np.sqrt(d_in)
        bg = 1.0 / np.sqrt(d_out)
        u = lambda k, shape, bound: jax.random.uniform(k, shape, jnp.float32, -bound, bound)
        params.append({
            "W_lin": u(k0, (d_out, d_in), bl),
            "b_lin": u(k1, (d_out,), bl),
            "W_ih": u(k2, (3 * d_out, d_out), bg),
            "b_ih": u(k3, (3 * d_out,), bg),
            "W_hh": u(k4, (3 * d_out, d_out), bg),
            "b_hh": u(k5, (3 * d_out,), bg),
        })
    return params


if __name__ == "__main__":
    key = jax.random.PRNGKey(0)
    kp, kx, ka = jax.random.split(key, 3)

    params = init_params(kp, LAYER_DIMS)
    packed = pack_params(params)

    x = jax.random.normal(kx, (B, N_NODES, INPUT_DIM), jnp.float32)
    adj_raw = jax.random.uniform(ka, (B, MAX_CORE, N_NODES, N_NODES), jnp.float32)
    adj_list = adj_raw / jnp.sum(adj_raw, axis=-1, keepdims=True)   # row-stochastic diffusion

    out = cdn_forward(x, adj_list, packed, LAYER_DIMS)
    out = jax.block_until_ready(out)

    ref = reference(x, adj_list, params)
    np.testing.assert_allclose(np.asarray(out), np.asarray(ref), rtol=2e-3, atol=2e-3)

    print("KERNEL_OK")
</pallas_src>

<mosaic_0001>
module attributes {stable_mosaic.version = 11 : i64} {
  func.func @kernel(%arg0: i32, %arg1: memref<2x16x16xf32, #tpu.memory_space<vmem>>, %arg2: memref<2x4x16x16xf32, #tpu.memory_space<vmem>>, %arg3: memref<16x32xf32, #tpu.memory_space<vmem>>, %arg4: memref<32x96xf32, #tpu.memory_space<vmem>>, %arg5: memref<32x96xf32, #tpu.memory_space<vmem>>, %arg6: memref<3x96xf32, #tpu.memory_space<vmem>>, %arg7: memref<32x32xf32, #tpu.memory_space<vmem>>, %arg8: memref<32x96xf32, #tpu.memory_space<vmem>>, %arg9: memref<32x96xf32, #tpu.memory_space<vmem>>, %arg10: memref<3x96xf32, #tpu.memory_space<vmem>>, %arg11: memref<2x16x32xf32, #tpu.memory_space<vmem>>) attributes {dimension_semantics = [#tpu.dimension_semantics<arbitrary>], iteration_bounds = array<i64: 1>, scalar_prefetch = 0 : i64, scratch_operands = 0 : i64, tpu.core_type = #tpu.core_type<tc>, window_params = [{pipeline_mode = #tpu.pipeline_mode<synchronous>, transform_indices = @transform_0, window_bounds = array<i64: 2, 16, 16>}, {pipeline_mode = #tpu.pipeline_mode<synchronous>, transform_indices = @transform_1, window_bounds = array<i64: 2, 4, 16, 16>}, {pipeline_mode = #tpu.pipeline_mode<synchronous>, transform_indices = @transform_2, window_bounds = array<i64: 16, 32>}, {pipeline_mode = #tpu.pipeline_mode<synchronous>, transform_indices = @transform_3, window_bounds = array<i64: 32, 96>}, {pipeline_mode = #tpu.pipeline_mode<synchronous>, transform_indices = @transform_4, window_bounds = array<i64: 32, 96>}, {pipeline_mode = #tpu.pipeline_mode<synchronous>, transform_indices = @transform_5, window_bounds = array<i64: 3, 96>}, {pipeline_mode = #tpu.pipeline_mode<synchronous>, transform_indices = @transform_6, window_bounds = array<i64: 32, 32>}, {pipeline_mode = #tpu.pipeline_mode<synchronous>, transform_indices = @transform_7, window_bounds = array<i64: 32, 96>}, {pipeline_mode = #tpu.pipeline_mode<synchronous>, transform_indices = @transform_8, window_bounds = array<i64: 32, 96>}, {pipeline_mode = #tpu.pipeline_mode<synchronous>, transform_indices = @transform_9, window_bounds = array<i64: 3, 96>}, {pipeline_mode = #tpu.pipeline_mode<synchronous>, transform_indices = @transform_10, window_bounds = array<i64: 2, 16, 32>}]} {
    %c0 = arith.constant 0 : index
    %c0_0 = arith.constant 0 : index
    %c0_1 = arith.constant 0 : index
    %0 = vector.load %arg1[%c0, %c0_0, %c0_1] : memref<2x16x16xf32, #tpu.memory_space<vmem>>, vector<2x16x16xf32>
    %c0_2 = arith.constant 0 : index
    %c0_3 = arith.constant 0 : index
    %c0_4 = arith.constant 0 : index
    %c0_5 = arith.constant 0 : index
    %1 = vector.load %arg2[%c0_2, %c0_3, %c0_4, %c0_5] : memref<2x4x16x16xf32, #tpu.memory_space<vmem>>, vector<2x4x16x16xf32>
    %c0_6 = arith.constant 0 : index
    %c0_7 = arith.constant 0 : index
    %2 = vector.load %arg3[%c0_6, %c0_7] : memref<16x32xf32, #tpu.memory_space<vmem>>, vector<16x32xf32>
    %c0_8 = arith.constant 0 : index
    %c0_9 = arith.constant 0 : index
    %3 = vector.load %arg4[%c0_8, %c0_9] : memref<32x96xf32, #tpu.memory_space<vmem>>, vector<32x96xf32>
    %c0_10 = arith.constant 0 : index
    %c0_11 = arith.constant 0 : index
    %4 = vector.load %arg5[%c0_10, %c0_11] : memref<32x96xf32, #tpu.memory_space<vmem>>, vector<32x96xf32>
    %c0_12 = arith.constant 0 : index
    %c0_13 = arith.constant 0 : index
    %5 = vector.load %arg6[%c0_12, %c0_13] : memref<3x96xf32, #tpu.memory_space<vmem>>, vector<3x96xf32>
    %6 = vector.extract_strided_slice %5 {offsets = [0, 0], sizes = [1, 32], strides = [1, 1]} : vector<3x96xf32> to vector<1x32xf32>
    %7 = vector.extract_strided_slice %5 {offsets = [1, 0], sizes = [1, 96], strides = [1, 1]} : vector<3x96xf32> to vector<1x96xf32>
    %8 = vector.extract_strided_slice %5 {offsets = [2, 0], sizes = [1, 96], strides = [1, 1]} : vector<3x96xf32> to vector<1x96xf32>
    %9 = vector.extract_strided_slice %1 {offsets = [0, 0, 0, 0], sizes = [1, 4, 16, 16], strides = [1, 1, 1, 1]} : vector<2x4x16x16xf32> to vector<1x4x16x16xf32>
    %10 = vector.shape_cast %9 : vector<1x4x16x16xf32> to vector<4x16x16xf32>
    %11 = vector.shape_cast %10 : vector<4x16x16xf32> to vector<64x16xf32>
    %12 = vector.extract_strided_slice %0 {offsets = [0, 0, 0], sizes = [1, 16, 16], strides = [1, 1, 1]} : vector<2x16x16xf32> to vector<1x16x16xf32>
    %13 = vector.shape_cast %12 : vector<1x16x16xf32> to vector<16x16xf32>
    %cst = arith.constant dense<0.000000e+00> : vector<64x16xf32>
    %14 = tpu.matmul %11, %13, %cst {dimension_numbers = #tpu.dot_dimension_numbers<[1], [0], [0], [1], [0, 0, 1, 1], [], []>} : vector<64x16xf32>, vector<16x16xf32>, vector<64x16xf32> -> vector<64x16xf32>
    %15 = vector.extract_strided_slice %1 {offsets = [1, 0, 0, 0], sizes = [1, 4, 16, 16], strides = [1, 1, 1, 1]} : vector<2x4x16x16xf32> to vector<1x4x16x16xf32>
    %16 = vector.shape_cast %15 : vector<1x4x16x16xf32> to vector<4x16x16xf32>
    %17 = vector.shape_cast %16 : vector<4x16x16xf32> to vector<64x16xf32>
    %18 = vector.extract_strided_slice %0 {offsets = [1, 0, 0], sizes = [1, 16, 16], strides = [1, 1, 1]} : vector<2x16x16xf32> to vector<1x16x16xf32>
    %19 = vector.shape_cast %18 : vector<1x16x16xf32> to vector<16x16xf32>
    %cst_14 = arith.constant dense<0.000000e+00> : vector<64x16xf32>
    %20 = tpu.matmul %17, %19, %cst_14 {dimension_numbers = #tpu.dot_dimension_numbers<[1], [0], [0], [1], [0, 0, 1, 1], [], []>} : vector<64x16xf32>, vector<16x16xf32>, vector<64x16xf32> -> vector<64x16xf32>
    %21 = tpu.concatenate %14, %20 in 0 : vector<64x16xf32>, vector<64x16xf32> -> vector<128x16xf32>
    %cst_15 = arith.constant dense<0.000000e+00> : vector<128x32xf32>
    %22 = tpu.matmul %21, %2, %cst_15 {dimension_numbers = #tpu.dot_dimension_numbers<[1], [0], [0], [1], [0, 0, 1, 1], [], []>} : vector<128x16xf32>, vector<16x32xf32>, vector<128x32xf32> -> vector<128x32xf32>
    %23 = vector.broadcast %6 : vector<1x32xf32> to vector<128x32xf32>
    %24 = arith.addf %22, %23 : vector<128x32xf32>
    %cst_16 = arith.constant dense<0.000000e+00> : vector<128x96xf32>
    %25 = tpu.matmul %24, %3, %cst_16 {dimension_numbers = #tpu.dot_dimension_numbers<[1], [0], [0], [1], [0, 0, 1, 1], [], []>} : vector<128x32xf32>, vector<32x96xf32>, vector<128x96xf32> -> vector<128x96xf32>
    %26 = vector.broadcast %7 : vector<1x96xf32> to vector<128x96xf32>
    %27 = arith.addf %25, %26 : vector<128x96xf32>
    %28 = vector.shape_cast %27 : vector<128x96xf32> to vector<2x4x16x96xf32>
    %cst_17 = arith.constant 0.000000e+00 : f32
    %29 = vector.broadcast %cst_17 : f32 to vector<32x32xf32>
    %cst_18 = arith.constant 0.000000e+00 : f32
    %30 = vector.broadcast %cst_18 : f32 to vector<32x32xf32>
    %31 = vector.extract_strided_slice %28 {offsets = [0, 0, 0, 0], sizes = [2, 1, 16, 96], strides = [1, 1, 1, 1]} : vector<2x4x16x96xf32> to vector<2x1x16x96xf32>
    %32 = vector.shape_cast %31 : vector<2x1x16x96xf32> to vector<2x16x96xf32>
    %33 = vector.shape_cast %32 : vector<2x16x96xf32> to vector<32x96xf32>
    %cst_19 = arith.constant dense<0.000000e+00> : vector<32x96xf32>
    %34 = tpu.matmul %29, %4, %cst_19 {dimension_numbers = #tpu.dot_dimension_numbers<[1], [0], [0], [1], [0, 0, 1, 1], [], []>} : vector<32x32xf32>, vector<32x96xf32>, vector<32x96xf32> -> vector<32x96xf32>
    %35 = vector.broadcast %8 : vector<1x96xf32> to vector<32x96xf32>
    %36 = arith.addf %34, %35 : vector<32x96xf32>
    %37 = vector.extract_strided_slice %33 {offsets = [0, 0], sizes = [32, 32], strides = [1, 1]} : vector<32x96xf32> to vector<32x32xf32>
    %38 = vector.extract_strided_slice %36 {offsets = [0, 0], sizes = [32, 32], strides = [1, 1]} : vector<32x96xf32> to vector<32x32xf32>
    %39 = arith.addf %37, %38 : vector<32x32xf32>
    %40 = arith.negf %39 : vector<32x32xf32>
    %41 = math.exp %40 : vector<32x32xf32>
    %cst_20 = arith.constant 1.000000e+00 : f32
    %42 = vector.broadcast %cst_20 : f32 to vector<32x32xf32>
    %43 = arith.addf %42, %41 : vector<32x32xf32>
    %44 = arith.divf %42, %43 : vector<32x32xf32>
    %45 = vector.extract_strided_slice %33 {offsets = [0, 32], sizes = [32, 32], strides = [1, 1]} : vector<32x96xf32> to vector<32x32xf32>
    %46 = vector.extract_strided_slice %36 {offsets = [0, 32], sizes = [32, 32], strides = [1, 1]} : vector<32x96xf32> to vector<32x32xf32>
    %47 = arith.addf %45, %46 : vector<32x32xf32>
    %48 = arith.negf %47 : vector<32x32xf32>
    %49 = math.exp %48 : vector<32x32xf32>
    %cst_21 = arith.constant 1.000000e+00 : f32
    %50 = vector.broadcast %cst_21 : f32 to vector<32x32xf32>
    %51 = arith.addf %50, %49 : vector<32x32xf32>
    %52 = arith.divf %50, %51 : vector<32x32xf32>
    %53 = vector.extract_strided_slice %33 {offsets = [0, 64], sizes = [32, 32], strides = [1, 1]} : vector<32x96xf32> to vector<32x32xf32>
    %54 = vector.extract_strided_slice %36 {offsets = [0, 64], sizes = [32, 32], strides = [1, 1]} : vector<32x96xf32> to vector<32x32xf32>
    %55 = arith.mulf %44, %54 : vector<32x32xf32>
    %56 = arith.addf %53, %55 : vector<32x32xf32>
    %57 = math.tanh %56 : vector<32x32xf32>
    %cst_22 = arith.constant 1.000000e+00 : f32
    %58 = vector.broadcast %cst_22 : f32 to vector<32x32xf32>
    %59 = arith.subf %58, %52 : vector<32x32xf32>
    %60 = arith.mulf %59, %57 : vector<32x32xf32>
    %61 = arith.mulf %52, %29 : vector<32x32xf32>
    %62 = arith.addf %60, %61 : vector<32x32xf32>
    %63 = arith.addf %30, %62 : vector<32x32xf32>
    %64 = vector.extract_strided_slice %28 {offsets = [0, 1, 0, 0], sizes = [2, 1, 16, 96], strides = [1, 1, 1, 1]} : vector<2x4x16x96xf32> to vector<2x1x16x96xf32>
    %65 = vector.shape_cast %64 : vector<2x1x16x96xf32> to vector<2x16x96xf32>
    %66 = vector.shape_cast %65 : vector<2x16x96xf32> to vector<32x96xf32>
    %cst_23 = arith.constant dense<0.000000e+00> : vector<32x96xf32>
    %67 = tpu.matmul %62, %4, %cst_23 {dimension_numbers = #tpu.dot_dimension_numbers<[1], [0], [0], [1], [0, 0, 1, 1], [], []>} : vector<32x32xf32>, vector<32x96xf32>, vector<32x96xf32> -> vector<32x96xf32>
    %68 = vector.broadcast %8 : vector<1x96xf32> to vector<32x96xf32>
    %69 = arith.addf %67, %68 : vector<32x96xf32>
    %70 = vector.extract_strided_slice %66 {offsets = [0, 0], sizes = [32, 32], strides = [1, 1]} : vector<32x96xf32> to vector<32x32xf32>
    %71 = vector.extract_strided_slice %69 {offsets = [0, 0], sizes = [32, 32], strides = [1, 1]} : vector<32x96xf32> to vector<32x32xf32>
    %72 = arith.addf %70, %71 : vector<32x32xf32>
    %73 = arith.negf %72 : vector<32x32xf32>
    %74 = math.exp %73 : vector<32x32xf32>
    %cst_24 = arith.constant 1.000000e+00 : f32
    %75 = vector.broadcast %cst_24 : f32 to vector<32x32xf32>
    %76 = arith.addf %75, %74 : vector<32x32xf32>
    %77 = arith.divf %75, %76 : vector<32x32xf32>
    %78 = vector.extract_strided_slice %66 {offsets = [0, 32], sizes = [32, 32], strides = [1, 1]} : vector<32x96xf32> to vector<32x32xf32>
    %79 = vector.extract_strided_slice %69 {offsets = [0, 32], sizes = [32, 32], strides = [1, 1]} : vector<32x96xf32> to vector<32x32xf32>
    %80 = arith.addf %78, %79 : vector<32x32xf32>
    %81 = arith.negf %80 : vector<32x32xf32>
    %82 = math.exp %81 : vector<32x32xf32>
    %cst_25 = arith.constant 1.000000e+00 : f32
    %83 = vector.broadcast %cst_25 : f32 to vector<32x32xf32>
    %84 = arith.addf %83, %82 : vector<32x32xf32>
    %85 = arith.divf %83, %84 : vector<32x32xf32>
    %86 = vector.extract_strided_slice %66 {offsets = [0, 64], sizes = [32, 32], strides = [1, 1]} : vector<32x96xf32> to vector<32x32xf32>
    %87 = vector.extract_strided_slice %69 {offsets = [0, 64], sizes = [32, 32], strides = [1, 1]} : vector<32x96xf32> to vector<32x32xf32>
    %88 = arith.mulf %77, %87 : vector<32x32xf32>
    %89 = arith.addf %86, %88 : vector<32x32xf32>
    %90 = math.tanh %89 : vector<32x32xf32>
    %cst_26 = arith.constant 1.000000e+00 : f32
    %91 = vector.broadcast %cst_26 : f32 to vector<32x32xf32>
    %92 = arith.subf %91, %85 : vector<32x32xf32>
    %93 = arith.mulf %92, %90 : vector<32x32xf32>
    %94 = arith.mulf %85, %62 : vector<32x32xf32>
    %95 = arith.addf %93, %94 : vector<32x32xf32>
    %96 = arith.addf %63, %95 : vector<32x32xf32>
    %97 = vector.extract_strided_slice %28 {offsets = [0, 2, 0, 0], sizes = [2, 1, 16, 96], strides = [1, 1, 1, 1]} : vector<2x4x16x96xf32> to vector<2x1x16x96xf32>
    %98 = vector.shape_cast %97 : vector<2x1x16x96xf32> to vector<2x16x96xf32>
    %99 = vector.shape_cast %98 : vector<2x16x96xf32> to vector<32x96xf32>
    %cst_27 = arith.constant dense<0.000000e+00> : vector<32x96xf32>
    %100 = tpu.matmul %95, %4, %cst_27 {dimension_numbers = #tpu.dot_dimension_numbers<[1], [0], [0], [1], [0, 0, 1, 1], [], []>} : vector<32x32xf32>, vector<32x96xf32>, vector<32x96xf32> -> vector<32x96xf32>
    %101 = vector.broadcast %8 : vector<1x96xf32> to vector<32x96xf32>
    %102 = arith.addf %100, %101 : vector<32x96xf32>
    %103 = vector.extract_strided_slice %99 {offsets = [0, 0], sizes = [32, 32], strides = [1, 1]} : vector<32x96xf32> to vector<32x32xf32>
    %104 = vector.extract_strided_slice %102 {offsets = [0, 0], sizes = [32, 32], strides = [1, 1]} : vector<32x96xf32> to vector<32x32xf32>
    %105 = arith.addf %103, %104 : vector<32x32xf32>
    %106 = arith.negf %105 : vector<32x32xf32>
    %107 = math.exp %106 : vector<32x32xf32>
    %cst_28 = arith.constant 1.000000e+00 : f32
    %108 = vector.broadcast %cst_28 : f32 to vector<32x32xf32>
    %109 = arith.addf %108, %107 : vector<32x32xf32>
    %110 = arith.divf %108, %109 : vector<32x32xf32>
    %111 = vector.extract_strided_slice %99 {offsets = [0, 32], sizes = [32, 32], strides = [1, 1]} : vector<32x96xf32> to vector<32x32xf32>
    %112 = vector.extract_strided_slice %102 {offsets = [0, 32], sizes = [32, 32], strides = [1, 1]} : vector<32x96xf32> to vector<32x32xf32>
    %113 = arith.addf %111, %112 : vector<32x32xf32>
    %114 = arith.negf %113 : vector<32x32xf32>
    %115 = math.exp %114 : vector<32x32xf32>
    %cst_29 = arith.constant 1.000000e+00 : f32
    %116 = vector.broadcast %cst_29 : f32 to vector<32x32xf32>
    %117 = arith.addf %116, %115 : vector<32x32xf32>
    %118 = arith.divf %116, %117 : vector<32x32xf32>
    %119 = vector.extract_strided_slice %99 {offsets = [0, 64], sizes = [32, 32], strides = [1, 1]} : vector<32x96xf32> to vector<32x32xf32>
    %120 = vector.extract_strided_slice %102 {offsets = [0, 64], sizes = [32, 32], strides = [1, 1]} : vector<32x96xf32> to vector<32x32xf32>
    %121 = arith.mulf %110, %120 : vector<32x32xf32>
    %122 = arith.addf %119, %121 : vector<32x32xf32>
    %123 = math.tanh %122 : vector<32x32xf32>
    %cst_30 = arith.constant 1.000000e+00 : f32
    %124 = vector.broadcast %cst_30 : f32 to vector<32x32xf32>
    %125 = arith.subf %124, %118 : vector<32x32xf32>
    %126 = arith.mulf %125, %123 : vector<32x32xf32>
    %127 = arith.mulf %118, %95 : vector<32x32xf32>
    %128 = arith.addf %126, %127 : vector<32x32xf32>
    %129 = arith.addf %96, %128 : vector<32x32xf32>
    %130 = vector.extract_strided_slice %28 {offsets = [0, 3, 0, 0], sizes = [2, 1, 16, 96], strides = [1, 1, 1, 1]} : vector<2x4x16x96xf32> to vector<2x1x16x96xf32>
    %131 = vector.shape_cast %130 : vector<2x1x16x96xf32> to vector<2x16x96xf32>
    %132 = vector.shape_cast %131 : vector<2x16x96xf32> to vector<32x96xf32>
    %cst_31 = arith.constant dense<0.000000e+00> : vector<32x96xf32>
    %133 = tpu.matmul %128, %4, %cst_31 {dimension_numbers = #tpu.dot_dimension_numbers<[1], [0], [0], [1], [0, 0, 1, 1], [], []>} : vector<32x32xf32>, vector<32x96xf32>, vector<32x96xf32> -> vector<32x96xf32>
    %134 = vector.broadcast %8 : vector<1x96xf32> to vector<32x96xf32>
    %135 = arith.addf %133, %134 : vector<32x96xf32>
    %136 = vector.extract_strided_slice %132 {offsets = [0, 0], sizes = [32, 32], strides = [1, 1]} : vector<32x96xf32> to vector<32x32xf32>
    %137 = vector.extract_strided_slice %135 {offsets = [0, 0], sizes = [32, 32], strides = [1, 1]} : vector<32x96xf32> to vector<32x32xf32>
    %138 = arith.addf %136, %137 : vector<32x32xf32>
    %139 = arith.negf %138 : vector<32x32xf32>
    %140 = math.exp %139 : vector<32x32xf32>
    %cst_32 = arith.constant 1.000000e+00 : f32
    %141 = vector.broadcast %cst_32 : f32 to vector<32x32xf32>
    %142 = arith.addf %141, %140 : vector<32x32xf32>
    %143 = arith.divf %141, %142 : vector<32x32xf32>
    %144 = vector.extract_strided_slice %132 {offsets = [0, 32], sizes = [32, 32], strides = [1, 1]} : vector<32x96xf32> to vector<32x32xf32>
    %145 = vector.extract_strided_slice %135 {offsets = [0, 32], sizes = [32, 32], strides = [1, 1]} : vector<32x96xf32> to vector<32x32xf32>
    %146 = arith.addf %144, %145 : vector<32x32xf32>
    %147 = arith.negf %146 : vector<32x32xf32>
    %148 = math.exp %147 : vector<32x32xf32>
    %cst_33 = arith.constant 1.000000e+00 : f32
    %149 = vector.broadcast %cst_33 : f32 to vector<32x32xf32>
    %150 = arith.addf %149, %148 : vector<32x32xf32>
    %151 = arith.divf %149, %150 : vector<32x32xf32>
    %152 = vector.extract_strided_slice %132 {offsets = [0, 64], sizes = [32, 32], strides = [1, 1]} : vector<32x96xf32> to vector<32x32xf32>
    %153 = vector.extract_strided_slice %135 {offsets = [0, 64], sizes = [32, 32], strides = [1, 1]} : vector<32x96xf32> to vector<32x32xf32>
    %154 = arith.mulf %143, %153 : vector<32x32xf32>
    %155 = arith.addf %152, %154 : vector<32x32xf32>
    %156 = math.tanh %155 : vector<32x32xf32>
    %cst_34 = arith.constant 1.000000e+00 : f32
    %157 = vector.broadcast %cst_34 : f32 to vector<32x32xf32>
    %158 = arith.subf %157, %151 : vector<32x32xf32>
    %159 = arith.mulf %158, %156 : vector<32x32xf32>
    %160 = arith.mulf %151, %128 : vector<32x32xf32>
    %161 = arith.addf %159, %160 : vector<32x32xf32>
    %162 = arith.addf %129, %161 : vector<32x32xf32>
    %cst_35 = arith.constant 0.000000e+00 : f32
    %163 = vector.broadcast %cst_35 : f32 to vector<32x32xf32>
    %164 = arith.maximumf %162, %163 : vector<32x32xf32>
    %165 = vector.shape_cast %164 : vector<32x32xf32> to vector<2x16x32xf32>
    %c0_36 = arith.constant 0 : index
    %c0_37 = arith.constant 0 : index
    %166 = vector.load %arg7[%c0_36, %c0_37] : memref<32x32xf32, #tpu.memory_space<vmem>>, vector<32x32xf32>
    %c0_38 = arith.constant 0 : index
    %c0_39 = arith.constant 0 : index
    %167 = vector.load %arg8[%c0_38, %c0_39] : memref<32x96xf32, #tpu.memory_space<vmem>>, vector<32x96xf32>
    %c0_40 = arith.constant 0 : index
    %c0_41 = arith.constant 0 : index
    %168 = vector.load %arg9[%c0_40, %c0_41] : memref<32x96xf32, #tpu.memory_space<vmem>>, vector<32x96xf32>
    %c0_42 = arith.constant 0 : index
    %c0_43 = arith.constant 0 : index
    %169 = vector.load %arg10[%c0_42, %c0_43] : memref<3x96xf32, #tpu.memory_space<vmem>>, vector<3x96xf32>
    %170 = vector.extract_strided_slice %169 {offsets = [0, 0], sizes = [1, 32], strides = [1, 1]} : vector<3x96xf32> to vector<1x32xf32>
    %171 = vector.extract_strided_slice %169 {offsets = [1, 0], sizes = [1, 96], strides = [1, 1]} : vector<3x96xf32> to vector<1x96xf32>
    %172 = vector.extract_strided_slice %169 {offsets = [2, 0], sizes = [1, 96], strides = [1, 1]} : vector<3x96xf32> to vector<1x96xf32>
    %173 = vector.extract_strided_slice %1 {offsets = [0, 0, 0, 0], sizes = [1, 4, 16, 16], strides = [1, 1, 1, 1]} : vector<2x4x16x16xf32> to vector<1x4x16x16xf32>
    %174 = vector.shape_cast %173 : vector<1x4x16x16xf32> to vector<4x16x16xf32>
    %175 = vector.shape_cast %174 : vector<4x16x16xf32> to vector<64x16xf32>
    %176 = vector.extract_strided_slice %165 {offsets = [0, 0, 0], sizes = [1, 16, 32], strides = [1, 1, 1]} : vector<2x16x32xf32> to vector<1x16x32xf32>
    %177 = vector.shape_cast %176 : vector<1x16x32xf32> to vector<16x32xf32>
    %cst_44 = arith.constant dense<0.000000e+00> : vector<64x32xf32>
    %178 = tpu.matmul %175, %177, %cst_44 {dimension_numbers = #tpu.dot_dimension_numbers<[1], [0], [0], [1], [0, 0, 1, 1], [], []>} : vector<64x16xf32>, vector<16x32xf32>, vector<64x32xf32> -> vector<64x32xf32>
    %179 = vector.extract_strided_slice %1 {offsets = [1, 0, 0, 0], sizes = [1, 4, 16, 16], strides = [1, 1, 1, 1]} : vector<2x4x16x16xf32> to vector<1x4x16x16xf32>
    %180 = vector.shape_cast %179 : vector<1x4x16x16xf32> to vector<4x16x16xf32>
    %181 = vector.shape_cast %180 : vector<4x16x16xf32> to vector<64x16xf32>
    %182 = vector.extract_strided_slice %165 {offsets = [1, 0, 0], sizes = [1, 16, 32], strides = [1, 1, 1]} : vector<2x16x32xf32> to vector<1x16x32xf32>
    %183 = vector.shape_cast %182 : vector<1x16x32xf32> to vector<16x32xf32>
    %cst_45 = arith.constant dense<0.000000e+00> : vector<64x32xf32>
    %184 = tpu.matmul %181, %183, %cst_45 {dimension_numbers = #tpu.dot_dimension_numbers<[1], [0], [0], [1], [0, 0, 1, 1], [], []>} : vector<64x16xf32>, vector<16x32xf32>, vector<64x32xf32> -> vector<64x32xf32>
    %185 = tpu.concatenate %178, %184 in 0 : vector<64x32xf32>, vector<64x32xf32> -> vector<128x32xf32>
    %cst_46 = arith.constant dense<0.000000e+00> : vector<128x32xf32>
    %186 = tpu.matmul %185, %166, %cst_46 {dimension_numbers = #tpu.dot_dimension_numbers<[1], [0], [0], [1], [0, 0, 1, 1], [], []>} : vector<128x32xf32>, vector<32x32xf32>, vector<128x32xf32> -> vector<128x32xf32>
    %187 = vector.broadcast %170 : vector<1x32xf32> to vector<128x32xf32>
    %188 = arith.addf %186, %187 : vector<128x32xf32>
    %cst_47 = arith.constant dense<0.000000e+00> : vector<128x96xf32>
    %189 = tpu.matmul %188, %167, %cst_47 {dimension_numbers = #tpu.dot_dimension_numbers<[1], [0], [0], [1], [0, 0, 1, 1], [], []>} : vector<128x32xf32>, vector<32x96xf32>, vector<128x96xf32> -> vector<128x96xf32>
    %190 = vector.broadcast %171 : vector<1x96xf32> to vector<128x96xf32>
    %191 = arith.addf %189, %190 : vector<128x96xf32>
    %192 = vector.shape_cast %191 : vector<128x96xf32> to vector<2x4x16x96xf32>
    %cst_48 = arith.constant 0.000000e+00 : f32
    %193 = vector.broadcast %cst_48 : f32 to vector<32x32xf32>
    %cst_49 = arith.constant 0.000000e+00 : f32
    %194 = vector.broadcast %cst_49 : f32 to vector<32x32xf32>
    %195 = vector.extract_strided_slice %192 {offsets = [0, 0, 0, 0], sizes = [2, 1, 16, 96], strides = [1, 1, 1, 1]} : vector<2x4x16x96xf32> to vector<2x1x16x96xf32>
    %196 = vector.shape_cast %195 : vector<2x1x16x96xf32> to vector<2x16x96xf32>
    %197 = vector.shape_cast %196 : vector<2x16x96xf32> to vector<32x96xf32>
    %cst_50 = arith.constant dense<0.000000e+00> : vector<32x96xf32>
    %198 = tpu.matmul %193, %168, %cst_50 {dimension_numbers = #tpu.dot_dimension_numbers<[1], [0], [0], [1], [0, 0, 1, 1], [], []>} : vector<32x32xf32>, vector<32x96xf32>, vector<32x96xf32> -> vector<32x96xf32>
    %199 = vector.broadcast %172 : vector<1x96xf32> to vector<32x96xf32>
    %200 = arith.addf %198, %199 : vector<32x96xf32>
    %201 = vector.extract_strided_slice %197 {offsets = [0, 0], sizes = [32, 32], strides = [1, 1]} : vector<32x96xf32> to vector<32x32xf32>
    %202 = vector.extract_strided_slice %200 {offsets = [0, 0], sizes = [32, 32], strides = [1, 1]} : vector<32x96xf32> to vector<32x32xf32>
    %203 = arith.addf %201, %202 : vector<32x32xf32>
    %204 = arith.negf %203 : vector<32x32xf32>
    %205 = math.exp %204 : vector<32x32xf32>
    %cst_51 = arith.constant 1.000000e+00 : f32
    %206 = vector.broadcast %cst_51 : f32 to vector<32x32xf32>
    %207 = arith.addf %206, %205 : vector<32x32xf32>
    %208 = arith.divf %206, %207 : vector<32x32xf32>
    %209 = vector.extract_strided_slice %197 {offsets = [0, 32], sizes = [32, 32], strides = [1, 1]} : vector<32x96xf32> to vector<32x32xf32>
    %210 = vector.extract_strided_slice %200 {offsets = [0, 32], sizes = [32, 32], strides = [1, 1]} : vector<32x96xf32> to vector<32x32xf32>
    %211 = arith.addf %209, %210 : vector<32x32xf32>
    %212 = arith.negf %211 : vector<32x32xf32>
    %213 = math.exp %212 : vector<32x32xf32>
    %cst_52 = arith.constant 1.000000e+00 : f32
    %214 = vector.broadcast %cst_52 : f32 to vector<32x32xf32>
    %215 = arith.addf %214, %213 : vector<32x32xf32>
    %216 = arith.divf %214, %215 : vector<32x32xf32>
    %217 = vector.extract_strided_slice %197 {offsets = [0, 64], sizes = [32, 32], strides = [1, 1]} : vector<32x96xf32> to vector<32x32xf32>
    %218 = vector.extract_strided_slice %200 {offsets = [0, 64], sizes = [32, 32], strides = [1, 1]} : vector<32x96xf32> to vector<32x32xf32>
    %219 = arith.mulf %208, %218 : vector<32x32xf32>
    %220 = arith.addf %217, %219 : vector<32x32xf32>
    %221 = math.tanh %220 : vector<32x32xf32>
    %cst_53 = arith.constant 1.000000e+00 : f32
    %222 = vector.broadcast %cst_53 : f32 to vector<32x32xf32>
    %223 = arith.subf %222, %216 : vector<32x32xf32>
    %224 = arith.mulf %223, %221 : vector<32x32xf32>
    %225 = arith.mulf %216, %193 : vector<32x32xf32>
    %226 = arith.addf %224, %225 : vector<32x32xf32>
    %227 = arith.addf %194, %226 : vector<32x32xf32>
    %228 = vector.extract_strided_slice %192 {offsets = [0, 1, 0, 0], sizes = [2, 1, 16, 96], strides = [1, 1, 1, 1]} : vector<2x4x16x96xf32> to vector<2x1x16x96xf32>
    %229 = vector.shape_cast %228 : vector<2x1x16x96xf32> to vector<2x16x96xf32>
    %230 = vector.shape_cast %229 : vector<2x16x96xf32> to vector<32x96xf32>
    %cst_54 = arith.constant dense<0.000000e+00> : vector<32x96xf32>
    %231 = tpu.matmul %226, %168, %cst_54 {dimension_numbers = #tpu.dot_dimension_numbers<[1], [0], [0], [1], [0, 0, 1, 1], [], []>} : vector<32x32xf32>, vector<32x96xf32>, vector<32x96xf32> -> vector<32x96xf32>
    %232 = vector.broadcast %172 : vector<1x96xf32> to vector<32x96xf32>
    %233 = arith.addf %231, %232 : vector<32x96xf32>
    %234 = vector.extract_strided_slice %230 {offsets = [0, 0], sizes = [32, 32], strides = [1, 1]} : vector<32x96xf32> to vector<32x32xf32>
    %235 = vector.extract_strided_slice %233 {offsets = [0, 0], sizes = [32, 32], strides = [1, 1]} : vector<32x96xf32> to vector<32x32xf32>
    %236 = arith.addf %234, %235 : vector<32x32xf32>
    %237 = arith.negf %236 : vector<32x32xf32>
    %238 = math.exp %237 : vector<32x32xf32>
    %cst_55 = arith.constant 1.000000e+00 : f32
    %239 = vector.broadcast %cst_55 : f32 to vector<32x32xf32>
    %240 = arith.addf %239, %238 : vector<32x32xf32>
    %241 = arith.divf %239, %240 : vector<32x32xf32>
    %242 = vector.extract_strided_slice %230 {offsets = [0, 32], sizes = [32, 32], strides = [1, 1]} : vector<32x96xf32> to vector<32x32xf32>
    %243 = vector.extract_strided_slice %233 {offsets = [0, 32], sizes = [32, 32], strides = [1, 1]} : vector<32x96xf32> to vector<32x32xf32>
    %244 = arith.addf %242, %243 : vector<32x32xf32>
    %245 = arith.negf %244 : vector<32x32xf32>
    %246 = math.exp %245 : vector<32x32xf32>
    %cst_56 = arith.constant 1.000000e+00 : f32
    %247 = vector.broadcast %cst_56 : f32 to vector<32x32xf32>
    %248 = arith.addf %247, %246 : vector<32x32xf32>
    %249 = arith.divf %247, %248 : vector<32x32xf32>
    %250 = vector.extract_strided_slice %230 {offsets = [0, 64], sizes = [32, 32], strides = [1, 1]} : vector<32x96xf32> to vector<32x32xf32>
    %251 = vector.extract_strided_slice %233 {offsets = [0, 64], sizes = [32, 32], strides = [1, 1]} : vector<32x96xf32> to vector<32x32xf32>
    %252 = arith.mulf %241, %251 : vector<32x32xf32>
    %253 = arith.addf %250, %252 : vector<32x32xf32>
    %254 = math.tanh %253 : vector<32x32xf32>
    %cst_57 = arith.constant 1.000000e+00 : f32
    %255 = vector.broadcast %cst_57 : f32 to vector<32x32xf32>
    %256 = arith.subf %255, %249 : vector<32x32xf32>
    %257 = arith.mulf %256, %254 : vector<32x32xf32>
    %258 = arith.mulf %249, %226 : vector<32x32xf32>
    %259 = arith.addf %257, %258 : vector<32x32xf32>
    %260 = arith.addf %227, %259 : vector<32x32xf32>
    %261 = vector.extract_strided_slice %192 {offsets = [0, 2, 0, 0], sizes = [2, 1, 16, 96], strides = [1, 1, 1, 1]} : vector<2x4x16x96xf32> to vector<2x1x16x96xf32>
    %262 = vector.shape_cast %261 : vector<2x1x16x96xf32> to vector<2x16x96xf32>
    %263 = vector.shape_cast %262 : vector<2x16x96xf32> to vector<32x96xf32>
    %cst_58 = arith.constant dense<0.000000e+00> : vector<32x96xf32>
    %264 = tpu.matmul %259, %168, %cst_58 {dimension_numbers = #tpu.dot_dimension_numbers<[1], [0], [0], [1], [0, 0, 1, 1], [], []>} : vector<32x32xf32>, vector<32x96xf32>, vector<32x96xf32> -> vector<32x96xf32>
    %265 = vector.broadcast %172 : vector<1x96xf32> to vector<32x96xf32>
    %266 = arith.addf %264, %265 : vector<32x96xf32>
    %267 = vector.extract_strided_slice %263 {offsets = [0, 0], sizes = [32, 32], strides = [1, 1]} : vector<32x96xf32> to vector<32x32xf32>
    %268 = vector.extract_strided_slice %266 {offsets = [0, 0], sizes = [32, 32], strides = [1, 1]} : vector<32x96xf32> to vector<32x32xf32>
    %269 = arith.addf %267, %268 : vector<32x32xf32>
    %270 = arith.negf %269 : vector<32x32xf32>
    %271 = math.exp %270 : vector<32x32xf32>
    %cst_59 = arith.constant 1.000000e+00 : f32
    %272 = vector.broadcast %cst_59 : f32 to vector<32x32xf32>
    %273 = arith.addf %272, %271 : vector<32x32xf32>
    %274 = arith.divf %272, %273 : vector<32x32xf32>
    %275 = vector.extract_strided_slice %263 {offsets = [0, 32], sizes = [32, 32], strides = [1, 1]} : vector<32x96xf32> to vector<32x32xf32>
    %276 = vector.extract_strided_slice %266 {offsets = [0, 32], sizes = [32, 32], strides = [1, 1]} : vector<32x96xf32> to vector<32x32xf32>
    %277 = arith.addf %275, %276 : vector<32x32xf32>
    %278 = arith.negf %277 : vector<32x32xf32>
    %279 = math.exp %278 : vector<32x32xf32>
    %cst_60 = arith.constant 1.000000e+00 : f32
    %280 = vector.broadcast %cst_60 : f32 to vector<32x32xf32>
    %281 = arith.addf %280, %279 : vector<32x32xf32>
    %282 = arith.divf %280, %281 : vector<32x32xf32>
    %283 = vector.extract_strided_slice %263 {offsets = [0, 64], sizes = [32, 32], strides = [1, 1]} : vector<32x96xf32> to vector<32x32xf32>
    %284 = vector.extract_strided_slice %266 {offsets = [0, 64], sizes = [32, 32], strides = [1, 1]} : vector<32x96xf32> to vector<32x32xf32>
    %285 = arith.mulf %274, %284 : vector<32x32xf32>
    %286 = arith.addf %283, %285 : vector<32x32xf32>
    %287 = math.tanh %286 : vector<32x32xf32>
    %cst_61 = arith.constant 1.000000e+00 : f32
    %288 = vector.broadcast %cst_61 : f32 to vector<32x32xf32>
    %289 = arith.subf %288, %282 : vector<32x32xf32>
    %290 = arith.mulf %289, %287 : vector<32x32xf32>
    %291 = arith.mulf %282, %259 : vector<32x32xf32>
    %292 = arith.addf %290, %291 : vector<32x32xf32>
    %293 = arith.addf %260, %292 : vector<32x32xf32>
    %294 = vector.extract_strided_slice %192 {offsets = [0, 3, 0, 0], sizes = [2, 1, 16, 96], strides = [1, 1, 1, 1]} : vector<2x4x16x96xf32> to vector<2x1x16x96xf32>
    %295 = vector.shape_cast %294 : vector<2x1x16x96xf32> to vector<2x16x96xf32>
    %296 = vector.shape_cast %295 : vector<2x16x96xf32> to vector<32x96xf32>
    %cst_62 = arith.constant dense<0.000000e+00> : vector<32x96xf32>
    %297 = tpu.matmul %292, %168, %cst_62 {dimension_numbers = #tpu.dot_dimension_numbers<[1], [0], [0], [1], [0, 0, 1, 1], [], []>} : vector<32x32xf32>, vector<32x96xf32>, vector<32x96xf32> -> vector<32x96xf32>
    %298 = vector.broadcast %172 : vector<1x96xf32> to vector<32x96xf32>
    %299 = arith.addf %297, %298 : vector<32x96xf32>
    %300 = vector.extract_strided_slice %296 {offsets = [0, 0], sizes = [32, 32], strides = [1, 1]} : vector<32x96xf32> to vector<32x32xf32>
    %301 = vector.extract_strided_slice %299 {offsets = [0, 0], sizes = [32, 32], strides = [1, 1]} : vector<32x96xf32> to vector<32x32xf32>
    %302 = arith.addf %300, %301 : vector<32x32xf32>
    %303 = arith.negf %302 : vector<32x32xf32>
    %304 = math.exp %303 : vector<32x32xf32>
    %cst_63 = arith.constant 1.000000e+00 : f32
    %305 = vector.broadcast %cst_63 : f32 to vector<32x32xf32>
    %306 = arith.addf %305, %304 : vector<32x32xf32>
    %307 = arith.divf %305, %306 : vector<32x32xf32>
    %308 = vector.extract_strided_slice %296 {offsets = [0, 32], sizes = [32, 32], strides = [1, 1]} : vector<32x96xf32> to vector<32x32xf32>
    %309 = vector.extract_strided_slice %299 {offsets = [0, 32], sizes = [32, 32], strides = [1, 1]} : vector<32x96xf32> to vector<32x32xf32>
    %310 = arith.addf %308, %309 : vector<32x32xf32>
    %311 = arith.negf %310 : vector<32x32xf32>
    %312 = math.exp %311 : vector<32x32xf32>
    %cst_64 = arith.constant 1.000000e+00 : f32
    %313 = vector.broadcast %cst_64 : f32 to vector<32x32xf32>
    %314 = arith.addf %313, %312 : vector<32x32xf32>
    %315 = arith.divf %313, %314 : vector<32x32xf32>
    %316 = vector.extract_strided_slice %296 {offsets = [0, 64], sizes = [32, 32], strides = [1, 1]} : vector<32x96xf32> to vector<32x32xf32>
    %317 = vector.extract_strided_slice %299 {offsets = [0, 64], sizes = [32, 32], strides = [1, 1]} : vector<32x96xf32> to vector<32x32xf32>
    %318 = arith.mulf %307, %317 : vector<32x32xf32>
    %319 = arith.addf %316, %318 : vector<32x32xf32>
    %320 = math.tanh %319 : vector<32x32xf32>
    %cst_65 = arith.constant 1.000000e+00 : f32
    %321 = vector.broadcast %cst_65 : f32 to vector<32x32xf32>
    %322 = arith.subf %321, %315 : vector<32x32xf32>
    %323 = arith.mulf %322, %320 : vector<32x32xf32>
    %324 = arith.mulf %315, %292 : vector<32x32xf32>
    %325 = arith.addf %323, %324 : vector<32x32xf32>
    %326 = arith.addf %293, %325 : vector<32x32xf32>
    %cst_66 = arith.constant 0.000000e+00 : f32
    %327 = vector.broadcast %cst_66 : f32 to vector<32x32xf32>
    %328 = arith.maximumf %326, %327 : vector<32x32xf32>
    %329 = vector.shape_cast %328 : vector<32x32xf32> to vector<2x16x32xf32>
    %c0_67 = arith.constant 0 : index
    %c0_68 = arith.constant 0 : index
    %c0_69 = arith.constant 0 : index
    %330 = vector.load %arg11[%c0_67, %c0_68, %c0_69] : memref<2x16x32xf32, #tpu.memory_space<vmem>>, vector<2x16x32xf32>
    tpu.vector_store %arg11[%c0_67, %c0_68, %c0_69], %329 {strides = array<i32>} : memref<2x16x32xf32, #tpu.memory_space<vmem>>, vector<2x16x32xf32>,
    return
  }
  func.func @transform_0(%arg0: i32) -> (i32, i32, i32) {
    %c0_i32 = arith.constant 0 : i32
    %c0_i32_0 = arith.constant 0 : i32
    %c0_i32_1 = arith.constant 0 : i32
    %c0_i32_2 = arith.constant 0 : i32
    return %c0_i32, %c0_i32_0, %c0_i32_1 : i32, i32, i32
  }
  func.func @transform_1(%arg0: i32) -> (i32, i32, i32, i32) {
    %c0_i32 = arith.constant 0 : i32
    %c0_i32_0 = arith.constant 0 : i32
    %c0_i32_1 = arith.constant 0 : i32
    %c0_i32_2 = arith.constant 0 : i32
    %c0_i32_3 = arith.constant 0 : i32
    return %c0_i32, %c0_i32_0, %c0_i32_1, %c0_i32_2 : i32, i32, i32, i32
  }
  func.func @transform_2(%arg0: i32) -> (i32, i32) {
    %c0_i32 = arith.constant 0 : i32
    %c0_i32_0 = arith.constant 0 : i32
    %c0_i32_1 = arith.constant 0 : i32
    return %c0_i32, %c0_i32_0 : i32, i32
  }
  func.func @transform_3(%arg0: i32) -> (i32, i32) {
    %c0_i32 = arith.constant 0 : i32
    %c0_i32_0 = arith.constant 0 : i32
    %c0_i32_1 = arith.constant 0 : i32
    return %c0_i32, %c0_i32_0 : i32, i32
  }
  func.func @transform_4(%arg0: i32) -> (i32, i32) {
    %c0_i32 = arith.constant 0 : i32
    %c0_i32_0 = arith.constant 0 : i32
    %c0_i32_1 = arith.constant 0 : i32
    return %c0_i32, %c0_i32_0 : i32, i32
  }
  func.func @transform_5(%arg0: i32) -> (i32, i32) {
    %c0_i32 = arith.constant 0 : i32
    %c0_i32_0 = arith.constant 0 : i32
    %c0_i32_1 = arith.constant 0 : i32
    return %c0_i32, %c0_i32_0 : i32, i32
  }
  func.func @transform_6(%arg0: i32) -> (i32, i32) {
    %c0_i32 = arith.constant 0 : i32
    %c0_i32_0 = arith.constant 0 : i32
    %c0_i32_1 = arith.constant 0 : i32
    return %c0_i32, %c0_i32_0 : i32, i32
  }
  func.func @transform_7(%arg0: i32) -> (i32, i32) {
    %c0_i32 = arith.constant 0 : i32
    %c0_i32_0 = arith.constant 0 : i32
    %c0_i32_1 = arith.constant 0 : i32
    return %c0_i32, %c0_i32_0 : i32, i32
  }
  func.func @transform_8(%arg0: i32) -> (i32, i32) {
    %c0_i32 = arith.constant 0 : i32
    %c0_i32_0 = arith.constant 0 : i32
    %c0_i32_1 = arith.constant 0 : i32
    return %c0_i32, %c0_i32_0 : i32, i32
  }
  func.func @transform_9(%arg0: i32) -> (i32, i32) {
    %c0_i32 = arith.constant 0 : i32
    %c0_i32_0 = arith.constant 0 : i32
    %c0_i32_1 = arith.constant 0 : i32
    return %c0_i32, %c0_i32_0 : i32, i32
  }
  func.func @transform_10(%arg0: i32) -> (i32, i32, i32) {
    %c0_i32 = arith.constant 0 : i32
    %c0_i32_0 = arith.constant 0 : i32
    %c0_i32_1 = arith.constant 0 : i32
    %c0_i32_2 = arith.constant 0 : i32
    return %c0_i32, %c0_i32_0, %c0_i32_1 : i32, i32, i32
  }
}

</mosaic_0001>

<llo_original>
// kernel: tpu_custom_call.1
$region0: #{tpu_custom_call.1}
  #allocation0 [shape = 'u32[]', space=smem, size = 0x4, offset = 0x4, fixed_abs, tag = 'smem constant byte address 0x4 - core index']
  #allocation1 [shape = 'u32[144,128]{1,0:T(1,128)}', space=vmem, size = 0x12000, scoped, tag = 'internal scratch']
  %s0 = inlined_call_operand.hbm [shape: f32[2,16,16], index: 0, kind: input, shape index: {}]
  %s1 = inlined_call_operand.hbm [shape: f32[2,4,16,16], index: 1, kind: input, shape index: {}]
  %s2 = inlined_call_operand.hbm [shape: f32[16,32], index: 2, kind: input, shape index: {}]
  %s3 = inlined_call_operand.hbm [shape: f32[32,96], index: 3, kind: input, shape index: {}]
  %s4 = inlined_call_operand.hbm [shape: f32[32,96], index: 4, kind: input, shape index: {}]
  %s5 = inlined_call_operand.vmem [shape: f32[3,96], index: 5, kind: input, shape index: {}]
  %s6 = inlined_call_operand.hbm [shape: f32[32,32], index: 6, kind: input, shape index: {}]
  %s7 = inlined_call_operand.hbm [shape: f32[32,96], index: 7, kind: input, shape index: {}]
  %s8 = inlined_call_operand.hbm [shape: f32[32,96], index: 8, kind: input, shape index: {}]
  %s9 = inlined_call_operand.vmem [shape: f32[3,96], index: 9, kind: input, shape index: {}]
  %s10 = inlined_call_operand.hbm [shape: f32[2,16,32], index: 10, kind: output, shape index: {}]
  %s11 = sld [smem:[#allocation0]]
  $region82: #{tpu_custom_call.1} parent=0
    _
  %s13 = ssub.s32 1, %s11
  %s14 = scalar_select 0, %s13, %s11
  $region1: #{tpu_custom_call.1} parent=0
    #allocation2 [shape = 'u8[16384]{0}', space=vmem, size = 0x4000, scoped, tag = 'input window, operand 0, single buffered']
    #allocation3 [shape = 's32[1]{0}', space=sflag, size = 0x4, scoped, tag = 'scoped memory for tpu_custom_call.1']
    #allocation4 [shape = 's32[1]{0}', space=sflag, size = 0x4, scoped, tag = 'scoped memory for tpu_custom_call.1']
    #allocation5 [shape = 'u8[65536]{0}', space=vmem, size = 0x10000, scoped, tag = 'input window, operand 1, single buffered']
    #allocation6 [shape = 's32[1]{0}', space=sflag, size = 0x4, scoped, tag = 'scoped memory for tpu_custom_call.1']
    #allocation7 [shape = 'u8[8192]{0}', space=vmem, size = 0x2000, scoped, tag = 'input window, operand 2, single buffered']
    #allocation8 [shape = 'u8[16384]{0}', space=vmem, size = 0x4000, scoped, tag = 'input window, operand 3, single buffered']
    #allocation9 [shape = 's32[1]{0}', space=sflag, size = 0x4, scoped, tag = 'scoped memory for tpu_custom_call.1']
    #allocation10 [shape = 'u8[16384]{0}', space=vmem, size = 0x4000, scoped, tag = 'input window, operand 4, single buffered']
    #allocation11 [shape = 'u8[16384]{0}', space=vmem, size = 0x4000, scoped, tag = 'input window, operand 6, single buffered']
    #allocation12 [shape = 's32[1]{0}', space=sflag, size = 0x4, scoped, tag = 'scoped memory for tpu_custom_call.1']
    #allocation13 [shape = 'u8[16384]{0}', space=vmem, size = 0x4000, scoped, tag = 'input window, operand 7, single buffered']
    #allocation14 [shape = 'u8[16384]{0}', space=vmem, size = 0x4000, scoped, tag = 'input window, operand 8, single buffered']
    #allocation15 [shape = 's32[1]{0}', space=sflag, size = 0x4, scoped, tag = 'scoped memory for tpu_custom_call.1']
    #allocation16 [shape = 'u8[16384]{0}', space=vmem, size = 0x4000, scoped, tag = 'output window, operand 0, single buffered']
    %15 = vsyncpa [#allocation3], 0
    %16 = vsyncpa [#allocation6], 0
    %17 = vsyncpa [#allocation9], 0
    %18 = vsyncpa [#allocation12], 0
    %19 = vsyncpa [#allocation15], 0
    %20 = vsyncpa [#allocation4], 0
    // Predicated region
    $region2: #{tpu_custom_call.1} parent=1 // pred_check
      _
    $region3: #{tpu_custom_call.1} parent=1 // pred_check_branch
      %22 = sbr.rel (0) target = $region5
    $region4: #{tpu_custom_call.1} parent=1 // pred_region
      %s24 = ssub.s32 512, 512
      %25 = vsyncadd [#allocation3], %s24
      %s26 = sshll.u32 [#allocation2], 4
      %s27 = int_to_ptr.vmem [resolvable:$true] %s26
      %32 = dma.hbm_to_vmem [thread:$0]  %s0, 512, %s27, [#allocation3], 128, 128, 8
    $region5: #{tpu_custom_call.1} parent=1 // pred_fallthru
      _
    // Predicated region
    $region6: #{tpu_custom_call.1} parent=1 // pred_check
      _
    $region7: #{tpu_custom_call.1} parent=1 // pred_check_branch
      %34 = sbr.rel (0) target = $region9
    $region8: #{tpu_custom_call.1} parent=1 // pred_region
      %s36 = ssub.s32 2048, 2048
      %37 = vsyncadd [#allocation6], %s36
      %s38 = sshll.u32 [#allocation5], 4
      %s39 = int_to_ptr.vmem [resolvable:$true] %s38
      %44 = dma.hbm_to_vmem [thread:$0]  %s1, 2048, %s39, [#allocation6], 128, 128, 8
    $region9: #{tpu_custom_call.1} parent=1 // pred_fallthru
      _
    // Predicated region
    $region10: #{tpu_custom_call.1} parent=1 // pred_check
      _
    $region11: #{tpu_custom_call.1} parent=1 // pred_check_branch
      %46 = sbr.rel (0) target = $region13
    $region12: #{tpu_custom_call.1} parent=1 // pred_region
      %s48 = ssub.s32 256, 256
      %49 = vsyncadd [#allocation6], %s48
      %s50 = sshll.u32 [#allocation7], 4
      %s51 = int_to_ptr.vmem [resolvable:$true] %s50
      %56 = dma.hbm_to_vmem [thread:$0]  %s2, 256, %s51, [#allocation6], 128, 128, 8
    $region13: #{tpu_custom_call.1} parent=1 // pred_fallthru
      _
    // Predicated region
    $region14: #{tpu_custom_call.1} parent=1 // pred_check
      _
    $region15: #{tpu_custom_call.1} parent=1 // pred_check_branch
      %58 = sbr.rel (0) target = $region17
    $region16: #{tpu_custom_call.1} parent=1 // pred_region
      %s60 = ssub.s32 512, 512
      %61 = vsyncadd [#allocation9], %s60
      %s62 = sshll.u32 [#allocation8], 4
      %s63 = int_to_ptr.vmem [resolvable:$true] %s62
      %68 = dma.hbm_to_vmem [thread:$0]  %s3, 512, %s63, [#allocation9], 128, 128, 8
    $region17: #{tpu_custom_call.1} parent=1 // pred_fallthru
      _
    // Predicated region
    $region18: #{tpu_custom_call.1} parent=1 // pred_check
      _
    $region19: #{tpu_custom_call.1} parent=1 // pred_check_branch
      %70 = sbr.rel (0) target = $region21
    $region20: #{tpu_custom_call.1} parent=1 // pred_region
      %s72 = ssub.s32 512, 512
      %73 = vsyncadd [#allocation9], %s72
      %s74 = sshll.u32 [#allocation10], 4
      %s75 = int_to_ptr.vmem [resolvable:$true] %s74
      %80 = dma.hbm_to_vmem [thread:$0]  %s4, 512, %s75, [#allocation9], 128, 128, 8
    $region21: #{tpu_custom_call.1} parent=1 // pred_fallthru
      _
    // Predicated region
    $region22: #{tpu_custom_call.1} parent=1 // pred_check
      _
    $region23: #{tpu_custom_call.1} parent=1 // pred_check_branch
      %82 = sbr.rel (0) target = $region25
    $region24: #{tpu_custom_call.1} parent=1 // pred_region
      _
    $region25: #{tpu_custom_call.1} parent=1 // pred_fallthru
      _
    // Predicated region
    $region26: #{tpu_custom_call.1} parent=1 // pred_check
      _
    $region27: #{tpu_custom_call.1} parent=1 // pred_check_branch
      %84 = sbr.rel (0) target = $region29
    $region28: #{tpu_custom_call.1} parent=1 // pred_region
      %s86 = ssub.s32 512, 512
      %87 = vsyncadd [#allocation12], %s86
      %s88 = sshll.u32 [#allocation11], 4
      %s89 = int_to_ptr.vmem [resolvable:$true] %s88
      %94 = dma.hbm_to_vmem [thread:$0]  %s6, 512, %s89, [#allocation12], 128, 128, 8
    $region29: #{tpu_custom_call.1} parent=1 // pred_fallthru
      _
    // Predicated region
    $region30: #{tpu_custom_call.1} parent=1 // pred_check
      _
    $region31: #{tpu_custom_call.1} parent=1 // pred_check_branch
      %96 = sbr.rel (0) target = $region33
    $region32: #{tpu_custom_call.1} parent=1 // pred_region
      %s98 = ssub.s32 512, 512
      %99 = vsyncadd [#allocation12], %s98
      %s100 = sshll.u32 [#allocation13], 4
      %s101 = int_to_ptr.vmem [resolvable:$true] %s100
      %106 = dma.hbm_to_vmem [thread:$0]  %s7, 512, %s101, [#allocation12], 128, 128, 8
    $region33: #{tpu_custom_call.1} parent=1 // pred_fallthru
      _
    // Predicated region
    $region34: #{tpu_custom_call.1} parent=1 // pred_check
      _
    $region35: #{tpu_custom_call.1} parent=1 // pred_check_branch
      %108 = sbr.rel (0) target = $region37
    $region36: #{tpu_custom_call.1} parent=1 // pred_region
      %s110 = ssub.s32 512, 512
      %111 = vsyncadd [#allocation15], %s110
      %s112 = sshll.u32 [#allocation14], 4
      %s113 = int_to_ptr.vmem [resolvable:$true] %s112
      %118 = dma.hbm_to_vmem [thread:$0]  %s8, 512, %s113, [#allocation15], 128, 128, 8
    $region37: #{tpu_custom_call.1} parent=1 // pred_fallthru
      _
    // Predicated region
    $region38: #{tpu_custom_call.1} parent=1 // pred_check
      _
    $region39: #{tpu_custom_call.1} parent=1 // pred_check_branch
      %120 = sbr.rel (0) target = $region41
    $region40: #{tpu_custom_call.1} parent=1 // pred_region
      _
    $region41: #{tpu_custom_call.1} parent=1 // pred_fallthru
      _
    // Predicated region
    $region42: #{tpu_custom_call.1} parent=1 // pred_check
      _
    $region43: #{tpu_custom_call.1} parent=1 // pred_check_branch
      %122 = sbr.rel (0) target = $region45
    $region44: #{tpu_custom_call.1} parent=1 // pred_region
      %123 = dma.done [#allocation3], 512
    $region45: #{tpu_custom_call.1} parent=1 // pred_fallthru
      _
    // Predicated region
    $region46: #{tpu_custom_call.1} parent=1 // pred_check
      _
    $region47: #{tpu_custom_call.1} parent=1 // pred_check_branch
      %125 = sbr.rel (0) target = $region49
    $region48: #{tpu_custom_call.1} parent=1 // pred_region
      %126 = dma.done [#allocation6], 2048
    $region49: #{tpu_custom_call.1} parent=1 // pred_fallthru
      _
    // Predicated region
    $region50: #{tpu_custom_call.1} parent=1 // pred_check
      _
    $region51: #{tpu_custom_call.1} parent=1 // pred_check_branch
      %128 = sbr.rel (0) target = $region53
    $region52: #{tpu_custom_call.1} parent=1 // pred_region
      %129 = dma.done [#allocation6], 256
    $region53: #{tpu_custom_call.1} parent=1 // pred_fallthru
      _
    // Predicated region
    $region54: #{tpu_custom_call.1} parent=1 // pred_check
      _
    $region55: #{tpu_custom_call.1} parent=1 // pred_check_branch
      %131 = sbr.rel (0) target = $region57
    $region56: #{tpu_custom_call.1} parent=1 // pred_region
      %132 = dma.done [#allocation9], 512
    $region57: #{tpu_custom_call.1} parent=1 // pred_fallthru
      _
    // Predicated region
    $region58: #{tpu_custom_call.1} parent=1 // pred_check
      _
    $region59: #{tpu_custom_call.1} parent=1 // pred_check_branch
      %134 = sbr.rel (0) target = $region61
    $region60: #{tpu_custom_call.1} parent=1 // pred_region
      %135 = dma.done [#allocation9], 512
    $region61: #{tpu_custom_call.1} parent=1 // pred_fallthru
      _
    // Predicated region
    $region62: #{tpu_custom_call.1} parent=1 // pred_check
      _
    $region63: #{tpu_custom_call.1} parent=1 // pred_check_branch
      %137 = sbr.rel (0) target = $region65
    $region64: #{tpu_custom_call.1} parent=1 // pred_region
      %138 = dma.done [#allocation12], 512
    $region65: #{tpu_custom_call.1} parent=1 // pred_fallthru
      _
    // Predicated region
    $region66: #{tpu_custom_call.1} parent=1 // pred_check
      _
    $region67: #{tpu_custom_call.1} parent=1 // pred_check_branch
      %140 = sbr.rel (0) target = $region69
    $region68: #{tpu_custom_call.1} parent=1 // pred_region
      %141 = dma.done [#allocation12], 512
    $region69: #{tpu_custom_call.1} parent=1 // pred_fallthru
      _
    // Predicated region
    $region70: #{tpu_custom_call.1} parent=1 // pred_check
      _
    $region71: #{tpu_custom_call.1} parent=1 // pred_check_branch
      %143 = sbr.rel (0) target = $region73
    $region72: #{tpu_custom_call.1} parent=1 // pred_region
      %144 = dma.done [#allocation15], 512
    $region73: #{tpu_custom_call.1} parent=1 // pred_fallthru
      _
    %v145 = vld [vmem:[#allocation2] sm:$0xff]
    %v146 = vld [vmem:[#allocation2 + $0x8] sm:$0xff]
    %v147 = vld [vmem:[#allocation2 + $0x10] sm:$0xff]
    %v148 = vld [vmem:[#allocation2 + $0x18] sm:$0xff]
    %v149 = vld [vmem:[#allocation5] sm:$0xff]
    %v150 = vld [vmem:[#allocation5 + $0x8] sm:$0xff]
    %v151 = vld [vmem:[#allocation5 + $0x10] sm:$0xff]
    %v152 = vld [vmem:[#allocation5 + $0x18] sm:$0xff]
    %v153 = vld [vmem:[#allocation5 + $0x20] sm:$0xff]
    %v154 = vld [vmem:[#allocation5 + $0x28] sm:$0xff]
    %v155 = vld [vmem:[#allocation5 + $0x30] sm:$0xff]
    %v156 = vld [vmem:[#allocation5 + $0x38] sm:$0xff]
    %v157 = vld [vmem:[#allocation5 + $0x40] sm:$0xff]
    %v158 = vld [vmem:[#allocation5 + $0x48] sm:$0xff]
    %v159 = vld [vmem:[#allocation5 + $0x50] sm:$0xff]
    %v160 = vld [vmem:[#allocation5 + $0x58] sm:$0xff]
    %v161 = vld [vmem:[#allocation5 + $0x60] sm:$0xff]
    %v162 = vld [vmem:[#allocation5 + $0x68] sm:$0xff]
    %v163 = vld [vmem:[#allocation5 + $0x70] sm:$0xff]
    %v164 = vld [vmem:[#allocation5 + $0x78] sm:$0xff]
    %v165 = vld [vmem:[#allocation7] sm:$0xff]
    %v166 = vld [vmem:[#allocation7 + $0x8] sm:$0xff]
    %v167 = vld [vmem:[#allocation8] sm:$0xff]
    %v168 = vld [vmem:[#allocation8 + $0x8] sm:$0xff]
    %v169 = vld [vmem:[#allocation8 + $0x10] sm:$0xff]
    %v170 = vld [vmem:[#allocation8 + $0x18] sm:$0xff]
    %v171 = vld [vmem:[#allocation10] sm:$0xff]
    %v172 = vld [vmem:[#allocation10 + $0x8] sm:$0xff]
    %v173 = vld [vmem:[#allocation10 + $0x10] sm:$0xff]
    %v174 = vld [vmem:[#allocation10 + $0x18] sm:$0xff]
    %v175 = vld [vmem:[%s5] sm:$0x7]
    %vm176 = vcmask 130048
    %v178 = vsel %vm176, %v149, 0
    %v181 = vsel %vm176, %v150, 0
    %v184 = vsel %vm176, %v151, 0
    %v187 = vsel %vm176, %v152, 0
    %v190 = vsel %vm176, %v153, 0
    %v193 = vsel %vm176, %v154, 0
    %v196 = vsel %vm176, %v155, 0
    %v199 = vsel %vm176, %v156, 0
    %201 = vmatprep.subr.mxu0 0.0
    %202 = vmatpush1.msra.mxu0 0.0
    %203 = vmatprep.subr.mxu0 0.0
    %204 = vmatpush1.msra.mxu0 0.0
    %205 = vmatprep.subr.mxu0 0.0
    %206 = vmatpush1.msra.mxu0 0.0
    %207 = vmatprep.subr.mxu0 0.0
    %208 = vmatpush1.msra.mxu0 0.0
    %209 = vmatprep.subr.mxu0 0.0
    %210 = vmatpush1.msra.mxu0 0.0
    %211 = vmatprep.subr.mxu0 0.0
    %212 = vmatpush1.msra.mxu0 0.0
    %213 = vmatprep.subr.mxu0 0.0
    %214 = vmatpush1.msra.mxu0 0.0
    %215 = vmatprep.subr.mxu0 0.0
    %216 = vmatpush1.msra.mxu0 0.0
    %217 = vmatprep.subr.mxu0 0.0
    %218 = vmatpush1.msra.mxu0 0.0
    %219 = vmatprep.subr.mxu0 0.0
    %220 = vmatpush1.msra.mxu0 0.0
    %221 = vmatprep.subr.mxu0 0.0
    %222 = vmatpush1.msra.mxu0 0.0
    %223 = vmatprep.subr.mxu0 0.0
    %224 = vmatpush1.msra.mxu0 0.0
    %225 = vmatprep.subr.mxu0 0.0
    %226 = vmatpush1.msra.mxu0 0.0
    %227 = vmatprep.subr.mxu0 0.0
    %228 = vmatpush1.msra.mxu0 0.0
    %229 = vmatprep.subr.mxu0 0.0
    %230 = vmatpush1.msra.mxu0 %v146
    %231 = vmatprep.subr.mxu0 0.0
    %232 = vmatpush1.msra.mxu0 %v145
    %233 = vmatprep.subr.mxu0 0.0
    %234 = vmatpush2.msra.mxu0 0.0
    %235 = vmatprep.subr.mxu0 0.0
    %236 = vmatpush2.msra.mxu0 0.0
    %237 = vmatprep.subr.mxu0 0.0
    %238 = vmatpush2.msra.mxu0 0.0
    %239 = vmatprep.subr.mxu0 0.0
    %240 = vmatpush2.msra.mxu0 0.0
    %241 = vmatprep.subr.mxu0 0.0
    %242 = vmatpush2.msra.mxu0 0.0
    %243 = vmatprep.subr.mxu0 0.0
    %244 = vmatpush2.msra.mxu0 0.0
    %245 = vmatprep.subr.mxu0 0.0
    %246 = vmatpush2.msra.mxu0 0.0
    %247 = vmatprep.subr.mxu0 0.0
    %248 = vmatpush2.msra.mxu0 0.0
    %249 = vmatprep.subr.mxu0 0.0
    %250 = vmatpush2.msra.mxu0 0.0
    %251 = vmatprep.subr.mxu0 0.0
    %252 = vmatpush2.msra.mxu0 0.0
    %253 = vmatprep.subr.mxu0 0.0
    %254 = vmatpush2.msra.mxu0 0.0
    %255 = vmatprep.subr.mxu0 0.0
    %256 = vmatpush2.msra.mxu0 0.0
    %257 = vmatprep.subr.mxu0 0.0
    %258 = vmatpush2.msra.mxu0 0.0
    %259 = vmatprep.subr.mxu0 0.0
    %260 = vmatpush2.msra.mxu0 0.0
    %261 = vmatprep.subr.mxu0 0.0
    %262 = vmatpush2.msra.mxu0 0.0
    %263 = vmatprep.subr.mxu0 0.0
    %264 = vmatpush2.msra.mxu0 0.0
    %265 = vmatprep.mubr.f32.mxu0 0.0
    %266 = vmatmul.mubr.f32.gmra.mxu0 %v178
    %v267 = vpop.f32.mrf.mxu0
    %v268 = vadd.f32 0.0, %v267
    %v269 = vpop.f32.mrf.mxu0
    %270 = vmatprep.mubr.f32.mxu0 0.0
    %271 = vmatmul.mubr.f32.gmra.mxu0 %v181
    %v272 = vpop.f32.mrf.mxu0
    %v273 = vadd.f32 0.0, %v272
    %v274 = vpop.f32.mrf.mxu0
    %275 = vmatprep.mubr.f32.mxu0 0.0
    %276 = vmatmul.mubr.f32.gmra.mxu0 %v184
    %v277 = vpop.f32.mrf.mxu0
    %v278 = vadd.f32 0.0, %v277
    %v279 = vpop.f32.mrf.mxu0
    %280 = vmatprep.mubr.f32.mxu0 0.0
    %281 = vmatmul.mubr.f32.gmra.mxu0 %v187
    %v282 = vpop.f32.mrf.mxu0
    %v283 = vadd.f32 0.0, %v282
    %v284 = vpop.f32.mrf.mxu0
    %285 = vmatprep.mubr.f32.mxu0 0.0
    %286 = vmatmul.mubr.f32.gmra.mxu0 %v190
    %v287 = vpop.f32.mrf.mxu0
    %v288 = vadd.f32 0.0, %v287
    %v289 = vpop.f32.mrf.mxu0
    %290 = vmatprep.mubr.f32.mxu0 0.0
    %291 = vmatmul.mubr.f32.gmra.mxu0 %v193
    %v292 = vpop.f32.mrf.mxu0
    %v293 = vadd.f32 0.0, %v292
    %v294 = vpop.f32.mrf.mxu0
    %295 = vmatprep.mubr.f32.mxu0 0.0
    %296 = vmatmul.mubr.f32.gmra.mxu0 %v196
    %v297 = vpop.f32.mrf.mxu0
    %v298 = vadd.f32 0.0, %v297
    %v299 = vpop.f32.mrf.mxu0
    %300 = vmatprep.mubr.f32.mxu0 0.0
    %301 = vmatmul.mubr.f32.gmra.mxu0 %v199
    %v302 = vpop.f32.mrf.mxu0
    %v303 = vadd.f32 0.0, %v302
    %v304 = vpop.f32.mrf.mxu0
    %305 = vdwg.mxu0
    %v307 = vsel %vm176, %v157, 0
    %v310 = vsel %vm176, %v158, 0
    %v313 = vsel %vm176, %v159, 0
    %v316 = vsel %vm176, %v160, 0
    %v319 = vsel %vm176, %v161, 0
    %v322 = vsel %vm176, %v162, 0
    %v325 = vsel %vm176, %v163, 0
    %v328 = vsel %vm176, %v164, 0
    %330 = vmatprep.subr.mxu0 0.0
    %331 = vmatpush1.msra.mxu0 0.0
    %332 = vmatprep.subr.mxu0 0.0
    %333 = vmatpush1.msra.mxu0 0.0
    %334 = vmatprep.subr.mxu0 0.0
    %335 = vmatpush1.msra.mxu0 0.0
    %336 = vmatprep.subr.mxu0 0.0
    %337 = vmatpush1.msra.mxu0 0.0
    %338 = vmatprep.subr.mxu0 0.0
    %339 = vmatpush1.msra.mxu0 0.0
    %340 = vmatprep.subr.mxu0 0.0
    %341 = vmatpush1.msra.mxu0 0.0
    %342 = vmatprep.subr.mxu0 0.0
    %343 = vmatpush1.msra.mxu0 0.0
    %344 = vmatprep.subr.mxu0 0.0
    %345 = vmatpush1.msra.mxu0 0.0
    %346 = vmatprep.subr.mxu0 0.0
    %347 = vmatpush1.msra.mxu0 0.0
    %348 = vmatprep.subr.mxu0 0.0
    %349 = vmatpush1.msra.mxu0 0.0
    %350 = vmatprep.subr.mxu0 0.0
    %351 = vmatpush1.msra.mxu0 0.0
    %352 = vmatprep.subr.mxu0 0.0
    %353 = vmatpush1.msra.mxu0 0.0
    %354 = vmatprep.subr.mxu0 0.0
    %355 = vmatpush1.msra.mxu0 0.0
    %356 = vmatprep.subr.mxu0 0.0
    %357 = vmatpush1.msra.mxu0 0.0
    %358 = vmatprep.subr.mxu0 0.0
    %359 = vmatpush1.msra.mxu0 %v148
    %360 = vmatprep.subr.mxu0 0.0
    %361 = vmatpush1.msra.mxu0 %v147
    %362 = vmatprep.subr.mxu0 0.0
    %363 = vmatpush2.msra.mxu0 0.0
    %364 = vmatprep.subr.mxu0 0.0
    %365 = vmatpush2.msra.mxu0 0.0
    %366 = vmatprep.subr.mxu0 0.0
    %367 = vmatpush2.msra.mxu0 0.0
    %368 = vmatprep.subr.mxu0 0.0
    %369 = vmatpush2.msra.mxu0 0.0
    %370 = vmatprep.subr.mxu0 0.0
    %371 = vmatpush2.msra.mxu0 0.0
    %372 = vmatprep.subr.mxu0 0.0
    %373 = vmatpush2.msra.mxu0 0.0
    %374 = vmatprep.subr.mxu0 0.0
    %375 = vmatpush2.msra.mxu0 0.0
    %376 = vmatprep.subr.mxu0 0.0
    %377 = vmatpush2.msra.mxu0 0.0
    %378 = vmatprep.subr.mxu0 0.0
    %379 = vmatpush2.msra.mxu0 0.0
    %380 = vmatprep.subr.mxu0 0.0
    %381 = vmatpush2.msra.mxu0 0.0
    %382 = vmatprep.subr.mxu0 0.0
    %383 = vmatpush2.msra.mxu0 0.0
    %384 = vmatprep.subr.mxu0 0.0
    %385 = vmatpush2.msra.mxu0 0.0
    %386 = vmatprep.subr.mxu0 0.0
    %387 = vmatpush2.msra.mxu0 0.0
    %388 = vmatprep.subr.mxu0 0.0
    %389 = vmatpush2.msra.mxu0 0.0
    %390 = vmatprep.subr.mxu0 0.0
    %391 = vmatpush2.msra.mxu0 0.0
    %392 = vmatprep.subr.mxu0 0.0
    %393 = vmatpush2.msra.mxu0 0.0
    %394 = vmatprep.mubr.f32.mxu0 0.0
    %395 = vmatmul.mubr.f32.gmra.mxu0 %v307
    %v396 = vpop.f32.mrf.mxu0
    %v397 = vadd.f32 0.0, %v396
    %v398 = vpop.f32.mrf.mxu0
    %399 = vmatprep.mubr.f32.mxu0 0.0
    %400 = vmatmul.mubr.f32.gmra.mxu0 %v310
    %v401 = vpop.f32.mrf.mxu0
    %v402 = vadd.f32 0.0, %v401
    %v403 = vpop.f32.mrf.mxu0
    %404 = vmatprep.mubr.f32.mxu0 0.0
    %405 = vmatmul.mubr.f32.gmra.mxu0 %v313
    %v406 = vpop.f32.mrf.mxu0
    %v407 = vadd.f32 0.0, %v406
    %v408 = vpop.f32.mrf.mxu0
    %409 = vmatprep.mubr.f32.mxu0 0.0
    %410 = vmatmul.mubr.f32.gmra.mxu0 %v316
    %v411 = vpop.f32.mrf.mxu0
    %v412 = vadd.f32 0.0, %v411
    %v413 = vpop.f32.mrf.mxu0
    %414 = vmatprep.mubr.f32.mxu0 0.0
    %415 = vmatmul.mubr.f32.gmra.mxu0 %v319
    %v416 = vpop.f32.mrf.mxu0
    %v417 = vadd.f32 0.0, %v416
    %v418 = vpop.f32.mrf.mxu0
    %419 = vmatprep.mubr.f32.mxu0 0.0
    %420 = vmatmul.mubr.f32.gmra.mxu0 %v322
    %v421 = vpop.f32.mrf.mxu0
    %v422 = vadd.f32 0.0, %v421
    %v423 = vpop.f32.mrf.mxu0
    %424 = vmatprep.mubr.f32.mxu0 0.0
    %425 = vmatmul.mubr.f32.gmra.mxu0 %v325
    %v426 = vpop.f32.mrf.mxu0
    %v427 = vadd.f32 0.0, %v426
    %v428 = vpop.f32.mrf.mxu0
    %429 = vmatprep.mubr.f32.mxu0 0.0
    %430 = vmatmul.mubr.f32.gmra.mxu0 %v328
    %v431 = vpop.f32.mrf.mxu0
    %v432 = vadd.f32 0.0, %v431
    %v433 = vpop.f32.mrf.mxu0
    %434 = vdwg.mxu0
    %v435 = vlaneseq
    %v436 = vshrl.u32 %v435, 7
    %v437 = vsub.s32 0, %v436
    %v438 = vrot.slane %v175, %v437
    %v440 = vsel %vm176, %v268, 0
    %v443 = vsel %vm176, %v273, 0
    %v446 = vsel %vm176, %v278, 0
    %v449 = vsel %vm176, %v283, 0
    %v452 = vsel %vm176, %v288, 0
    %v455 = vsel %vm176, %v293, 0
    %v458 = vsel %vm176, %v298, 0
    %v461 = vsel %vm176, %v303, 0
    %v464 = vsel %vm176, %v397, 0
    %v467 = vsel %vm176, %v402, 0
    %v470 = vsel %vm176, %v407, 0
    %v473 = vsel %vm176, %v412, 0
    %v476 = vsel %vm176, %v417, 0
    %v479 = vsel %vm176, %v422, 0
    %v482 = vsel %vm176, %v427, 0
    %v485 = vsel %vm176, %v432, 0
    %487 = vmatprep.subr.mxu0 0.0
    %488 = vmatpush1.msra.mxu0 0.0
    %489 = vmatprep.subr.mxu0 0.0
    %490 = vmatpush1.msra.mxu0 0.0
    %491 = vmatprep.subr.mxu0 0.0
    %492 = vmatpush1.msra.mxu0 0.0
    %493 = vmatprep.subr.mxu0 0.0
    %494 = vmatpush1.msra.mxu0 0.0
    %495 = vmatprep.subr.mxu0 0.0
    %496 = vmatpush1.msra.mxu0 0.0
    %497 = vmatprep.subr.mxu0 0.0
    %498 = vmatpush1.msra.mxu0 0.0
    %499 = vmatprep.subr.mxu0 0.0
    %500 = vmatpush1.msra.mxu0 0.0
    %501 = vmatprep.subr.mxu0 0.0
    %502 = vmatpush1.msra.mxu0 0.0
    %503 = vmatprep.subr.mxu0 0.0
    %504 = vmatpush1.msra.mxu0 0.0
    %505 = vmatprep.subr.mxu0 0.0
    %506 = vmatpush1.msra.mxu0 0.0
    %507 = vmatprep.subr.mxu0 0.0
    %508 = vmatpush1.msra.mxu0 0.0
    %509 = vmatprep.subr.mxu0 0.0
    %510 = vmatpush1.msra.mxu0 0.0
    %511 = vmatprep.subr.mxu0 0.0
    %512 = vmatpush1.msra.mxu0 0.0
    %513 = vmatprep.subr.mxu0 0.0
    %514 = vmatpush1.msra.mxu0 0.0
    %515 = vmatprep.subr.mxu0 0.0
    %516 = vmatpush1.msra.mxu0 %v166
    %517 = vmatprep.subr.mxu0 0.0
    %518 = vmatpush1.msra.mxu0 %v165
    %519 = vmatprep.subr.mxu0 0.0
    %520 = vmatpush2.msra.mxu0 0.0
    %521 = vmatprep.subr.mxu0 0.0
    %522 = vmatpush2.msra.mxu0 0.0
    %523 = vmatprep.subr.mxu0 0.0
    %524 = vmatpush2.msra.mxu0 0.0
    %525 = vmatprep.subr.mxu0 0.0
    %526 = vmatpush2.msra.mxu0 0.0
    %527 = vmatprep.subr.mxu0 0.0
    %528 = vmatpush2.msra.mxu0 0.0
    %529 = vmatprep.subr.mxu0 0.0
    %530 = vmatpush2.msra.mxu0 0.0
    %531 = vmatprep.subr.mxu0 0.0
    %532 = vmatpush2.msra.mxu0 0.0
    %533 = vmatprep.subr.mxu0 0.0
    %534 = vmatpush2.msra.mxu0 0.0
    %535 = vmatprep.subr.mxu0 0.0
    %536 = vmatpush2.msra.mxu0 0.0
    %537 = vmatprep.subr.mxu0 0.0
    %538 = vmatpush2.msra.mxu0 0.0
    %539 = vmatprep.subr.mxu0 0.0
    %540 = vmatpush2.msra.mxu0 0.0
    %541 = vmatprep.subr.mxu0 0.0
    %542 = vmatpush2.msra.mxu0 0.0
    %543 = vmatprep.subr.mxu0 0.0
    %544 = vmatpush2.msra.mxu0 0.0
    %545 = vmatprep.subr.mxu0 0.0
    %546 = vmatpush2.msra.mxu0 0.0
    %547 = vmatprep.subr.mxu0 0.0
    %548 = vmatpush2.msra.mxu0 0.0
    %549 = vmatprep.subr.mxu0 0.0
    %550 = vmatpush2.msra.mxu0 0.0
    %551 = vmatprep.mubr.f32.mxu0 0.0
    %552 = vmatmul.mubr.f32.gmra.mxu0 %v440
    %v553 = vpop.f32.mrf.mxu0
    %v554 = vadd.f32 %v438, %v553
    %v555 = vpop.f32.mrf.mxu0
    %556 = vmatprep.mubr.f32.mxu0 0.0
    %557 = vmatmul.mubr.f32.gmra.mxu0 %v443
    %v558 = vpop.f32.mrf.mxu0
    %v559 = vadd.f32 %v438, %v558
    %v560 = vpop.f32.mrf.mxu0
    %561 = vmatprep.mubr.f32.mxu0 0.0
    %562 = vmatmul.mubr.f32.gmra.mxu0 %v446
    %v563 = vpop.f32.mrf.mxu0
    %v564 = vadd.f32 %v438, %v563
    %v565 = vpop.f32.mrf.mxu0
    %566 = vmatprep.mubr.f32.mxu0 0.0
    %567 = vmatmul.mubr.f32.gmra.mxu0 %v449
    %v568 = vpop.f32.mrf.mxu0
    %v569 = vadd.f32 %v438, %v568
    %v570 = vpop.f32.mrf.mxu0
    %571 = vmatprep.mubr.f32.mxu0 0.0
    %572 = vmatmul.mubr.f32.gmra.mxu0 %v452
    %v573 = vpop.f32.mrf.mxu0
    %v574 = vadd.f32 %v438, %v573
    %v575 = vpop.f32.mrf.mxu0
    %576 = vmatprep.mubr.f32.mxu0 0.0
    %577 = vmatmul.mubr.f32.gmra.mxu0 %v455
    %v578 = vpop.f32.mrf.mxu0
    %v579 = vadd.f32 %v438, %v578
    %v580 = vpop.f32.mrf.mxu0
    %581 = vmatprep.mubr.f32.mxu0 0.0
    %582 = vmatmul.mubr.f32.gmra.mxu0 %v458
    %v583 = vpop.f32.mrf.mxu0
    %v584 = vadd.f32 %v438, %v583
    %v585 = vpop.f32.mrf.mxu0
    %586 = vmatprep.mubr.f32.mxu0 0.0
    %587 = vmatmul.mubr.f32.gmra.mxu0 %v461
    %v588 = vpop.f32.mrf.mxu0
    %v589 = vadd.f32 %v438, %v588
    %v590 = vpop.f32.mrf.mxu0
    %591 = vmatprep.mubr.f32.mxu0 0.0
    %592 = vmatmul.mubr.f32.gmra.mxu0 %v464
    %v593 = vpop.f32.mrf.mxu0
    %v594 = vadd.f32 %v438, %v593
    %v595 = vpop.f32.mrf.mxu0
    %596 = vmatprep.mubr.f32.mxu0 0.0
    %597 = vmatmul.mubr.f32.gmra.mxu0 %v467
    %v598 = vpop.f32.mrf.mxu0
    %v599 = vadd.f32 %v438, %v598
    %v600 = vpop.f32.mrf.mxu0
    %601 = vmatprep.mubr.f32.mxu0 0.0
    %602 = vmatmul.mubr.f32.gmra.mxu0 %v470
    %v603 = vpop.f32.mrf.mxu0
    %v604 = vadd.f32 %v438, %v603
    %v605 = vpop.f32.mrf.mxu0
    %606 = vmatprep.mubr.f32.mxu0 0.0
    %607 = vmatmul.mubr.f32.gmra.mxu0 %v473
    %v608 = vpop.f32.mrf.mxu0
    %v609 = vadd.f32 %v438, %v608
    %v610 = vpop.f32.mrf.mxu0
    %611 = vmatprep.mubr.f32.mxu0 0.0
    %612 = vmatmul.mubr.f32.gmra.mxu0 %v476
    %v613 = vpop.f32.mrf.mxu0
    %v614 = vadd.f32 %v438, %v613
    %v615 = vpop.f32.mrf.mxu0
    %616 = vmatprep.mubr.f32.mxu0 0.0
    %617 = vmatmul.mubr.f32.gmra.mxu0 %v479
    %v618 = vpop.f32.mrf.mxu0
    %v619 = vadd.f32 %v438, %v618
    %v620 = vpop.f32.mrf.mxu0
    %621 = vmatprep.mubr.f32.mxu0 0.0
    %622 = vmatmul.mubr.f32.gmra.mxu0 %v482
    %v623 = vpop.f32.mrf.mxu0
    %v624 = vadd.f32 %v438, %v623
    %v625 = vpop.f32.mrf.mxu0
    %626 = vmatprep.mubr.f32.mxu0 0.0
    %627 = vmatmul.mubr.f32.gmra.mxu0 %v485
    %v628 = vpop.f32.mrf.mxu0
    %v629 = vadd.f32 %v438, %v628
    %v630 = vpop.f32.mrf.mxu0
    %631 = vdwg.mxu0
    %v632 = vlaneseq
    %v633 = vshrl.u32 %v632, 7
    %v634 = vsub.s32 1, %v633
    %v635 = vrot.slane %v175, %v634
    %vm636 = vcmask 261120
    %v638 = vsel %vm636, %v554, 0
    %v641 = vsel %vm636, %v559, 0
    %v644 = vsel %vm636, %v564, 0
    %v647 = vsel %vm636, %v569, 0
    %v650 = vsel %vm636, %v574, 0
    %v653 = vsel %vm636, %v579, 0
    %v656 = vsel %vm636, %v584, 0
    %v659 = vsel %vm636, %v589, 0
    %v662 = vsel %vm636, %v594, 0
    %v665 = vsel %vm636, %v599, 0
    %v668 = vsel %vm636, %v604, 0
    %v671 = vsel %vm636, %v609, 0
    %v674 = vsel %vm636, %v614, 0
    %v677 = vsel %vm636, %v619, 0
    %v680 = vsel %vm636, %v624, 0
    %v683 = vsel %vm636, %v629, 0
    %685 = vmatprep.subr.mxu0 0.0
    %686 = vmatpush1.msra.mxu0 0.0
    %687 = vmatprep.subr.mxu0 0.0
    %688 = vmatpush1.msra.mxu0 0.0
    %689 = vmatprep.subr.mxu0 0.0
    %690 = vmatpush1.msra.mxu0 0.0
    %691 = vmatprep.subr.mxu0 0.0
    %692 = vmatpush1.msra.mxu0 0.0
    %693 = vmatprep.subr.mxu0 0.0
    %694 = vmatpush1.msra.mxu0 0.0
    %695 = vmatprep.subr.mxu0 0.0
    %696 = vmatpush1.msra.mxu0 0.0
    %697 = vmatprep.subr.mxu0 0.0
    %698 = vmatpush1.msra.mxu0 0.0
    %699 = vmatprep.subr.mxu0 0.0
    %700 = vmatpush1.msra.mxu0 0.0
    %701 = vmatprep.subr.mxu0 0.0
    %702 = vmatpush1.msra.mxu0 0.0
    %703 = vmatprep.subr.mxu0 0.0
    %704 = vmatpush1.msra.mxu0 0.0
    %705 = vmatprep.subr.mxu0 0.0
    %706 = vmatpush1.msra.mxu0 0.0
    %707 = vmatprep.subr.mxu0 0.0
    %708 = vmatpush1.msra.mxu0 0.0
    %709 = vmatprep.subr.mxu0 0.0
    %710 = vmatpush1.msra.mxu0 %v170
    %711 = vmatprep.subr.mxu0 0.0
    %712 = vmatpush1.msra.mxu0 %v169
    %713 = vmatprep.subr.mxu0 0.0
    %714 = vmatpush1.msra.mxu0 %v168
    %715 = vmatprep.subr.mxu0 0.0
    %716 = vmatpush1.msra.mxu0 %v167
    %717 = vmatprep.subr.mxu0 0.0
    %718 = vmatpush2.msra.mxu0 0.0
    %719 = vmatprep.subr.mxu0 0.0
    %720 = vmatpush2.msra.mxu0 0.0
    %721 = vmatprep.subr.mxu0 0.0
    %722 = vmatpush2.msra.mxu0 0.0
    %723 = vmatprep.subr.mxu0 0.0
    %724 = vmatpush2.msra.mxu0 0.0
    %725 = vmatprep.subr.mxu0 0.0
    %726 = vmatpush2.msra.mxu0 0.0
    %727 = vmatprep.subr.mxu0 0.0
    %728 = vmatpush2.msra.mxu0 0.0
    %729 = vmatprep.subr.mxu0 0.0
    %730 = vmatpush2.msra.mxu0 0.0
    %731 = vmatprep.subr.mxu0 0.0
    %732 = vmatpush2.msra.mxu0 0.0
    %733 = vmatprep.subr.mxu0 0.0
    %734 = vmatpush2.msra.mxu0 0.0
    %735 = vmatprep.subr.mxu0 0.0
    %736 = vmatpush2.msra.mxu0 0.0
    %737 = vmatprep.subr.mxu0 0.0
    %738 = vmatpush2.msra.mxu0 0.0
    %739 = vmatprep.subr.mxu0 0.0
    %740 = vmatpush2.msra.mxu0 0.0
    %741 = vmatprep.subr.mxu0 0.0
    %742 = vmatpush2.msra.mxu0 0.0
    %743 = vmatprep.subr.mxu0 0.0
    %744 = vmatpush2.msra.mxu0 0.0
    %745 = vmatprep.subr.mxu0 0.0
    %746 = vmatpush2.msra.mxu0 0.0
    %747 = vmatprep.subr.mxu0 0.0
    %748 = vmatpush2.msra.mxu0 0.0
    %749 = vmatprep.mubr.f32.mxu0 0.0
    %750 = vmatmul.mubr.f32.gmra.mxu0 %v638
    %v751 = vpop.f32.mrf.mxu0
    %v752 = vadd.f32 %v635, %v751
    %v753 = vpop.f32.mrf.mxu0
    %754 = vmatprep.mubr.f32.mxu0 0.0
    %755 = vmatmul.mubr.f32.gmra.mxu0 %v641
    %v756 = vpop.f32.mrf.mxu0
    %v757 = vadd.f32 %v635, %v756
    %v758 = vpop.f32.mrf.mxu0
    %759 = vmatprep.mubr.f32.mxu0 0.0
    %760 = vmatmul.mubr.f32.gmra.mxu0 %v644
    %v761 = vpop.f32.mrf.mxu0
    %v762 = vadd.f32 %v635, %v761
    %v763 = vpop.f32.mrf.mxu0
    %764 = vmatprep.mubr.f32.mxu0 0.0
    %765 = vmatmul.mubr.f32.gmra.mxu0 %v647
    %v766 = vpop.f32.mrf.mxu0
    %v767 = vadd.f32 %v635, %v766
    %v768 = vpop.f32.mrf.mxu0
    %769 = vmatprep.mubr.f32.mxu0 0.0
    %770 = vmatmul.mubr.f32.gmra.mxu0 %v650
    %v771 = vpop.f32.mrf.mxu0
    %v772 = vadd.f32 %v635, %v771
    %v773 = vpop.f32.mrf.mxu0
    %774 = vmatprep.mubr.f32.mxu0 0.0
    %775 = vmatmul.mubr.f32.gmra.mxu0 %v653
    %v776 = vpop.f32.mrf.mxu0
    %v777 = vadd.f32 %v635, %v776
    %v778 = vpop.f32.mrf.mxu0
    %779 = vmatprep.mubr.f32.mxu0 0.0
    %780 = vmatmul.mubr.f32.gmra.mxu0 %v656
    %v781 = vpop.f32.mrf.mxu0
    %v782 = vadd.f32 %v635, %v781
    %v783 = vpop.f32.mrf.mxu0
    %784 = vmatprep.mubr.f32.mxu0 0.0
    %785 = vmatmul.mubr.f32.gmra.mxu0 %v659
    %v786 = vpop.f32.mrf.mxu0
    %v787 = vadd.f32 %v635, %v786
    %v788 = vpop.f32.mrf.mxu0
    %789 = vmatprep.mubr.f32.mxu0 0.0
    %790 = vmatmul.mubr.f32.gmra.mxu0 %v662
    %v791 = vpop.f32.mrf.mxu0
    %v792 = vadd.f32 %v635, %v791
    %v793 = vpop.f32.mrf.mxu0
    %794 = vmatprep.mubr.f32.mxu0 0.0
    %795 = vmatmul.mubr.f32.gmra.mxu0 %v665
    %v796 = vpop.f32.mrf.mxu0
    %v797 = vadd.f32 %v635, %v796
    %v798 = vpop.f32.mrf.mxu0
    %799 = vmatprep.mubr.f32.mxu0 0.0
    %800 = vmatmul.mubr.f32.gmra.mxu0 %v668
    %v801 = vpop.f32.mrf.mxu0
    %v802 = vadd.f32 %v635, %v801
    %v803 = vpop.f32.mrf.mxu0
    %804 = vmatprep.mubr.f32.mxu0 0.0
    %805 = vmatmul.mubr.f32.gmra.mxu0 %v671
    %v806 = vpop.f32.mrf.mxu0
    %v807 = vadd.f32 %v635, %v806
    %v808 = vpop.f32.mrf.mxu0
    %809 = vmatprep.mubr.f32.mxu0 0.0
    %810 = vmatmul.mubr.f32.gmra.mxu0 %v674
    %v811 = vpop.f32.mrf.mxu0
    %v812 = vadd.f32 %v635, %v811
    %v813 = vpop.f32.mrf.mxu0
    %814 = vmatprep.mubr.f32.mxu0 0.0
    %815 = vmatmul.mubr.f32.gmra.mxu0 %v677
    %v816 = vpop.f32.mrf.mxu0
    %v817 = vadd.f32 %v635, %v816
    %v818 = vpop.f32.mrf.mxu0
    %819 = vmatprep.mubr.f32.mxu0 0.0
    %820 = vmatmul.mubr.f32.gmra.mxu0 %v680
    %v821 = vpop.f32.mrf.mxu0
    %v822 = vadd.f32 %v635, %v821
    %v823 = vpop.f32.mrf.mxu0
    %824 = vmatprep.mubr.f32.mxu0 0.0
    %825 = vmatmul.mubr.f32.gmra.mxu0 %v683
    %v826 = vpop.f32.mrf.mxu0
    %v827 = vadd.f32 %v635, %v826
    %v828 = vpop.f32.mrf.mxu0
    %829 = vdwg.mxu0
    %v830 = vlaneseq
    %v831 = vshrl.u32 %v830, 7
    %v832 = vsub.s32 2, %v831
    %v833 = vrot.slane %v175, %v832
    %v835 = vsel %vm636, 0.0, 0
    %837 = vmatprep.subr.mxu0 0.0
    %838 = vmatpush1.msra.mxu0 0.0
    %839 = vmatprep.subr.mxu0 0.0
    %840 = vmatpush1.msra.mxu0 0.0
    %841 = vmatprep.subr.mxu0 0.0
    %842 = vmatpush1.msra.mxu0 0.0
    %843 = vmatprep.subr.mxu0 0.0
    %844 = vmatpush1.msra.mxu0 0.0
    %845 = vmatprep.subr.mxu0 0.0
    %846 = vmatpush1.msra.mxu0 0.0
    %847 = vmatprep.subr.mxu0 0.0
    %848 = vmatpush1.msra.mxu0 0.0
    %849 = vmatprep.subr.mxu0 0.0
    %850 = vmatpush1.msra.mxu0 0.0
    %851 = vmatprep.subr.mxu0 0.0
    %852 = vmatpush1.msra.mxu0 0.0
    %853 = vmatprep.subr.mxu0 0.0
    %854 = vmatpush1.msra.mxu0 0.0
    %855 = vmatprep.subr.mxu0 0.0
    %856 = vmatpush1.msra.mxu0 0.0
    %857 = vmatprep.subr.mxu0 0.0
    %858 = vmatpush1.msra.mxu0 0.0
    %859 = vmatprep.subr.mxu0 0.0
    %860 = vmatpush1.msra.mxu0 0.0
    %861 = vmatprep.subr.mxu0 0.0
    %862 = vmatpush1.msra.mxu0 %v174
    %863 = vmatprep.subr.mxu0 0.0
    %864 = vmatpush1.msra.mxu0 %v173
    %865 = vmatprep.subr.mxu0 0.0
    %866 = vmatpush1.msra.mxu0 %v172
    %867 = vmatprep.subr.mxu0 0.0
    %868 = vmatpush1.msra.mxu0 %v171
    %869 = vmatprep.subr.mxu0 0.0
    %870 = vmatpush2.msra.mxu0 0.0
    %871 = vmatprep.subr.mxu0 0.0
    %872 = vmatpush2.msra.mxu0 0.0
    %873 = vmatprep.subr.mxu0 0.0
    %874 = vmatpush2.msra.mxu0 0.0
    %875 = vmatprep.subr.mxu0 0.0
    %876 = vmatpush2.msra.mxu0 0.0
    %877 = vmatprep.subr.mxu0 0.0
    %878 = vmatpush2.msra.mxu0 0.0
    %879 = vmatprep.subr.mxu0 0.0
    %880 = vmatpush2.msra.mxu0 0.0
    %881 = vmatprep.subr.mxu0 0.0
    %882 = vmatpush2.msra.mxu0 0.0
    %883 = vmatprep.subr.mxu0 0.0
    %884 = vmatpush2.msra.mxu0 0.0
    %885 = vmatprep.subr.mxu0 0.0
    %886 = vmatpush2.msra.mxu0 0.0
    %887 = vmatprep.subr.mxu0 0.0
    %888 = vmatpush2.msra.mxu0 0.0
    %889 = vmatprep.subr.mxu0 0.0
    %890 = vmatpush2.msra.mxu0 0.0
    %891 = vmatprep.subr.mxu0 0.0
    %892 = vmatpush2.msra.mxu0 0.0
    %893 = vmatprep.subr.mxu0 0.0
    %894 = vmatpush2.msra.mxu0 0.0
    %895 = vmatprep.subr.mxu0 0.0
    %896 = vmatpush2.msra.mxu0 0.0
    %897 = vmatprep.subr.mxu0 0.0
    %898 = vmatpush2.msra.mxu0 0.0
    %899 = vmatprep.subr.mxu0 0.0
    %900 = vmatpush2.msra.mxu0 0.0
    %901 = vmatprep.mubr.f32.mxu0 0.0
    %902 = vmatmul.mubr.f32.gmra.mxu0 %v835
    %v903 = vpop.f32.mrf.mxu0
    %v904 = vadd.f32 %v833, %v903
    %v905 = vpop.f32.mrf.mxu0
    %906 = vmatprep.mubr.f32.mxu0 0.0
    %907 = vmatmul.mubr.f32.gmra.mxu0 %v835
    %v908 = vpop.f32.mrf.mxu0
    %v909 = vadd.f32 %v833, %v908
    %v910 = vpop.f32.mrf.mxu0
    %911 = vmatprep.mubr.f32.mxu0 0.0
    %912 = vmatmul.mubr.f32.gmra.mxu0 %v835
    %v913 = vpop.f32.mrf.mxu0
    %v914 = vadd.f32 %v833, %v913
    %v915 = vpop.f32.mrf.mxu0
    %916 = vmatprep.mubr.f32.mxu0 0.0
    %917 = vmatmul.mubr.f32.gmra.mxu0 %v835
    %v918 = vpop.f32.mrf.mxu0
    %v919 = vadd.f32 %v833, %v918
    %v920 = vpop.f32.mrf.mxu0
    %921 = vdwg.mxu0
    %v922 = vadd.f32 %v752, %v904
    %v923 = vadd.f32 %v757, %v909
    %v924 = vadd.f32 %v792, %v914
    %v925 = vadd.f32 %v797, %v919
    %v926 = vxor.u32 %v922, 2147483648
    %v927 = vxor.u32 %v923, 2147483648
    %v928 = vxor.u32 %v924, 2147483648
    %v929 = vxor.u32 %v925, 2147483648
    %v930 = vmul.f32 %v926, 1.442695
    %v931 = vpow.pop %v930
    %v932 = vmul.f32 %v927, 1.442695
    %v933 = vpow.pop %v932
    %v934 = vmul.f32 %v928, 1.442695
    %v935 = vpow.pop %v934
    %v936 = vmul.f32 %v929, 1.442695
    %v937 = vpow.pop %v936
    %v938 = vadd.f32 %v931, 1.0
    %v939 = vadd.f32 %v933, 1.0
    %v940 = vadd.f32 %v935, 1.0
    %v941 = vadd.f32 %v937, 1.0
    %v942 = vrcp.pop %v938
    %v943 = vmul.f32 1.0, %v942
    %v944 = vrcp.pop %v939
    %v945 = vmul.f32 1.0, %v944
    %v946 = vrcp.pop %v940
    %v947 = vmul.f32 1.0, %v946
    %v948 = vrcp.pop %v941
    %v949 = vmul.f32 1.0, %v948
    %954 = vrot.lane.b32.xlu0 %v904, 64
    %v955 = vpop.permute.xlu0 %954
    %956 = vrot.lane.b32.xlu0 %v909, 64
    %v957 = vpop.permute.xlu0 %956
    %958 = vrot.lane.b32.xlu0 %v914, 64
    %v959 = vpop.permute.xlu0 %958
    %960 = vrot.lane.b32.xlu0 %v919, 64
    %v961 = vpop.permute.xlu0 %960
    %v966 = vmul.f32 %v943, %v955
    %v967 = vmul.f32 %v945, %v957
    %v968 = vmul.f32 %v947, %v959
    %v969 = vmul.f32 %v949, %v961
    %974 = vrot.lane.b32.xlu0 %v966, 64
    %v975 = vpop.permute.xlu0 %974
    %976 = vrot.lane.b32.xlu0 %v967, 64
    %v977 = vpop.permute.xlu0 %976
    %978 = vrot.lane.b32.xlu0 %v968, 64
    %v979 = vpop.permute.xlu0 %978
    %980 = vrot.lane.b32.xlu0 %v969, 64
    %v981 = vpop.permute.xlu0 %980
    %v986 = vadd.f32 %v752, %v975
    %v987 = vadd.f32 %v757, %v977
    %v988 = vadd.f32 %v792, %v979
    %v989 = vadd.f32 %v797, %v981
    %v990 = vtanh.pop %v986
    %v991 = vtanh.pop %v987
    %v992 = vtanh.pop %v988
    %v993 = vtanh.pop %v989
    %v994 = vsub.f32 1.0, %v943
    %v995 = vsub.f32 1.0, %v945
    %v996 = vsub.f32 1.0, %v947
    %v997 = vsub.f32 1.0, %v949
    %1002 = vrot.lane.b32.xlu0 %v990, 96
    %v1003 = vpop.permute.xlu0 %1002
    %1004 = vrot.lane.b32.xlu0 %v991, 96
    %v1005 = vpop.permute.xlu0 %1004
    %1006 = vrot.lane.b32.xlu0 %v992, 96
    %v1007 = vpop.permute.xlu0 %1006
    %1008 = vrot.lane.b32.xlu0 %v993, 96
    %v1009 = vpop.permute.xlu0 %1008
    %v1014 = vmul.f32 %v994, %v1003
    %v1015 = vmul.f32 %v995, %v1005
    %v1016 = vmul.f32 %v996, %v1007
    %v1017 = vmul.f32 %v997, %v1009
    %v1018 = vmul.f32 %v943, 0.0
    %v1019 = vmul.f32 %v945, 0.0
    %v1020 = vmul.f32 %v947, 0.0
    %v1021 = vmul.f32 %v949, 0.0
    %v1022 = vadd.f32 %v1014, %v1018
    %v1023 = vadd.f32 %v1015, %v1019
    %v1024 = vadd.f32 %v1016, %v1020
    %v1025 = vadd.f32 %v1017, %v1021
    %v1026 = vadd.f32 %v1022, 0.0
    %v1027 = vadd.f32 %v1023, 0.0
    %v1028 = vadd.f32 %v1024, 0.0
    %v1029 = vadd.f32 %v1025, 0.0
    %1034 = vrot.lane.b32.xlu0 %v1022, 96
    %v1035 = vpop.permute.xlu0 %1034
    %1036 = vrot.lane.b32.xlu0 %v1023, 96
    %v1037 = vpop.permute.xlu0 %1036
    %1038 = vrot.lane.b32.xlu0 %v1024, 96
    %v1039 = vpop.permute.xlu0 %1038
    %1040 = vrot.lane.b32.xlu0 %v1025, 96
    %v1041 = vpop.permute.xlu0 %1040
    %v1042 = vsel %vm636, %v1035, 0
    %v1044 = vsel %vm636, %v1037, 0
    %v1046 = vsel %vm636, %v1039, 0
    %v1048 = vsel %vm636, %v1041, 0
    %1050 = vmatprep.subr.mxu0 0.0
    %1051 = vmatpush1.msra.mxu0 0.0
    %1052 = vmatprep.subr.mxu0 0.0
    %1053 = vmatpush1.msra.mxu0 0.0
    %1054 = vmatprep.subr.mxu0 0.0
    %1055 = vmatpush1.msra.mxu0 0.0
    %1056 = vmatprep.subr.mxu0 0.0
    %1057 = vmatpush1.msra.mxu0 0.0
    %1058 = vmatprep.subr.mxu0 0.0
    %1059 = vmatpush1.msra.mxu0 0.0
    %1060 = vmatprep.subr.mxu0 0.0
    %1061 = vmatpush1.msra.mxu0 0.0
    %1062 = vmatprep.subr.mxu0 0.0
    %1063 = vmatpush1.msra.mxu0 0.0
    %1064 = vmatprep.subr.mxu0 0.0
    %1065 = vmatpush1.msra.mxu0 0.0
    %1066 = vmatprep.subr.mxu0 0.0
    %1067 = vmatpush1.msra.mxu0 0.0
    %1068 = vmatprep.subr.mxu0 0.0
    %1069 = vmatpush1.msra.mxu0 0.0
    %1070 = vmatprep.subr.mxu0 0.0
    %1071 = vmatpush1.msra.mxu0 0.0
    %1072 = vmatprep.subr.mxu0 0.0
    %1073 = vmatpush1.msra.mxu0 0.0
    %1074 = vmatprep.subr.mxu0 0.0
    %1075 = vmatpush1.msra.mxu0 %v174
    %1076 = vmatprep.subr.mxu0 0.0
    %1077 = vmatpush1.msra.mxu0 %v173
    %1078 = vmatprep.subr.mxu0 0.0
    %1079 = vmatpush1.msra.mxu0 %v172
    %1080 = vmatprep.subr.mxu0 0.0
    %1081 = vmatpush1.msra.mxu0 %v171
    %1082 = vmatprep.subr.mxu0 0.0
    %1083 = vmatpush2.msra.mxu0 0.0
    %1084 = vmatprep.subr.mxu0 0.0
    %1085 = vmatpush2.msra.mxu0 0.0
    %1086 = vmatprep.subr.mxu0 0.0
    %1087 = vmatpush2.msra.mxu0 0.0
    %1088 = vmatprep.subr.mxu0 0.0
    %1089 = vmatpush2.msra.mxu0 0.0
    %1090 = vmatprep.subr.mxu0 0.0
    %1091 = vmatpush2.msra.mxu0 0.0
    %1092 = vmatprep.subr.mxu0 0.0
    %1093 = vmatpush2.msra.mxu0 0.0
    %1094 = vmatprep.subr.mxu0 0.0
    %1095 = vmatpush2.msra.mxu0 0.0
    %1096 = vmatprep.subr.mxu0 0.0
    %1097 = vmatpush2.msra.mxu0 0.0
    %1098 = vmatprep.subr.mxu0 0.0
    %1099 = vmatpush2.msra.mxu0 0.0
    %1100 = vmatprep.subr.mxu0 0.0
    %1101 = vmatpush2.msra.mxu0 0.0
    %1102 = vmatprep.subr.mxu0 0.0
    %1103 = vmatpush2.msra.mxu0 0.0
    %1104 = vmatprep.subr.mxu0 0.0
    %1105 = vmatpush2.msra.mxu0 0.0
    %1106 = vmatprep.subr.mxu0 0.0
    %1107 = vmatpush2.msra.mxu0 0.0
    %1108 = vmatprep.subr.mxu0 0.0
    %1109 = vmatpush2.msra.mxu0 0.0
    %1110 = vmatprep.subr.mxu0 0.0
    %1111 = vmatpush2.msra.mxu0 0.0
    %1112 = vmatprep.subr.mxu0 0.0
    %1113 = vmatpush2.msra.mxu0 0.0
    %1114 = vmatprep.mubr.f32.mxu0 0.0
    %1115 = vmatmul.mubr.f32.gmra.mxu0 %v1042
    %v1116 = vpop.f32.mrf.mxu0
    %v1117 = vadd.f32 %v833, %v1116
    %v1118 = vpop.f32.mrf.mxu0
    %1119 = vmatprep.mubr.f32.mxu0 0.0
    %1120 = vmatmul.mubr.f32.gmra.mxu0 %v1044
    %v1121 = vpop.f32.mrf.mxu0
    %v1122 = vadd.f32 %v833, %v1121
    %v1123 = vpop.f32.mrf.mxu0
    %1124 = vmatprep.mubr.f32.mxu0 0.0
    %1125 = vmatmul.mubr.f32.gmra.mxu0 %v1046
    %v1126 = vpop.f32.mrf.mxu0
    %v1127 = vadd.f32 %v833, %v1126
    %v1128 = vpop.f32.mrf.mxu0
    %1129 = vmatprep.mubr.f32.mxu0 0.0
    %1130 = vmatmul.mubr.f32.gmra.mxu0 %v1048
    %v1131 = vpop.f32.mrf.mxu0
    %v1132 = vadd.f32 %v833, %v1131
    %v1133 = vpop.f32.mrf.mxu0
    %1134 = vdwg.mxu0
    %v1135 = vadd.f32 %v762, %v1117
    %v1136 = vadd.f32 %v767, %v1122
    %v1137 = vadd.f32 %v802, %v1127
    %v1138 = vadd.f32 %v807, %v1132
    %v1139 = vxor.u32 %v1135, 2147483648
    %v1140 = vxor.u32 %v1136, 2147483648
    %v1141 = vxor.u32 %v1137, 2147483648
    %v1142 = vxor.u32 %v1138, 2147483648
    %v1143 = vmul.f32 %v1139, 1.442695
    %v1144 = vpow.pop %v1143
    %v1145 = vmul.f32 %v1140, 1.442695
    %v1146 = vpow.pop %v1145
    %v1147 = vmul.f32 %v1141, 1.442695
    %v1148 = vpow.pop %v1147
    %v1149 = vmul.f32 %v1142, 1.442695
    %v1150 = vpow.pop %v1149
    %v1151 = vadd.f32 %v1144, 1.0
    %v1152 = vadd.f32 %v1146, 1.0
    %v1153 = vadd.f32 %v1148, 1.0
    %v1154 = vadd.f32 %v1150, 1.0
    %v1155 = vrcp.pop %v1151
    %v1156 = vmul.f32 1.0, %v1155
    %v1157 = vrcp.pop %v1152
    %v1158 = vmul.f32 1.0, %v1157
    %v1159 = vrcp.pop %v1153
    %v1160 = vmul.f32 1.0, %v1159
    %v1161 = vrcp.pop %v1154
    %v1162 = vmul.f32 1.0, %v1161
    %1167 = vrot.lane.b32.xlu0 %v1117, 64
    %v1168 = vpop.permute.xlu0 %1167
    %1169 = vrot.lane.b32.xlu0 %v1122, 64
    %v1170 = vpop.permute.xlu0 %1169
    %1171 = vrot.lane.b32.xlu0 %v1127, 64
    %v1172 = vpop.permute.xlu0 %1171
    %1173 = vrot.lane.b32.xlu0 %v1132, 64
    %v1174 = vpop.permute.xlu0 %1173
    %v1179 = vmul.f32 %v1156, %v1168
    %v1180 = vmul.f32 %v1158, %v1170
    %v1181 = vmul.f32 %v1160, %v1172
    %v1182 = vmul.f32 %v1162, %v1174
    %1187 = vrot.lane.b32.xlu0 %v1179, 64
    %v1188 = vpop.permute.xlu0 %1187
    %1189 = vrot.lane.b32.xlu0 %v1180, 64
    %v1190 = vpop.permute.xlu0 %1189
    %1191 = vrot.lane.b32.xlu0 %v1181, 64
    %v1192 = vpop.permute.xlu0 %1191
    %1193 = vrot.lane.b32.xlu0 %v1182, 64
    %v1194 = vpop.permute.xlu0 %1193
    %v1199 = vadd.f32 %v762, %v1188
    %v1200 = vadd.f32 %v767, %v1190
    %v1201 = vadd.f32 %v802, %v1192
    %v1202 = vadd.f32 %v807, %v1194
    %v1203 = vtanh.pop %v1199
    %v1204 = vtanh.pop %v1200
    %v1205 = vtanh.pop %v1201
    %v1206 = vtanh.pop %v1202
    %v1207 = vsub.f32 1.0, %v1156
    %v1208 = vsub.f32 1.0, %v1158
    %v1209 = vsub.f32 1.0, %v1160
    %v1210 = vsub.f32 1.0, %v1162
    %1215 = vrot.lane.b32.xlu0 %v1203, 96
    %v1216 = vpop.permute.xlu0 %1215
    %1217 = vrot.lane.b32.xlu0 %v1204, 96
    %v1218 = vpop.permute.xlu0 %1217
    %1219 = vrot.lane.b32.xlu0 %v1205, 96
    %v1220 = vpop.permute.xlu0 %1219
    %1221 = vrot.lane.b32.xlu0 %v1206, 96
    %v1222 = vpop.permute.xlu0 %1221
    %v1227 = vmul.f32 %v1207, %v1216
    %v1228 = vmul.f32 %v1208, %v1218
    %v1229 = vmul.f32 %v1209, %v1220
    %v1230 = vmul.f32 %v1210, %v1222
    %v1231 = vmul.f32 %v1156, %v1022
    %v1232 = vmul.f32 %v1158, %v1023
    %v1233 = vmul.f32 %v1160, %v1024
    %v1234 = vmul.f32 %v1162, %v1025
    %v1235 = vadd.f32 %v1227, %v1231
    %v1236 = vadd.f32 %v1228, %v1232
    %v1237 = vadd.f32 %v1229, %v1233
    %v1238 = vadd.f32 %v1230, %v1234
    %v1239 = vadd.f32 %v1026, %v1235
    %v1240 = vadd.f32 %v1027, %v1236
    %v1241 = vadd.f32 %v1028, %v1237
    %v1242 = vadd.f32 %v1029, %v1238
    %1247 = vrot.lane.b32.xlu0 %v1235, 96
    %v1248 = vpop.permute.xlu0 %1247
    %1249 = vrot.lane.b32.xlu0 %v1236, 96
    %v1250 = vpop.permute.xlu0 %1249
    %1251 = vrot.lane.b32.xlu0 %v1237, 96
    %v1252 = vpop.permute.xlu0 %1251
    %1253 = vrot.lane.b32.xlu0 %v1238, 96
    %v1254 = vpop.permute.xlu0 %1253
    %v1255 = vsel %vm636, %v1248, 0
    %v1257 = vsel %vm636, %v1250, 0
    %v1259 = vsel %vm636, %v1252, 0
    %v1261 = vsel %vm636, %v1254, 0
    %1263 = vmatprep.subr.mxu0 0.0
    %1264 = vmatpush1.msra.mxu0 0.0
    %1265 = vmatprep.subr.mxu0 0.0
    %1266 = vmatpush1.msra.mxu0 0.0
    %1267 = vmatprep.subr.mxu0 0.0
    %1268 = vmatpush1.msra.mxu0 0.0
    %1269 = vmatprep.subr.mxu0 0.0
    %1270 = vmatpush1.msra.mxu0 0.0
    %1271 = vmatprep.subr.mxu0 0.0
    %1272 = vmatpush1.msra.mxu0 0.0
    %1273 = vmatprep.subr.mxu0 0.0
    %1274 = vmatpush1.msra.mxu0 0.0
    %1275 = vmatprep.subr.mxu0 0.0
    %1276 = vmatpush1.msra.mxu0 0.0
    %1277 = vmatprep.subr.mxu0 0.0
    %1278 = vmatpush1.msra.mxu0 0.0
    %1279 = vmatprep.subr.mxu0 0.0
    %1280 = vmatpush1.msra.mxu0 0.0
    %1281 = vmatprep.subr.mxu0 0.0
    %1282 = vmatpush1.msra.mxu0 0.0
    %1283 = vmatprep.subr.mxu0 0.0
    %1284 = vmatpush1.msra.mxu0 0.0
    %1285 = vmatprep.subr.mxu0 0.0
    %1286 = vmatpush1.msra.mxu0 0.0
    %1287 = vmatprep.subr.mxu0 0.0
    %1288 = vmatpush1.msra.mxu0 %v174
    %1289 = vmatprep.subr.mxu0 0.0
    %1290 = vmatpush1.msra.mxu0 %v173
    %1291 = vmatprep.subr.mxu0 0.0
    %1292 = vmatpush1.msra.mxu0 %v172
    %1293 = vmatprep.subr.mxu0 0.0
    %1294 = vmatpush1.msra.mxu0 %v171
    %1295 = vmatprep.subr.mxu0 0.0
    %1296 = vmatpush2.msra.mxu0 0.0
    %1297 = vmatprep.subr.mxu0 0.0
    %1298 = vmatpush2.msra.mxu0 0.0
    %1299 = vmatprep.subr.mxu0 0.0
    %1300 = vmatpush2.msra.mxu0 0.0
    %1301 = vmatprep.subr.mxu0 0.0
    %1302 = vmatpush2.msra.mxu0 0.0
    %1303 = vmatprep.subr.mxu0 0.0
    %1304 = vmatpush2.msra.mxu0 0.0
    %1305 = vmatprep.subr.mxu0 0.0
    %1306 = vmatpush2.msra.mxu0 0.0
    %1307 = vmatprep.subr.mxu0 0.0
    %1308 = vmatpush2.msra.mxu0 0.0
    %1309 = vmatprep.subr.mxu0 0.0
    %1310 = vmatpush2.msra.mxu0 0.0
    %1311 = vmatprep.subr.mxu0 0.0
    %1312 = vmatpush2.msra.mxu0 0.0
    %1313 = vmatprep.subr.mxu0 0.0
    %1314 = vmatpush2.msra.mxu0 0.0
    %1315 = vmatprep.subr.mxu0 0.0
    %1316 = vmatpush2.msra.mxu0 0.0
    %1317 = vmatprep.subr.mxu0 0.0
    %1318 = vmatpush2.msra.mxu0 0.0
    %1319 = vmatprep.subr.mxu0 0.0
    %1320 = vmatpush2.msra.mxu0 0.0
    %1321 = vmatprep.subr.mxu0 0.0
    %1322 = vmatpush2.msra.mxu0 0.0
    %1323 = vmatprep.subr.mxu0 0.0
    %1324 = vmatpush2.msra.mxu0 0.0
    %1325 = vmatprep.subr.mxu0 0.0
    %1326 = vmatpush2.msra.mxu0 0.0
    %1327 = vmatprep.mubr.f32.mxu0 0.0
    %1328 = vmatmul.mubr.f32.gmra.mxu0 %v1255
    %v1329 = vpop.f32.mrf.mxu0
    %v1330 = vadd.f32 %v833, %v1329
    %v1331 = vpop.f32.mrf.mxu0
    %1332 = vmatprep.mubr.f32.mxu0 0.0
    %1333 = vmatmul.mubr.f32.gmra.mxu0 %v1257
    %v1334 = vpop.f32.mrf.mxu0
    %v1335 = vadd.f32 %v833, %v1334
    %v1336 = vpop.f32.mrf.mxu0
    %1337 = vmatprep.mubr.f32.mxu0 0.0
    %1338 = vmatmul.mubr.f32.gmra.mxu0 %v1259
    %v1339 = vpop.f32.mrf.mxu0
    %v1340 = vadd.f32 %v833, %v1339
    %v1341 = vpop.f32.mrf.mxu0
    %1342 = vmatprep.mubr.f32.mxu0 0.0
    %1343 = vmatmul.mubr.f32.gmra.mxu0 %v1261
    %v1344 = vpop.f32.mrf.mxu0
    %v1345 = vadd.f32 %v833, %v1344
    %v1346 = vpop.f32.mrf.mxu0
    %1347 = vdwg.mxu0
    %v1348 = vadd.f32 %v772, %v1330
    %v1349 = vadd.f32 %v777, %v1335
    %v1350 = vadd.f32 %v812, %v1340
    %v1351 = vadd.f32 %v817, %v1345
    %v1352 = vxor.u32 %v1348, 2147483648
    %v1353 = vxor.u32 %v1349, 2147483648
    %v1354 = vxor.u32 %v1350, 2147483648
    %v1355 = vxor.u32 %v1351, 2147483648
    %v1356 = vmul.f32 %v1352, 1.442695
    %v1357 = vpow.pop %v1356
    %v1358 = vmul.f32 %v1353, 1.442695
    %v1359 = vpow.pop %v1358
    %v1360 = vmul.f32 %v1354, 1.442695
    %v1361 = vpow.pop %v1360
    %v1362 = vmul.f32 %v1355, 1.442695
    %v1363 = vpow.pop %v1362
    %v1364 = vadd.f32 %v1357, 1.0
    %v1365 = vadd.f32 %v1359, 1.0
    %v1366 = vadd.f32 %v1361, 1.0
    %v1367 = vadd.f32 %v1363, 1.0
    %v1368 = vrcp.pop %v1364
    %v1369 = vmul.f32 1.0, %v1368
    %v1370 = vrcp.pop %v1365
    %v1371 = vmul.f32 1.0, %v1370
    %v1372 = vrcp.pop %v1366
    %v1373 = vmul.f32 1.0, %v1372
    %v1374 = vrcp.pop %v1367
    %v1375 = vmul.f32 1.0, %v1374
    %1380 = vrot.lane.b32.xlu0 %v1330, 64
    %v1381 = vpop.permute.xlu0 %1380
    %1382 = vrot.lane.b32.xlu0 %v1335, 64
    %v1383 = vpop.permute.xlu0 %1382
    %1384 = vrot.lane.b32.xlu0 %v1340, 64
    %v1385 = vpop.permute.xlu0 %1384
    %1386 = vrot.lane.b32.xlu0 %v1345, 64
    %v1387 = vpop.permute.xlu0 %1386
    %v1392 = vmul.f32 %v1369, %v1381
    %v1393 = vmul.f32 %v1371, %v1383
    %v1394 = vmul.f32 %v1373, %v1385
    %v1395 = vmul.f32 %v1375, %v1387
    %1400 = vrot.lane.b32.xlu0 %v1392, 64
    %v1401 = vpop.permute.xlu0 %1400
    %1402 = vrot.lane.b32.xlu0 %v1393, 64
    %v1403 = vpop.permute.xlu0 %1402
    %1404 = vrot.lane.b32.xlu0 %v1394, 64
    %v1405 = vpop.permute.xlu0 %1404
    %1406 = vrot.lane.b32.xlu0 %v1395, 64
    %v1407 = vpop.permute.xlu0 %1406
    %v1412 = vadd.f32 %v772, %v1401
    %v1413 = vadd.f32 %v777, %v1403
    %v1414 = vadd.f32 %v812, %v1405
    %v1415 = vadd.f32 %v817, %v1407
    %v1416 = vtanh.pop %v1412
    %v1417 = vtanh.pop %v1413
    %v1418 = vtanh.pop %v1414
    %v1419 = vtanh.pop %v1415
    %v1420 = vsub.f32 1.0, %v1369
    %v1421 = vsub.f32 1.0, %v1371
    %v1422 = vsub.f32 1.0, %v1373
    %v1423 = vsub.f32 1.0, %v1375
    %1428 = vrot.lane.b32.xlu0 %v1416, 96
    %v1429 = vpop.permute.xlu0 %1428
    %1430 = vrot.lane.b32.xlu0 %v1417, 96
    %v1431 = vpop.permute.xlu0 %1430
    %1432 = vrot.lane.b32.xlu0 %v1418, 96
    %v1433 = vpop.permute.xlu0 %1432
    %1434 = vrot.lane.b32.xlu0 %v1419, 96
    %v1435 = vpop.permute.xlu0 %1434
    %v1440 = vmul.f32 %v1420, %v1429
    %v1441 = vmul.f32 %v1421, %v1431
    %v1442 = vmul.f32 %v1422, %v1433
    %v1443 = vmul.f32 %v1423, %v1435
    %v1444 = vmul.f32 %v1369, %v1235
    %v1445 = vmul.f32 %v1371, %v1236
    %v1446 = vmul.f32 %v1373, %v1237
    %v1447 = vmul.f32 %v1375, %v1238
    %v1448 = vadd.f32 %v1440, %v1444
    %v1449 = vadd.f32 %v1441, %v1445
    %v1450 = vadd.f32 %v1442, %v1446
    %v1451 = vadd.f32 %v1443, %v1447
    %v1452 = vadd.f32 %v1239, %v1448
    %v1453 = vadd.f32 %v1240, %v1449
    %v1454 = vadd.f32 %v1241, %v1450
    %v1455 = vadd.f32 %v1242, %v1451
    %1460 = vrot.lane.b32.xlu0 %v1448, 96
    %v1461 = vpop.permute.xlu0 %1460
    %1462 = vrot.lane.b32.xlu0 %v1449, 96
    %v1463 = vpop.permute.xlu0 %1462
    %1464 = vrot.lane.b32.xlu0 %v1450, 96
    %v1465 = vpop.permute.xlu0 %1464
    %1466 = vrot.lane.b32.xlu0 %v1451, 96
    %v1467 = vpop.permute.xlu0 %1466
    %v1468 = vsel %vm636, %v1461, 0
    %v1470 = vsel %vm636, %v1463, 0
    %v1472 = vsel %vm636, %v1465, 0
    %v1474 = vsel %vm636, %v1467, 0
    %1476 = vmatprep.subr.mxu0 0.0
    %1477 = vmatpush1.msra.mxu0 0.0
    %1478 = vmatprep.subr.mxu0 0.0
    %1479 = vmatpush1.msra.mxu0 0.0
    %1480 = vmatprep.subr.mxu0 0.0
    %1481 = vmatpush1.msra.mxu0 0.0
    %1482 = vmatprep.subr.mxu0 0.0
    %1483 = vmatpush1.msra.mxu0 0.0
    %1484 = vmatprep.subr.mxu0 0.0
    %1485 = vmatpush1.msra.mxu0 0.0
    %1486 = vmatprep.subr.mxu0 0.0
    %1487 = vmatpush1.msra.mxu0 0.0
    %1488 = vmatprep.subr.mxu0 0.0
    %1489 = vmatpush1.msra.mxu0 0.0
    %1490 = vmatprep.subr.mxu0 0.0
    %1491 = vmatpush1.msra.mxu0 0.0
    %1492 = vmatprep.subr.mxu0 0.0
    %1493 = vmatpush1.msra.mxu0 0.0
    %1494 = vmatprep.subr.mxu0 0.0
    %1495 = vmatpush1.msra.mxu0 0.0
    %1496 = vmatprep.subr.mxu0 0.0
    %1497 = vmatpush1.msra.mxu0 0.0
    %1498 = vmatprep.subr.mxu0 0.0
    %1499 = vmatpush1.msra.mxu0 0.0
    %1500 = vmatprep.subr.mxu0 0.0
    %1501 = vmatpush1.msra.mxu0 %v174
    %1502 = vmatprep.subr.mxu0 0.0
    %1503 = vmatpush1.msra.mxu0 %v173
    %1504 = vmatprep.subr.mxu0 0.0
    %1505 = vmatpush1.msra.mxu0 %v172
    %1506 = vmatprep.subr.mxu0 0.0
    %1507 = vmatpush1.msra.mxu0 %v171
    %1508 = vmatprep.subr.mxu0 0.0
    %1509 = vmatpush2.msra.mxu0 0.0
    %1510 = vmatprep.subr.mxu0 0.0
    %1511 = vmatpush2.msra.mxu0 0.0
    %1512 = vmatprep.subr.mxu0 0.0
    %1513 = vmatpush2.msra.mxu0 0.0
    %1514 = vmatprep.subr.mxu0 0.0
    %1515 = vmatpush2.msra.mxu0 0.0
    %1516 = vmatprep.subr.mxu0 0.0
    %1517 = vmatpush2.msra.mxu0 0.0
    %1518 = vmatprep.subr.mxu0 0.0
    %1519 = vmatpush2.msra.mxu0 0.0
    %1520 = vmatprep.subr.mxu0 0.0
    %1521 = vmatpush2.msra.mxu0 0.0
    %1522 = vmatprep.subr.mxu0 0.0
    %1523 = vmatpush2.msra.mxu0 0.0
    %1524 = vmatprep.subr.mxu0 0.0
    %1525 = vmatpush2.msra.mxu0 0.0
    %1526 = vmatprep.subr.mxu0 0.0
    %1527 = vmatpush2.msra.mxu0 0.0
    %1528 = vmatprep.subr.mxu0 0.0
    %1529 = vmatpush2.msra.mxu0 0.0
    %1530 = vmatprep.subr.mxu0 0.0
    %1531 = vmatpush2.msra.mxu0 0.0
    %1532 = vmatprep.subr.mxu0 0.0
    %1533 = vmatpush2.msra.mxu0 0.0
    %1534 = vmatprep.subr.mxu0 0.0
    %1535 = vmatpush2.msra.mxu0 0.0
    %1536 = vmatprep.subr.mxu0 0.0
    %1537 = vmatpush2.msra.mxu0 0.0
    %1538 = vmatprep.subr.mxu0 0.0
    %1539 = vmatpush2.msra.mxu0 0.0
    %1540 = vmatprep.mubr.f32.mxu0 0.0
    %1541 = vmatmul.mubr.f32.gmra.mxu0 %v1468
    %v1542 = vpop.f32.mrf.mxu0
    %v1543 = vadd.f32 %v833, %v1542
    %v1544 = vpop.f32.mrf.mxu0
    %1545 = vmatprep.mubr.f32.mxu0 0.0
    %1546 = vmatmul.mubr.f32.gmra.mxu0 %v1470
    %v1547 = vpop.f32.mrf.mxu0
    %v1548 = vadd.f32 %v833, %v1547
    %v1549 = vpop.f32.mrf.mxu0
    %1550 = vmatprep.mubr.f32.mxu0 0.0
    %1551 = vmatmul.mubr.f32.gmra.mxu0 %v1472
    %v1552 = vpop.f32.mrf.mxu0
    %v1553 = vadd.f32 %v833, %v1552
    %v1554 = vpop.f32.mrf.mxu0
    %1555 = vmatprep.mubr.f32.mxu0 0.0
    %1556 = vmatmul.mubr.f32.gmra.mxu0 %v1474
    %v1557 = vpop.f32.mrf.mxu0
    %v1558 = vadd.f32 %v833, %v1557
    %v1559 = vpop.f32.mrf.mxu0
    %1560 = vdwg.mxu0
    %v1561 = vadd.f32 %v782, %v1543
    %v1562 = vadd.f32 %v787, %v1548
    %v1563 = vadd.f32 %v822, %v1553
    %v1564 = vadd.f32 %v827, %v1558
    %v1565 = vxor.u32 %v1561, 2147483648
    %v1566 = vxor.u32 %v1562, 2147483648
    %v1567 = vxor.u32 %v1563, 2147483648
    %v1568 = vxor.u32 %v1564, 2147483648
    %v1569 = vmul.f32 %v1565, 1.442695
    %v1570 = vpow.pop %v1569
    %v1571 = vmul.f32 %v1566, 1.442695
    %v1572 = vpow.pop %v1571
    %v1573 = vmul.f32 %v1567, 1.442695
    %v1574 = vpow.pop %v1573
    %v1575 = vmul.f32 %v1568, 1.442695
    %v1576 = vpow.pop %v1575
    %v1577 = vadd.f32 %v1570, 1.0
    %v1578 = vadd.f32 %v1572, 1.0
    %v1579 = vadd.f32 %v1574, 1.0
    %v1580 = vadd.f32 %v1576, 1.0
    %v1581 = vrcp.pop %v1577
    %v1582 = vmul.f32 1.0, %v1581
    %v1583 = vrcp.pop %v1578
    %v1584 = vmul.f32 1.0, %v1583
    %v1585 = vrcp.pop %v1579
    %v1586 = vmul.f32 1.0, %v1585
    %v1587 = vrcp.pop %v1580
    %v1588 = vmul.f32 1.0, %v1587
    %1593 = vrot.lane.b32.xlu0 %v1543, 64
    %v1594 = vpop.permute.xlu0 %1593
    %1595 = vrot.lane.b32.xlu0 %v1548, 64
    %v1596 = vpop.permute.xlu0 %1595
    %1597 = vrot.lane.b32.xlu0 %v1553, 64
    %v1598 = vpop.permute.xlu0 %1597
    %1599 = vrot.lane.b32.xlu0 %v1558, 64
    %v1600 = vpop.permute.xlu0 %1599
    %v1605 = vmul.f32 %v1582, %v1594
    %v1606 = vmul.f32 %v1584, %v1596
    %v1607 = vmul.f32 %v1586, %v1598
    %v1608 = vmul.f32 %v1588, %v1600
    %1613 = vrot.lane.b32.xlu0 %v1605, 64
    %v1614 = vpop.permute.xlu0 %1613
    %1615 = vrot.lane.b32.xlu0 %v1606, 64
    %v1616 = vpop.permute.xlu0 %1615
    %1617 = vrot.lane.b32.xlu0 %v1607, 64
    %v1618 = vpop.permute.xlu0 %1617
    %1619 = vrot.lane.b32.xlu0 %v1608, 64
    %v1620 = vpop.permute.xlu0 %1619
    %v1625 = vadd.f32 %v782, %v1614
    %v1626 = vadd.f32 %v787, %v1616
    %v1627 = vadd.f32 %v822, %v1618
    %v1628 = vadd.f32 %v827, %v1620
    %v1629 = vtanh.pop %v1625
    %v1630 = vtanh.pop %v1626
    %v1631 = vtanh.pop %v1627
    %v1632 = vtanh.pop %v1628
    %v1633 = vsub.f32 1.0, %v1582
    %v1634 = vsub.f32 1.0, %v1584
    %v1635 = vsub.f32 1.0, %v1586
    %v1636 = vsub.f32 1.0, %v1588
    %1641 = vrot.lane.b32.xlu0 %v1629, 96
    %v1642 = vpop.permute.xlu0 %1641
    %1643 = vrot.lane.b32.xlu0 %v1630, 96
    %v1644 = vpop.permute.xlu0 %1643
    %1645 = vrot.lane.b32.xlu0 %v1631, 96
    %v1646 = vpop.permute.xlu0 %1645
    %1647 = vrot.lane.b32.xlu0 %v1632, 96
    %v1648 = vpop.permute.xlu0 %1647
    %v1653 = vmul.f32 %v1633, %v1642
    %v1654 = vmul.f32 %v1634, %v1644
    %v1655 = vmul.f32 %v1635, %v1646
    %v1656 = vmul.f32 %v1636, %v1648
    %v1657 = vmul.f32 %v1582, %v1448
    %v1658 = vmul.f32 %v1584, %v1449
    %v1659 = vmul.f32 %v1586, %v1450
    %v1660 = vmul.f32 %v1588, %v1451
    %v1661 = vadd.f32 %v1653, %v1657
    %v1662 = vadd.f32 %v1654, %v1658
    %v1663 = vadd.f32 %v1655, %v1659
    %v1664 = vadd.f32 %v1656, %v1660
    %v1665 = vadd.f32 %v1452, %v1661
    %v1666 = vadd.f32 %v1453, %v1662
    %v1667 = vadd.f32 %v1454, %v1663
    %v1668 = vadd.f32 %v1455, %v1664
    %v1669 = vmax.f32 %v1665, 0.0
    %v1670 = vmax.f32 %v1666, 0.0
    %v1671 = vmax.f32 %v1667, 0.0
    %v1672 = vmax.f32 %v1668, 0.0
    %v1673 = vld [vmem:[#allocation11] sm:$0xff]
    %v1674 = vld [vmem:[#allocation11 + $0x8] sm:$0xff]
    %v1675 = vld [vmem:[#allocation11 + $0x10] sm:$0xff]
    %v1676 = vld [vmem:[#allocation11 + $0x18] sm:$0xff]
    %v1677 = vld [vmem:[#allocation13] sm:$0xff]
    %v1678 = vld [vmem:[#allocation13 + $0x8] sm:$0xff]
    %v1679 = vld [vmem:[#allocation13 + $0x10] sm:$0xff]
    %v1680 = vld [vmem:[#allocation13 + $0x18] sm:$0xff]
    %v1681 = vld [vmem:[#allocation14] sm:$0xff]
    %v1682 = vld [vmem:[#allocation14 + $0x8] sm:$0xff]
    %v1683 = vld [vmem:[#allocation14 + $0x10] sm:$0xff]
    %v1684 = vld [vmem:[#allocation14 + $0x18] sm:$0xff]
    %v1685 = vld [vmem:[%s9] sm:$0x7]
    %1688 = vrot.lane.b32.xlu0 %v1669, 96
    %v1689 = vpop.permute.xlu0 %1688
    %1690 = vrot.lane.b32.xlu0 %v1670, 96
    %v1691 = vpop.permute.xlu0 %1690
    %1694 = vmatprep.subr.mxu0 0.0
    %1695 = vmatpush1.msra.mxu0 0.0
    %1696 = vmatprep.subr.mxu0 0.0
    %1697 = vmatpush1.msra.mxu0 0.0
    %1698 = vmatprep.subr.mxu0 0.0
    %1699 = vmatpush1.msra.mxu0 0.0
    %1700 = vmatprep.subr.mxu0 0.0
    %1701 = vmatpush1.msra.mxu0 0.0
    %1702 = vmatprep.subr.mxu0 0.0
    %1703 = vmatpush1.msra.mxu0 0.0
    %1704 = vmatprep.subr.mxu0 0.0
    %1705 = vmatpush1.msra.mxu0 0.0
    %1706 = vmatprep.subr.mxu0 0.0
    %1707 = vmatpush1.msra.mxu0 0.0
    %1708 = vmatprep.subr.mxu0 0.0
    %1709 = vmatpush1.msra.mxu0 0.0
    %1710 = vmatprep.subr.mxu0 0.0
    %1711 = vmatpush1.msra.mxu0 0.0
    %1712 = vmatprep.subr.mxu0 0.0
    %1713 = vmatpush1.msra.mxu0 0.0
    %1714 = vmatprep.subr.mxu0 0.0
    %1715 = vmatpush1.msra.mxu0 0.0
    %1716 = vmatprep.subr.mxu0 0.0
    %1717 = vmatpush1.msra.mxu0 0.0
    %1718 = vmatprep.subr.mxu0 0.0
    %1719 = vmatpush1.msra.mxu0 0.0
    %1720 = vmatprep.subr.mxu0 0.0
    %1721 = vmatpush1.msra.mxu0 0.0
    %1722 = vmatprep.subr.mxu0 0.0
    %1723 = vmatpush1.msra.mxu0 %v1691
    %1724 = vmatprep.subr.mxu0 0.0
    %1725 = vmatpush1.msra.mxu0 %v1689
    %1726 = vmatprep.subr.mxu0 0.0
    %1727 = vmatpush2.msra.mxu0 0.0
    %1728 = vmatprep.subr.mxu0 0.0
    %1729 = vmatpush2.msra.mxu0 0.0
    %1730 = vmatprep.subr.mxu0 0.0
    %1731 = vmatpush2.msra.mxu0 0.0
    %1732 = vmatprep.subr.mxu0 0.0
    %1733 = vmatpush2.msra.mxu0 0.0
    %1734 = vmatprep.subr.mxu0 0.0
    %1735 = vmatpush2.msra.mxu0 0.0
    %1736 = vmatprep.subr.mxu0 0.0
    %1737 = vmatpush2.msra.mxu0 0.0
    %1738 = vmatprep.subr.mxu0 0.0
    %1739 = vmatpush2.msra.mxu0 0.0
    %1740 = vmatprep.subr.mxu0 0.0
    %1741 = vmatpush2.msra.mxu0 0.0
    %1742 = vmatprep.subr.mxu0 0.0
    %1743 = vmatpush2.msra.mxu0 0.0
    %1744 = vmatprep.subr.mxu0 0.0
    %1745 = vmatpush2.msra.mxu0 0.0
    %1746 = vmatprep.subr.mxu0 0.0
    %1747 = vmatpush2.msra.mxu0 0.0
    %1748 = vmatprep.subr.mxu0 0.0
    %1749 = vmatpush2.msra.mxu0 0.0
    %1750 = vmatprep.subr.mxu0 0.0
    %1751 = vmatpush2.msra.mxu0 0.0
    %1752 = vmatprep.subr.mxu0 0.0
    %1753 = vmatpush2.msra.mxu0 0.0
    %1754 = vmatprep.subr.mxu0 0.0
    %1755 = vmatpush2.msra.mxu0 0.0
    %1756 = vmatprep.subr.mxu0 0.0
    %1757 = vmatpush2.msra.mxu0 0.0
    %1758 = vmatprep.mubr.f32.mxu0 0.0
    %1759 = vmatmul.mubr.f32.gmra.mxu0 %v178
    %v1760 = vpop.f32.mrf.mxu0
    %v1761 = vadd.f32 0.0, %v1760
    %v1762 = vpop.f32.mrf.mxu0
    %1763 = vmatprep.mubr.f32.mxu0 0.0
    %1764 = vmatmul.mubr.f32.gmra.mxu0 %v181
    %v1765 = vpop.f32.mrf.mxu0
    %v1766 = vadd.f32 0.0, %v1765
    %v1767 = vpop.f32.mrf.mxu0
    %1768 = vmatprep.mubr.f32.mxu0 0.0
    %1769 = vmatmul.mubr.f32.gmra.mxu0 %v184
    %v1770 = vpop.f32.mrf.mxu0
    %v1771 = vadd.f32 0.0, %v1770
    %v1772 = vpop.f32.mrf.mxu0
    %1773 = vmatprep.mubr.f32.mxu0 0.0
    %1774 = vmatmul.mubr.f32.gmra.mxu0 %v187
    %v1775 = vpop.f32.mrf.mxu0
    %v1776 = vadd.f32 0.0, %v1775
    %v1777 = vpop.f32.mrf.mxu0
    %1778 = vmatprep.mubr.f32.mxu0 0.0
    %1779 = vmatmul.mubr.f32.gmra.mxu0 %v190
    %v1780 = vpop.f32.mrf.mxu0
    %v1781 = vadd.f32 0.0, %v1780
    %v1782 = vpop.f32.mrf.mxu0
    %1783 = vmatprep.mubr.f32.mxu0 0.0
    %1784 = vmatmul.mubr.f32.gmra.mxu0 %v193
    %v1785 = vpop.f32.mrf.mxu0
    %v1786 = vadd.f32 0.0, %v1785
    %v1787 = vpop.f32.mrf.mxu0
    %1788 = vmatprep.mubr.f32.mxu0 0.0
    %1789 = vmatmul.mubr.f32.gmra.mxu0 %v196
    %v1790 = vpop.f32.mrf.mxu0
    %v1791 = vadd.f32 0.0, %v1790
    %v1792 = vpop.f32.mrf.mxu0
    %1793 = vmatprep.mubr.f32.mxu0 0.0
    %1794 = vmatmul.mubr.f32.gmra.mxu0 %v199
    %v1795 = vpop.f32.mrf.mxu0
    %v1796 = vadd.f32 0.0, %v1795
    %v1797 = vpop.f32.mrf.mxu0
    %1798 = vdwg.mxu0
    %1801 = vrot.lane.b32.xlu0 %v1671, 96
    %v1802 = vpop.permute.xlu0 %1801
    %1803 = vrot.lane.b32.xlu0 %v1672, 96
    %v1804 = vpop.permute.xlu0 %1803
    %1807 = vmatprep.subr.mxu0 0.0
    %1808 = vmatpush1.msra.mxu0 0.0
    %1809 = vmatprep.subr.mxu0 0.0
    %1810 = vmatpush1.msra.mxu0 0.0
    %1811 = vmatprep.subr.mxu0 0.0
    %1812 = vmatpush1.msra.mxu0 0.0
    %1813 = vmatprep.subr.mxu0 0.0
    %1814 = vmatpush1.msra.mxu0 0.0
    %1815 = vmatprep.subr.mxu0 0.0
    %1816 = vmatpush1.msra.mxu0 0.0
    %1817 = vmatprep.subr.mxu0 0.0
    %1818 = vmatpush1.msra.mxu0 0.0
    %1819 = vmatprep.subr.mxu0 0.0
    %1820 = vmatpush1.msra.mxu0 0.0
    %1821 = vmatprep.subr.mxu0 0.0
    %1822 = vmatpush1.msra.mxu0 0.0
    %1823 = vmatprep.subr.mxu0 0.0
    %1824 = vmatpush1.msra.mxu0 0.0
    %1825 = vmatprep.subr.mxu0 0.0
    %1826 = vmatpush1.msra.mxu0 0.0
    %1827 = vmatprep.subr.mxu0 0.0
    %1828 = vmatpush1.msra.mxu0 0.0
    %1829 = vmatprep.subr.mxu0 0.0
    %1830 = vmatpush1.msra.mxu0 0.0
    %1831 = vmatprep.subr.mxu0 0.0
    %1832 = vmatpush1.msra.mxu0 0.0
    %1833 = vmatprep.subr.mxu0 0.0
    %1834 = vmatpush1.msra.mxu0 0.0
    %1835 = vmatprep.subr.mxu0 0.0
    %1836 = vmatpush1.msra.mxu0 %v1804
    %1837 = vmatprep.subr.mxu0 0.0
    %1838 = vmatpush1.msra.mxu0 %v1802
    %1839 = vmatprep.subr.mxu0 0.0
    %1840 = vmatpush2.msra.mxu0 0.0
    %1841 = vmatprep.subr.mxu0 0.0
    %1842 = vmatpush2.msra.mxu0 0.0
    %1843 = vmatprep.subr.mxu0 0.0
    %1844 = vmatpush2.msra.mxu0 0.0
    %1845 = vmatprep.subr.mxu0 0.0
    %1846 = vmatpush2.msra.mxu0 0.0
    %1847 = vmatprep.subr.mxu0 0.0
    %1848 = vmatpush2.msra.mxu0 0.0
    %1849 = vmatprep.subr.mxu0 0.0
    %1850 = vmatpush2.msra.mxu0 0.0
    %1851 = vmatprep.subr.mxu0 0.0
    %1852 = vmatpush2.msra.mxu0 0.0
    %1853 = vmatprep.subr.mxu0 0.0
    %1854 = vmatpush2.msra.mxu0 0.0
    %1855 = vmatprep.subr.mxu0 0.0
    %1856 = vmatpush2.msra.mxu0 0.0
    %1857 = vmatprep.subr.mxu0 0.0
    %1858 = vmatpush2.msra.mxu0 0.0
    %1859 = vmatprep.subr.mxu0 0.0
    %1860 = vmatpush2.msra.mxu0 0.0
    %1861 = vmatprep.subr.mxu0 0.0
    %1862 = vmatpush2.msra.mxu0 0.0
    %1863 = vmatprep.subr.mxu0 0.0
    %1864 = vmatpush2.msra.mxu0 0.0
    %1865 = vmatprep.subr.mxu0 0.0
    %1866 = vmatpush2.msra.mxu0 0.0
    %1867 = vmatprep.subr.mxu0 0.0
    %1868 = vmatpush2.msra.mxu0 0.0
    %1869 = vmatprep.subr.mxu0 0.0
    %1870 = vmatpush2.msra.mxu0 0.0
    %1871 = vmatprep.mubr.f32.mxu0 0.0
    %1872 = vmatmul.mubr.f32.gmra.mxu0 %v307
    %v1873 = vpop.f32.mrf.mxu0
    %v1874 = vadd.f32 0.0, %v1873
    %v1875 = vpop.f32.mrf.mxu0
    %1876 = vmatprep.mubr.f32.mxu0 0.0
    %1877 = vmatmul.mubr.f32.gmra.mxu0 %v310
    %v1878 = vpop.f32.mrf.mxu0
    %v1879 = vadd.f32 0.0, %v1878
    %v1880 = vpop.f32.mrf.mxu0
    %1881 = vmatprep.mubr.f32.mxu0 0.0
    %1882 = vmatmul.mubr.f32.gmra.mxu0 %v313
    %v1883 = vpop.f32.mrf.mxu0
    %v1884 = vadd.f32 0.0, %v1883
    %v1885 = vpop.f32.mrf.mxu0
    %1886 = vmatprep.mubr.f32.mxu0 0.0
    %1887 = vmatmul.mubr.f32.gmra.mxu0 %v316
    %v1888 = vpop.f32.mrf.mxu0
    %v1889 = vadd.f32 0.0, %v1888
    %v1890 = vpop.f32.mrf.mxu0
    %1891 = vmatprep.mubr.f32.mxu0 0.0
    %1892 = vmatmul.mubr.f32.gmra.mxu0 %v319
    %v1893 = vpop.f32.mrf.mxu0
    %v1894 = vadd.f32 0.0, %v1893
    %v1895 = vpop.f32.mrf.mxu0
    %1896 = vmatprep.mubr.f32.mxu0 0.0
    %1897 = vmatmul.mubr.f32.gmra.mxu0 %v322
    %v1898 = vpop.f32.mrf.mxu0
    %v1899 = vadd.f32 0.0, %v1898
    %v1900 = vpop.f32.mrf.mxu0
    %1901 = vmatprep.mubr.f32.mxu0 0.0
    %1902 = vmatmul.mubr.f32.gmra.mxu0 %v325
    %v1903 = vpop.f32.mrf.mxu0
    %v1904 = vadd.f32 0.0, %v1903
    %v1905 = vpop.f32.mrf.mxu0
    %1906 = vmatprep.mubr.f32.mxu0 0.0
    %1907 = vmatmul.mubr.f32.gmra.mxu0 %v328
    %v1908 = vpop.f32.mrf.mxu0
    %v1909 = vadd.f32 0.0, %v1908
    %v1910 = vpop.f32.mrf.mxu0
    %1911 = vdwg.mxu0
    %v1912 = vlaneseq
    %v1913 = vshrl.u32 %v1912, 7
    %v1914 = vsub.s32 0, %v1913
    %v1915 = vrot.slane %v1685, %v1914
    %v1917 = vsel %vm636, %v1761, 0
    %v1920 = vsel %vm636, %v1766, 0
    %v1923 = vsel %vm636, %v1771, 0
    %v1926 = vsel %vm636, %v1776, 0
    %v1929 = vsel %vm636, %v1781, 0
    %v1932 = vsel %vm636, %v1786, 0
    %v1935 = vsel %vm636, %v1791, 0
    %v1938 = vsel %vm636, %v1796, 0
    %v1941 = vsel %vm636, %v1874, 0
    %v1944 = vsel %vm636, %v1879, 0
    %v1947 = vsel %vm636, %v1884, 0
    %v1950 = vsel %vm636, %v1889, 0
    %v1953 = vsel %vm636, %v1894, 0
    %v1956 = vsel %vm636, %v1899, 0
    %v1959 = vsel %vm636, %v1904, 0
    %v1962 = vsel %vm636, %v1909, 0
    %1964 = vmatprep.subr.mxu0 0.0
    %1965 = vmatpush1.msra.mxu0 0.0
    %1966 = vmatprep.subr.mxu0 0.0
    %1967 = vmatpush1.msra.mxu0 0.0
    %1968 = vmatprep.subr.mxu0 0.0
    %1969 = vmatpush1.msra.mxu0 0.0
    %1970 = vmatprep.subr.mxu0 0.0
    %1971 = vmatpush1.msra.mxu0 0.0
    %1972 = vmatprep.subr.mxu0 0.0
    %1973 = vmatpush1.msra.mxu0 0.0
    %1974 = vmatprep.subr.mxu0 0.0
    %1975 = vmatpush1.msra.mxu0 0.0
    %1976 = vmatprep.subr.mxu0 0.0
    %1977 = vmatpush1.msra.mxu0 0.0
    %1978 = vmatprep.subr.mxu0 0.0
    %1979 = vmatpush1.msra.mxu0 0.0
    %1980 = vmatprep.subr.mxu0 0.0
    %1981 = vmatpush1.msra.mxu0 0.0
    %1982 = vmatprep.subr.mxu0 0.0
    %1983 = vmatpush1.msra.mxu0 0.0
    %1984 = vmatprep.subr.mxu0 0.0
    %1985 = vmatpush1.msra.mxu0 0.0
    %1986 = vmatprep.subr.mxu0 0.0
    %1987 = vmatpush1.msra.mxu0 0.0
    %1988 = vmatprep.subr.mxu0 0.0
    %1989 = vmatpush1.msra.mxu0 %v1676
    %1990 = vmatprep.subr.mxu0 0.0
    %1991 = vmatpush1.msra.mxu0 %v1675
    %1992 = vmatprep.subr.mxu0 0.0
    %1993 = vmatpush1.msra.mxu0 %v1674
    %1994 = vmatprep.subr.mxu0 0.0
    %1995 = vmatpush1.msra.mxu0 %v1673
    %1996 = vmatprep.subr.mxu0 0.0
    %1997 = vmatpush2.msra.mxu0 0.0
    %1998 = vmatprep.subr.mxu0 0.0
    %1999 = vmatpush2.msra.mxu0 0.0
    %2000 = vmatprep.subr.mxu0 0.0
    %2001 = vmatpush2.msra.mxu0 0.0
    %2002 = vmatprep.subr.mxu0 0.0
    %2003 = vmatpush2.msra.mxu0 0.0
    %2004 = vmatprep.subr.mxu0 0.0
    %2005 = vmatpush2.msra.mxu0 0.0
    %2006 = vmatprep.subr.mxu0 0.0
    %2007 = vmatpush2.msra.mxu0 0.0
    %2008 = vmatprep.subr.mxu0 0.0
    %2009 = vmatpush2.msra.mxu0 0.0
    %2010 = vmatprep.subr.mxu0 0.0
    %2011 = vmatpush2.msra.mxu0 0.0
    %2012 = vmatprep.subr.mxu0 0.0
    %2013 = vmatpush2.msra.mxu0 0.0
    %2014 = vmatprep.subr.mxu0 0.0
    %2015 = vmatpush2.msra.mxu0 0.0
    %2016 = vmatprep.subr.mxu0 0.0
    %2017 = vmatpush2.msra.mxu0 0.0
    %2018 = vmatprep.subr.mxu0 0.0
    %2019 = vmatpush2.msra.mxu0 0.0
    %2020 = vmatprep.subr.mxu0 0.0
    %2021 = vmatpush2.msra.mxu0 0.0
    %2022 = vmatprep.subr.mxu0 0.0
    %2023 = vmatpush2.msra.mxu0 0.0
    %2024 = vmatprep.subr.mxu0 0.0
    %2025 = vmatpush2.msra.mxu0 0.0
    %2026 = vmatprep.subr.mxu0 0.0
    %2027 = vmatpush2.msra.mxu0 0.0
    %2028 = vmatprep.mubr.f32.mxu0 0.0
    %2029 = vmatmul.mubr.f32.gmra.mxu0 %v1917
    %v2030 = vpop.f32.mrf.mxu0
    %v2031 = vadd.f32 %v1915, %v2030
    %v2032 = vpop.f32.mrf.mxu0
    %2033 = vmatprep.mubr.f32.mxu0 0.0
    %2034 = vmatmul.mubr.f32.gmra.mxu0 %v1920
    %v2035 = vpop.f32.mrf.mxu0
    %v2036 = vadd.f32 %v1915, %v2035
    %v2037 = vpop.f32.mrf.mxu0
    %2038 = vmatprep.mubr.f32.mxu0 0.0
    %2039 = vmatmul.mubr.f32.gmra.mxu0 %v1923
    %v2040 = vpop.f32.mrf.mxu0
    %v2041 = vadd.f32 %v1915, %v2040
    %v2042 = vpop.f32.mrf.mxu0
    %2043 = vmatprep.mubr.f32.mxu0 0.0
    %2044 = vmatmul.mubr.f32.gmra.mxu0 %v1926
    %v2045 = vpop.f32.mrf.mxu0
    %v2046 = vadd.f32 %v1915, %v2045
    %v2047 = vpop.f32.mrf.mxu0
    %2048 = vmatprep.mubr.f32.mxu0 0.0
    %2049 = vmatmul.mubr.f32.gmra.mxu0 %v1929
    %v2050 = vpop.f32.mrf.mxu0
    %v2051 = vadd.f32 %v1915, %v2050
    %v2052 = vpop.f32.mrf.mxu0
    %2053 = vmatprep.mubr.f32.mxu0 0.0
    %2054 = vmatmul.mubr.f32.gmra.mxu0 %v1932
    %v2055 = vpop.f32.mrf.mxu0
    %v2056 = vadd.f32 %v1915, %v2055
    %v2057 = vpop.f32.mrf.mxu0
    %2058 = vmatprep.mubr.f32.mxu0 0.0
    %2059 = vmatmul.mubr.f32.gmra.mxu0 %v1935
    %v2060 = vpop.f32.mrf.mxu0
    %v2061 = vadd.f32 %v1915, %v2060
    %v2062 = vpop.f32.mrf.mxu0
    %2063 = vmatprep.mubr.f32.mxu0 0.0
    %2064 = vmatmul.mubr.f32.gmra.mxu0 %v1938
    %v2065 = vpop.f32.mrf.mxu0
    %v2066 = vadd.f32 %v1915, %v2065
    %v2067 = vpop.f32.mrf.mxu0
    %2068 = vmatprep.mubr.f32.mxu0 0.0
    %2069 = vmatmul.mubr.f32.gmra.mxu0 %v1941
    %v2070 = vpop.f32.mrf.mxu0
    %v2071 = vadd.f32 %v1915, %v2070
    %v2072 = vpop.f32.mrf.mxu0
    %2073 = vmatprep.mubr.f32.mxu0 0.0
    %2074 = vmatmul.mubr.f32.gmra.mxu0 %v1944
    %v2075 = vpop.f32.mrf.mxu0
    %v2076 = vadd.f32 %v1915, %v2075
    %v2077 = vpop.f32.mrf.mxu0
    %2078 = vmatprep.mubr.f32.mxu0 0.0
    %2079 = vmatmul.mubr.f32.gmra.mxu0 %v1947
    %v2080 = vpop.f32.mrf.mxu0
    %v2081 = vadd.f32 %v1915, %v2080
    %v2082 = vpop.f32.mrf.mxu0
    %2083 = vmatprep.mubr.f32.mxu0 0.0
    %2084 = vmatmul.mubr.f32.gmra.mxu0 %v1950
    %v2085 = vpop.f32.mrf.mxu0
    %v2086 = vadd.f32 %v1915, %v2085
    %v2087 = vpop.f32.mrf.mxu0
    %2088 = vmatprep.mubr.f32.mxu0 0.0
    %2089 = vmatmul.mubr.f32.gmra.mxu0 %v1953
    %v2090 = vpop.f32.mrf.mxu0
    %v2091 = vadd.f32 %v1915, %v2090
    %v2092 = vpop.f32.mrf.mxu0
    %2093 = vmatprep.mubr.f32.mxu0 0.0
    %2094 = vmatmul.mubr.f32.gmra.mxu0 %v1956
    %v2095 = vpop.f32.mrf.mxu0
    %v2096 = vadd.f32 %v1915, %v2095
    %v2097 = vpop.f32.mrf.mxu0
    %2098 = vmatprep.mubr.f32.mxu0 0.0
    %2099 = vmatmul.mubr.f32.gmra.mxu0 %v1959
    %v2100 = vpop.f32.mrf.mxu0
    %v2101 = vadd.f32 %v1915, %v2100
    %v2102 = vpop.f32.mrf.mxu0
    %2103 = vmatprep.mubr.f32.mxu0 0.0
    %2104 = vmatmul.mubr.f32.gmra.mxu0 %v1962
    %v2105 = vpop.f32.mrf.mxu0
    %v2106 = vadd.f32 %v1915, %v2105
    %v2107 = vpop.f32.mrf.mxu0
    %2108 = vdwg.mxu0
    %v2109 = vlaneseq
    %v2110 = vshrl.u32 %v2109, 7
    %v2111 = vsub.s32 1, %v2110
    %v2112 = vrot.slane %v1685, %v2111
    %v2114 = vsel %vm636, %v2031, 0
    %v2117 = vsel %vm636, %v2036, 0
    %v2120 = vsel %vm636, %v2041, 0
    %v2123 = vsel %vm636, %v2046, 0
    %v2126 = vsel %vm636, %v2051, 0
    %v2129 = vsel %vm636, %v2056, 0
    %v2132 = vsel %vm636, %v2061, 0
    %v2135 = vsel %vm636, %v2066, 0
    %v2138 = vsel %vm636, %v2071, 0
    %v2141 = vsel %vm636, %v2076, 0
    %v2144 = vsel %vm636, %v2081, 0
    %v2147 = vsel %vm636, %v2086, 0
    %v2150 = vsel %vm636, %v2091, 0
    %v2153 = vsel %vm636, %v2096, 0
    %v2156 = vsel %vm636, %v2101, 0
    %v2159 = vsel %vm636, %v2106, 0
    %2161 = vmatprep.subr.mxu0 0.0
    %2162 = vmatpush1.msra.mxu0 0.0
    %2163 = vmatprep.subr.mxu0 0.0
    %2164 = vmatpush1.msra.mxu0 0.0
    %2165 = vmatprep.subr.mxu0 0.0
    %2166 = vmatpush1.msra.mxu0 0.0
    %2167 = vmatprep.subr.mxu0 0.0
    %2168 = vmatpush1.msra.mxu0 0.0
    %2169 = vmatprep.subr.mxu0 0.0
    %2170 = vmatpush1.msra.mxu0 0.0
    %2171 = vmatprep.subr.mxu0 0.0
    %2172 = vmatpush1.msra.mxu0 0.0
    %2173 = vmatprep.subr.mxu0 0.0
    %2174 = vmatpush1.msra.mxu0 0.0
    %2175 = vmatprep.subr.mxu0 0.0
    %2176 = vmatpush1.msra.mxu0 0.0
    %2177 = vmatprep.subr.mxu0 0.0
    %2178 = vmatpush1.msra.mxu0 0.0
    %2179 = vmatprep.subr.mxu0 0.0
    %2180 = vmatpush1.msra.mxu0 0.0
    %2181 = vmatprep.subr.mxu0 0.0
    %2182 = vmatpush1.msra.mxu0 0.0
    %2183 = vmatprep.subr.mxu0 0.0
    %2184 = vmatpush1.msra.mxu0 0.0
    %2185 = vmatprep.subr.mxu0 0.0
    %2186 = vmatpush1.msra.mxu0 %v1680
    %2187 = vmatprep.subr.mxu0 0.0
    %2188 = vmatpush1.msra.mxu0 %v1679
    %2189 = vmatprep.subr.mxu0 0.0
    %2190 = vmatpush1.msra.mxu0 %v1678
    %2191 = vmatprep.subr.mxu0 0.0
    %2192 = vmatpush1.msra.mxu0 %v1677
    %2193 = vmatprep.subr.mxu0 0.0
    %2194 = vmatpush2.msra.mxu0 0.0
    %2195 = vmatprep.subr.mxu0 0.0
    %2196 = vmatpush2.msra.mxu0 0.0
    %2197 = vmatprep.subr.mxu0 0.0
    %2198 = vmatpush2.msra.mxu0 0.0
    %2199 = vmatprep.subr.mxu0 0.0
    %2200 = vmatpush2.msra.mxu0 0.0
    %2201 = vmatprep.subr.mxu0 0.0
    %2202 = vmatpush2.msra.mxu0 0.0
    %2203 = vmatprep.subr.mxu0 0.0
    %2204 = vmatpush2.msra.mxu0 0.0
    %2205 = vmatprep.subr.mxu0 0.0
    %2206 = vmatpush2.msra.mxu0 0.0
    %2207 = vmatprep.subr.mxu0 0.0
    %2208 = vmatpush2.msra.mxu0 0.0
    %2209 = vmatprep.subr.mxu0 0.0
    %2210 = vmatpush2.msra.mxu0 0.0
    %2211 = vmatprep.subr.mxu0 0.0
    %2212 = vmatpush2.msra.mxu0 0.0
    %2213 = vmatprep.subr.mxu0 0.0
    %2214 = vmatpush2.msra.mxu0 0.0
    %2215 = vmatprep.subr.mxu0 0.0
    %2216 = vmatpush2.msra.mxu0 0.0
    %2217 = vmatprep.subr.mxu0 0.0
    %2218 = vmatpush2.msra.mxu0 0.0
    %2219 = vmatprep.subr.mxu0 0.0
    %2220 = vmatpush2.msra.mxu0 0.0
    %2221 = vmatprep.subr.mxu0 0.0
    %2222 = vmatpush2.msra.mxu0 0.0
    %2223 = vmatprep.subr.mxu0 0.0
    %2224 = vmatpush2.msra.mxu0 0.0
    %2225 = vmatprep.mubr.f32.mxu0 0.0
    %2226 = vmatmul.mubr.f32.gmra.mxu0 %v2114
    %v2227 = vpop.f32.mrf.mxu0
    %v2228 = vadd.f32 %v2112, %v2227
    %v2229 = vpop.f32.mrf.mxu0
    %2230 = vmatprep.mubr.f32.mxu0 0.0
    %2231 = vmatmul.mubr.f32.gmra.mxu0 %v2117
    %v2232 = vpop.f32.mrf.mxu0
    %v2233 = vadd.f32 %v2112, %v2232
    %v2234 = vpop.f32.mrf.mxu0
    %2235 = vmatprep.mubr.f32.mxu0 0.0
    %2236 = vmatmul.mubr.f32.gmra.mxu0 %v2120
    %v2237 = vpop.f32.mrf.mxu0
    %v2238 = vadd.f32 %v2112, %v2237
    %v2239 = vpop.f32.mrf.mxu0
    %2240 = vmatprep.mubr.f32.mxu0 0.0
    %2241 = vmatmul.mubr.f32.gmra.mxu0 %v2123
    %v2242 = vpop.f32.mrf.mxu0
    %v2243 = vadd.f32 %v2112, %v2242
    %v2244 = vpop.f32.mrf.mxu0
    %2245 = vmatprep.mubr.f32.mxu0 0.0
    %2246 = vmatmul.mubr.f32.gmra.mxu0 %v2126
    %v2247 = vpop.f32.mrf.mxu0
    %v2248 = vadd.f32 %v2112, %v2247
    %v2249 = vpop.f32.mrf.mxu0
    %2250 = vmatprep.mubr.f32.mxu0 0.0
    %2251 = vmatmul.mubr.f32.gmra.mxu0 %v2129
    %v2252 = vpop.f32.mrf.mxu0
    %v2253 = vadd.f32 %v2112, %v2252
    %v2254 = vpop.f32.mrf.mxu0
    %2255 = vmatprep.mubr.f32.mxu0 0.0
    %2256 = vmatmul.mubr.f32.gmra.mxu0 %v2132
    %v2257 = vpop.f32.mrf.mxu0
    %v2258 = vadd.f32 %v2112, %v2257
    %v2259 = vpop.f32.mrf.mxu0
    %2260 = vmatprep.mubr.f32.mxu0 0.0
    %2261 = vmatmul.mubr.f32.gmra.mxu0 %v2135
    %v2262 = vpop.f32.mrf.mxu0
    %v2263 = vadd.f32 %v2112, %v2262
    %v2264 = vpop.f32.mrf.mxu0
    %2265 = vmatprep.mubr.f32.mxu0 0.0
    %2266 = vmatmul.mubr.f32.gmra.mxu0 %v2138
    %v2267 = vpop.f32.mrf.mxu0
    %v2268 = vadd.f32 %v2112, %v2267
    %v2269 = vpop.f32.mrf.mxu0
    %2270 = vmatprep.mubr.f32.mxu0 0.0
    %2271 = vmatmul.mubr.f32.gmra.mxu0 %v2141
    %v2272 = vpop.f32.mrf.mxu0
    %v2273 = vadd.f32 %v2112, %v2272
    %v2274 = vpop.f32.mrf.mxu0
    %2275 = vmatprep.mubr.f32.mxu0 0.0
    %2276 = vmatmul.mubr.f32.gmra.mxu0 %v2144
    %v2277 = vpop.f32.mrf.mxu0
    %v2278 = vadd.f32 %v2112, %v2277
    %v2279 = vpop.f32.mrf.mxu0
    %2280 = vmatprep.mubr.f32.mxu0 0.0
    %2281 = vmatmul.mubr.f32.gmra.mxu0 %v2147
    %v2282 = vpop.f32.mrf.mxu0
    %v2283 = vadd.f32 %v2112, %v2282
    %v2284 = vpop.f32.mrf.mxu0
    %2285 = vmatprep.mubr.f32.mxu0 0.0
    %2286 = vmatmul.mubr.f32.gmra.mxu0 %v2150
    %v2287 = vpop.f32.mrf.mxu0
    %v2288 = vadd.f32 %v2112, %v2287
    %v2289 = vpop.f32.mrf.mxu0
    %2290 = vmatprep.mubr.f32.mxu0 0.0
    %2291 = vmatmul.mubr.f32.gmra.mxu0 %v2153
    %v2292 = vpop.f32.mrf.mxu0
    %v2293 = vadd.f32 %v2112, %v2292
    %v2294 = vpop.f32.mrf.mxu0
    %2295 = vmatprep.mubr.f32.mxu0 0.0
    %2296 = vmatmul.mubr.f32.gmra.mxu0 %v2156
    %v2297 = vpop.f32.mrf.mxu0
    %v2298 = vadd.f32 %v2112, %v2297
    %v2299 = vpop.f32.mrf.mxu0
    %2300 = vmatprep.mubr.f32.mxu0 0.0
    %2301 = vmatmul.mubr.f32.gmra.mxu0 %v2159
    %v2302 = vpop.f32.mrf.mxu0
    %v2303 = vadd.f32 %v2112, %v2302
    %v2304 = vpop.f32.mrf.mxu0
    %2305 = vdwg.mxu0
    %v2306 = vlaneseq
    %v2307 = vshrl.u32 %v2306, 7
    %v2308 = vsub.s32 2, %v2307
    %v2309 = vrot.slane %v1685, %v2308
    %2310 = vmatprep.subr.mxu0 0.0
    %2311 = vmatpush1.msra.mxu0 0.0
    %2312 = vmatprep.subr.mxu0 0.0
    %2313 = vmatpush1.msra.mxu0 0.0
    %2314 = vmatprep.subr.mxu0 0.0
    %2315 = vmatpush1.msra.mxu0 0.0
    %2316 = vmatprep.subr.mxu0 0.0
    %2317 = vmatpush1.msra.mxu0 0.0
    %2318 = vmatprep.subr.mxu0 0.0
    %2319 = vmatpush1.msra.mxu0 0.0
    %2320 = vmatprep.subr.mxu0 0.0
    %2321 = vmatpush1.msra.mxu0 0.0
    %2322 = vmatprep.subr.mxu0 0.0
    %2323 = vmatpush1.msra.mxu0 0.0
    %2324 = vmatprep.subr.mxu0 0.0
    %2325 = vmatpush1.msra.mxu0 0.0
    %2326 = vmatprep.subr.mxu0 0.0
    %2327 = vmatpush1.msra.mxu0 0.0
    %2328 = vmatprep.subr.mxu0 0.0
    %2329 = vmatpush1.msra.mxu0 0.0
    %2330 = vmatprep.subr.mxu0 0.0
    %2331 = vmatpush1.msra.mxu0 0.0
    %2332 = vmatprep.subr.mxu0 0.0
    %2333 = vmatpush1.msra.mxu0 0.0
    %2334 = vmatprep.subr.mxu0 0.0
    %2335 = vmatpush1.msra.mxu0 %v1684
    %2336 = vmatprep.subr.mxu0 0.0
    %2337 = vmatpush1.msra.mxu0 %v1683
    %2338 = vmatprep.subr.mxu0 0.0
    %2339 = vmatpush1.msra.mxu0 %v1682
    %2340 = vmatprep.subr.mxu0 0.0
    %2341 = vmatpush1.msra.mxu0 %v1681
    %2342 = vmatprep.subr.mxu0 0.0
    %2343 = vmatpush2.msra.mxu0 0.0
    %2344 = vmatprep.subr.mxu0 0.0
    %2345 = vmatpush2.msra.mxu0 0.0
    %2346 = vmatprep.subr.mxu0 0.0
    %2347 = vmatpush2.msra.mxu0 0.0
    %2348 = vmatprep.subr.mxu0 0.0
    %2349 = vmatpush2.msra.mxu0 0.0
    %2350 = vmatprep.subr.mxu0 0.0
    %2351 = vmatpush2.msra.mxu0 0.0
    %2352 = vmatprep.subr.mxu0 0.0
    %2353 = vmatpush2.msra.mxu0 0.0
    %2354 = vmatprep.subr.mxu0 0.0
    %2355 = vmatpush2.msra.mxu0 0.0
    %2356 = vmatprep.subr.mxu0 0.0
    %2357 = vmatpush2.msra.mxu0 0.0
    %2358 = vmatprep.subr.mxu0 0.0
    %2359 = vmatpush2.msra.mxu0 0.0
    %2360 = vmatprep.subr.mxu0 0.0
    %2361 = vmatpush2.msra.mxu0 0.0
    %2362 = vmatprep.subr.mxu0 0.0
    %2363 = vmatpush2.msra.mxu0 0.0
    %2364 = vmatprep.subr.mxu0 0.0
    %2365 = vmatpush2.msra.mxu0 0.0
    %2366 = vmatprep.subr.mxu0 0.0
    %2367 = vmatpush2.msra.mxu0 0.0
    %2368 = vmatprep.subr.mxu0 0.0
    %2369 = vmatpush2.msra.mxu0 0.0
    %2370 = vmatprep.subr.mxu0 0.0
    %2371 = vmatpush2.msra.mxu0 0.0
    %2372 = vmatprep.subr.mxu0 0.0
    %2373 = vmatpush2.msra.mxu0 0.0
    %2374 = vmatprep.mubr.f32.mxu0 0.0
    %2375 = vmatmul.mubr.f32.gmra.mxu0 %v835
    %v2376 = vpop.f32.mrf.mxu0
    %v2377 = vadd.f32 %v2309, %v2376
    %v2378 = vpop.f32.mrf.mxu0
    %2379 = vmatprep.mubr.f32.mxu0 0.0
    %2380 = vmatmul.mubr.f32.gmra.mxu0 %v835
    %v2381 = vpop.f32.mrf.mxu0
    %v2382 = vadd.f32 %v2309, %v2381
    %v2383 = vpop.f32.mrf.mxu0
    %2384 = vmatprep.mubr.f32.mxu0 0.0
    %2385 = vmatmul.mubr.f32.gmra.mxu0 %v835
    %v2386 = vpop.f32.mrf.mxu0
    %v2387 = vadd.f32 %v2309, %v2386
    %v2388 = vpop.f32.mrf.mxu0
    %2389 = vmatprep.mubr.f32.mxu0 0.0
    %2390 = vmatmul.mubr.f32.gmra.mxu0 %v835
    %v2391 = vpop.f32.mrf.mxu0
    %v2392 = vadd.f32 %v2309, %v2391
    %v2393 = vpop.f32.mrf.mxu0
    %2394 = vdwg.mxu0
    %v2395 = vadd.f32 %v2228, %v2377
    %v2396 = vadd.f32 %v2233, %v2382
    %v2397 = vadd.f32 %v2268, %v2387
    %v2398 = vadd.f32 %v2273, %v2392
    %v2399 = vxor.u32 %v2395, 2147483648
    %v2400 = vxor.u32 %v2396, 2147483648
    %v2401 = vxor.u32 %v2397, 2147483648
    %v2402 = vxor.u32 %v2398, 2147483648
    %v2403 = vmul.f32 %v2399, 1.442695
    %v2404 = vpow.pop %v2403
    %v2405 = vmul.f32 %v2400, 1.442695
    %v2406 = vpow.pop %v2405
    %v2407 = vmul.f32 %v2401, 1.442695
    %v2408 = vpow.pop %v2407
    %v2409 = vmul.f32 %v2402, 1.442695
    %v2410 = vpow.pop %v2409
    %v2411 = vadd.f32 %v2404, 1.0
    %v2412 = vadd.f32 %v2406, 1.0
    %v2413 = vadd.f32 %v2408, 1.0
    %v2414 = vadd.f32 %v2410, 1.0
    %v2415 = vrcp.pop %v2411
    %v2416 = vmul.f32 1.0, %v2415
    %v2417 = vrcp.pop %v2412
    %v2418 = vmul.f32 1.0, %v2417
    %v2419 = vrcp.pop %v2413
    %v2420 = vmul.f32 1.0, %v2419
    %v2421 = vrcp.pop %v2414
    %v2422 = vmul.f32 1.0, %v2421
    %2427 = vrot.lane.b32.xlu0 %v2377, 64
    %v2428 = vpop.permute.xlu0 %2427
    %2429 = vrot.lane.b32.xlu0 %v2382, 64
    %v2430 = vpop.permute.xlu0 %2429
    %2431 = vrot.lane.b32.xlu0 %v2387, 64
    %v2432 = vpop.permute.xlu0 %2431
    %2433 = vrot.lane.b32.xlu0 %v2392, 64
    %v2434 = vpop.permute.xlu0 %2433
    %v2439 = vmul.f32 %v2416, %v2428
    %v2440 = vmul.f32 %v2418, %v2430
    %v2441 = vmul.f32 %v2420, %v2432
    %v2442 = vmul.f32 %v2422, %v2434
    %2447 = vrot.lane.b32.xlu0 %v2439, 64
    %v2448 = vpop.permute.xlu0 %2447
    %2449 = vrot.lane.b32.xlu0 %v2440, 64
    %v2450 = vpop.permute.xlu0 %2449
    %2451 = vrot.lane.b32.xlu0 %v2441, 64
    %v2452 = vpop.permute.xlu0 %2451
    %2453 = vrot.lane.b32.xlu0 %v2442, 64
    %v2454 = vpop.permute.xlu0 %2453
    %v2459 = vadd.f32 %v2228, %v2448
    %v2460 = vadd.f32 %v2233, %v2450
    %v2461 = vadd.f32 %v2268, %v2452
    %v2462 = vadd.f32 %v2273, %v2454
    %v2463 = vtanh.pop %v2459
    %v2464 = vtanh.pop %v2460
    %v2465 = vtanh.pop %v2461
    %v2466 = vtanh.pop %v2462
    %v2467 = vsub.f32 1.0, %v2416
    %v2468 = vsub.f32 1.0, %v2418
    %v2469 = vsub.f32 1.0, %v2420
    %v2470 = vsub.f32 1.0, %v2422
    %2475 = vrot.lane.b32.xlu0 %v2463, 96
    %v2476 = vpop.permute.xlu0 %2475
    %2477 = vrot.lane.b32.xlu0 %v2464, 96
    %v2478 = vpop.permute.xlu0 %2477
    %2479 = vrot.lane.b32.xlu0 %v2465, 96
    %v2480 = vpop.permute.xlu0 %2479
    %2481 = vrot.lane.b32.xlu0 %v2466, 96
    %v2482 = vpop.permute.xlu0 %2481
    %v2487 = vmul.f32 %v2467, %v2476
    %v2488 = vmul.f32 %v2468, %v2478
    %v2489 = vmul.f32 %v2469, %v2480
    %v2490 = vmul.f32 %v2470, %v2482
    %v2491 = vmul.f32 %v2416, 0.0
    %v2492 = vmul.f32 %v2418, 0.0
    %v2493 = vmul.f32 %v2420, 0.0
    %v2494 = vmul.f32 %v2422, 0.0
    %v2495 = vadd.f32 %v2487, %v2491
    %v2496 = vadd.f32 %v2488, %v2492
    %v2497 = vadd.f32 %v2489, %v2493
    %v2498 = vadd.f32 %v2490, %v2494
    %v2499 = vadd.f32 %v2495, 0.0
    %v2500 = vadd.f32 %v2496, 0.0
    %v2501 = vadd.f32 %v2497, 0.0
    %v2502 = vadd.f32 %v2498, 0.0
    %2507 = vrot.lane.b32.xlu0 %v2495, 96
    %v2508 = vpop.permute.xlu0 %2507
    %2509 = vrot.lane.b32.xlu0 %v2496, 96
    %v2510 = vpop.permute.xlu0 %2509
    %2511 = vrot.lane.b32.xlu0 %v2497, 96
    %v2512 = vpop.permute.xlu0 %2511
    %2513 = vrot.lane.b32.xlu0 %v2498, 96
    %v2514 = vpop.permute.xlu0 %2513
    %v2515 = vsel %vm636, %v2508, 0
    %v2517 = vsel %vm636, %v2510, 0
    %v2519 = vsel %vm636, %v2512, 0
    %v2521 = vsel %vm636, %v2514, 0
    %2523 = vmatprep.subr.mxu0 0.0
    %2524 = vmatpush1.msra.mxu0 0.0
    %2525 = vmatprep.subr.mxu0 0.0
    %2526 = vmatpush1.msra.mxu0 0.0
    %2527 = vmatprep.subr.mxu0 0.0
    %2528 = vmatpush1.msra.mxu0 0.0
    %2529 = vmatprep.subr.mxu0 0.0
    %2530 = vmatpush1.msra.mxu0 0.0
    %2531 = vmatprep.subr.mxu0 0.0
    %2532 = vmatpush1.msra.mxu0 0.0
    %2533 = vmatprep.subr.mxu0 0.0
    %2534 = vmatpush1.msra.mxu0 0.0
    %2535 = vmatprep.subr.mxu0 0.0
    %2536 = vmatpush1.msra.mxu0 0.0
    %2537 = vmatprep.subr.mxu0 0.0
    %2538 = vmatpush1.msra.mxu0 0.0
    %2539 = vmatprep.subr.mxu0 0.0
    %2540 = vmatpush1.msra.mxu0 0.0
    %2541 = vmatprep.subr.mxu0 0.0
    %2542 = vmatpush1.msra.mxu0 0.0
    %2543 = vmatprep.subr.mxu0 0.0
    %2544 = vmatpush1.msra.mxu0 0.0
    %2545 = vmatprep.subr.mxu0 0.0
    %2546 = vmatpush1.msra.mxu0 0.0
    %2547 = vmatprep.subr.mxu0 0.0
    %2548 = vmatpush1.msra.mxu0 %v1684
    %2549 = vmatprep.subr.mxu0 0.0
    %2550 = vmatpush1.msra.mxu0 %v1683
    %2551 = vmatprep.subr.mxu0 0.0
    %2552 = vmatpush1.msra.mxu0 %v1682
    %2553 = vmatprep.subr.mxu0 0.0
    %2554 = vmatpush1.msra.mxu0 %v1681
    %2555 = vmatprep.subr.mxu0 0.0
    %2556 = vmatpush2.msra.mxu0 0.0
    %2557 = vmatprep.subr.mxu0 0.0
    %2558 = vmatpush2.msra.mxu0 0.0
    %2559 = vmatprep.subr.mxu0 0.0
    %2560 = vmatpush2.msra.mxu0 0.0
    %2561 = vmatprep.subr.mxu0 0.0
    %2562 = vmatpush2.msra.mxu0 0.0
    %2563 = vmatprep.subr.mxu0 0.0
    %2564 = vmatpush2.msra.mxu0 0.0
    %2565 = vmatprep.subr.mxu0 0.0
    %2566 = vmatpush2.msra.mxu0 0.0
    %2567 = vmatprep.subr.mxu0 0.0
    %2568 = vmatpush2.msra.mxu0 0.0
    %2569 = vmatprep.subr.mxu0 0.0
    %2570 = vmatpush2.msra.mxu0 0.0
    %2571 = vmatprep.subr.mxu0 0.0
    %2572 = vmatpush2.msra.mxu0 0.0
    %2573 = vmatprep.subr.mxu0 0.0
    %2574 = vmatpush2.msra.mxu0 0.0
    %2575 = vmatprep.subr.mxu0 0.0
    %2576 = vmatpush2.msra.mxu0 0.0
    %2577 = vmatprep.subr.mxu0 0.0
    %2578 = vmatpush2.msra.mxu0 0.0
    %2579 = vmatprep.subr.mxu0 0.0
    %2580 = vmatpush2.msra.mxu0 0.0
    %2581 = vmatprep.subr.mxu0 0.0
    %2582 = vmatpush2.msra.mxu0 0.0
    %2583 = vmatprep.subr.mxu0 0.0
    %2584 = vmatpush2.msra.mxu0 0.0
    %2585 = vmatprep.subr.mxu0 0.0
    %2586 = vmatpush2.msra.mxu0 0.0
    %2587 = vmatprep.mubr.f32.mxu0 0.0
    %2588 = vmatmul.mubr.f32.gmra.mxu0 %v2515
    %v2589 = vpop.f32.mrf.mxu0
    %v2590 = vadd.f32 %v2309, %v2589
    %v2591 = vpop.f32.mrf.mxu0
    %2592 = vmatprep.mubr.f32.mxu0 0.0
    %2593 = vmatmul.mubr.f32.gmra.mxu0 %v2517
    %v2594 = vpop.f32.mrf.mxu0
    %v2595 = vadd.f32 %v2309, %v2594
    %v2596 = vpop.f32.mrf.mxu0
    %2597 = vmatprep.mubr.f32.mxu0 0.0
    %2598 = vmatmul.mubr.f32.gmra.mxu0 %v2519
    %v2599 = vpop.f32.mrf.mxu0
    %v2600 = vadd.f32 %v2309, %v2599
    %v2601 = vpop.f32.mrf.mxu0
    %2602 = vmatprep.mubr.f32.mxu0 0.0
    %2603 = vmatmul.mubr.f32.gmra.mxu0 %v2521
    %v2604 = vpop.f32.mrf.mxu0
    %v2605 = vadd.f32 %v2309, %v2604
    %v2606 = vpop.f32.mrf.mxu0
    %2607 = vdwg.mxu0
    %v2608 = vadd.f32 %v2238, %v2590
    %v2609 = vadd.f32 %v2243, %v2595
    %v2610 = vadd.f32 %v2278, %v2600
    %v2611 = vadd.f32 %v2283, %v2605
    %v2612 = vxor.u32 %v2608, 2147483648
    %v2613 = vxor.u32 %v2609, 2147483648
    %v2614 = vxor.u32 %v2610, 2147483648
    %v2615 = vxor.u32 %v2611, 2147483648
    %v2616 = vmul.f32 %v2612, 1.442695
    %v2617 = vpow.pop %v2616
    %v2618 = vmul.f32 %v2613, 1.442695
    %v2619 = vpow.pop %v2618
    %v2620 = vmul.f32 %v2614, 1.442695
    %v2621 = vpow.pop %v2620
    %v2622 = vmul.f32 %v2615, 1.442695
    %v2623 = vpow.pop %v2622
    %v2624 = vadd.f32 %v2617, 1.0
    %v2625 = vadd.f32 %v2619, 1.0
    %v2626 = vadd.f32 %v2621, 1.0
    %v2627 = vadd.f32 %v2623, 1.0
    %v2628 = vrcp.pop %v2624
    %v2629 = vmul.f32 1.0, %v2628
    %v2630 = vrcp.pop %v2625
    %v2631 = vmul.f32 1.0, %v2630
    %v2632 = vrcp.pop %v2626
    %v2633 = vmul.f32 1.0, %v2632
    %v2634 = vrcp.pop %v2627
    %v2635 = vmul.f32 1.0, %v2634
    %2640 = vrot.lane.b32.xlu0 %v2590, 64
    %v2641 = vpop.permute.xlu0 %2640
    %2642 = vrot.lane.b32.xlu0 %v2595, 64
    %v2643 = vpop.permute.xlu0 %2642
    %2644 = vrot.lane.b32.xlu0 %v2600, 64
    %v2645 = vpop.permute.xlu0 %2644
    %2646 = vrot.lane.b32.xlu0 %v2605, 64
    %v2647 = vpop.permute.xlu0 %2646
    %v2652 = vmul.f32 %v2629, %v2641
    %v2653 = vmul.f32 %v2631, %v2643
    %v2654 = vmul.f32 %v2633, %v2645
    %v2655 = vmul.f32 %v2635, %v2647
    %2660 = vrot.lane.b32.xlu0 %v2652, 64
    %v2661 = vpop.permute.xlu0 %2660
    %2662 = vrot.lane.b32.xlu0 %v2653, 64
    %v2663 = vpop.permute.xlu0 %2662
    %2664 = vrot.lane.b32.xlu0 %v2654, 64
    %v2665 = vpop.permute.xlu0 %2664
    %2666 = vrot.lane.b32.xlu0 %v2655, 64
    %v2667 = vpop.permute.xlu0 %2666
    %v2672 = vadd.f32 %v2238, %v2661
    %v2673 = vadd.f32 %v2243, %v2663
    %v2674 = vadd.f32 %v2278, %v2665
    %v2675 = vadd.f32 %v2283, %v2667
    %v2676 = vtanh.pop %v2672
    %v2677 = vtanh.pop %v2673
    %v2678 = vtanh.pop %v2674
    %v2679 = vtanh.pop %v2675
    %v2680 = vsub.f32 1.0, %v2629
    %v2681 = vsub.f32 1.0, %v2631
    %v2682 = vsub.f32 1.0, %v2633
    %v2683 = vsub.f32 1.0, %v2635
    %2688 = vrot.lane.b32.xlu0 %v2676, 96
    %v2689 = vpop.permute.xlu0 %2688
    %2690 = vrot.lane.b32.xlu0 %v2677, 96
    %v2691 = vpop.permute.xlu0 %2690
    %2692 = vrot.lane.b32.xlu0 %v2678, 96
    %v2693 = vpop.permute.xlu0 %2692
    %2694 = vrot.lane.b32.xlu0 %v2679, 96
    %v2695 = vpop.permute.xlu0 %2694
    %v2700 = vmul.f32 %v2680, %v2689
    %v2701 = vmul.f32 %v2681, %v2691
    %v2702 = vmul.f32 %v2682, %v2693
    %v2703 = vmul.f32 %v2683, %v2695
    %v2704 = vmul.f32 %v2629, %v2495
    %v2705 = vmul.f32 %v2631, %v2496
    %v2706 = vmul.f32 %v2633, %v2497
    %v2707 = vmul.f32 %v2635, %v2498
    %v2708 = vadd.f32 %v2700, %v2704
    %v2709 = vadd.f32 %v2701, %v2705
    %v2710 = vadd.f32 %v2702, %v2706
    %v2711 = vadd.f32 %v2703, %v2707
    %v2712 = vadd.f32 %v2499, %v2708
    %v2713 = vadd.f32 %v2500, %v2709
    %v2714 = vadd.f32 %v2501, %v2710
    %v2715 = vadd.f32 %v2502, %v2711
    %2720 = vrot.lane.b32.xlu0 %v2708, 96
    %v2721 = vpop.permute.xlu0 %2720
    %2722 = vrot.lane.b32.xlu0 %v2709, 96
    %v2723 = vpop.permute.xlu0 %2722
    %2724 = vrot.lane.b32.xlu0 %v2710, 96
    %v2725 = vpop.permute.xlu0 %2724
    %2726 = vrot.lane.b32.xlu0 %v2711, 96
    %v2727 = vpop.permute.xlu0 %2726
    %v2728 = vsel %vm636, %v2721, 0
    %v2730 = vsel %vm636, %v2723, 0
    %v2732 = vsel %vm636, %v2725, 0
    %v2734 = vsel %vm636, %v2727, 0
    %2736 = vmatprep.subr.mxu0 0.0
    %2737 = vmatpush1.msra.mxu0 0.0
    %2738 = vmatprep.subr.mxu0 0.0
    %2739 = vmatpush1.msra.mxu0 0.0
    %2740 = vmatprep.subr.mxu0 0.0
    %2741 = vmatpush1.msra.mxu0 0.0
    %2742 = vmatprep.subr.mxu0 0.0
    %2743 = vmatpush1.msra.mxu0 0.0
    %2744 = vmatprep.subr.mxu0 0.0
    %2745 = vmatpush1.msra.mxu0 0.0
    %2746 = vmatprep.subr.mxu0 0.0
    %2747 = vmatpush1.msra.mxu0 0.0
    %2748 = vmatprep.subr.mxu0 0.0
    %2749 = vmatpush1.msra.mxu0 0.0
    %2750 = vmatprep.subr.mxu0 0.0
    %2751 = vmatpush1.msra.mxu0 0.0
    %2752 = vmatprep.subr.mxu0 0.0
    %2753 = vmatpush1.msra.mxu0 0.0
    %2754 = vmatprep.subr.mxu0 0.0
    %2755 = vmatpush1.msra.mxu0 0.0
    %2756 = vmatprep.subr.mxu0 0.0
    %2757 = vmatpush1.msra.mxu0 0.0
    %2758 = vmatprep.subr.mxu0 0.0
    %2759 = vmatpush1.msra.mxu0 0.0
    %2760 = vmatprep.subr.mxu0 0.0
    %2761 = vmatpush1.msra.mxu0 %v1684
    %2762 = vmatprep.subr.mxu0 0.0
    %2763 = vmatpush1.msra.mxu0 %v1683
    %2764 = vmatprep.subr.mxu0 0.0
    %2765 = vmatpush1.msra.mxu0 %v1682
    %2766 = vmatprep.subr.mxu0 0.0
    %2767 = vmatpush1.msra.mxu0 %v1681
    %2768 = vmatprep.subr.mxu0 0.0
    %2769 = vmatpush2.msra.mxu0 0.0
    %2770 = vmatprep.subr.mxu0 0.0
    %2771 = vmatpush2.msra.mxu0 0.0
    %2772 = vmatprep.subr.mxu0 0.0
    %2773 = vmatpush2.msra.mxu0 0.0
    %2774 = vmatprep.subr.mxu0 0.0
    %2775 = vmatpush2.msra.mxu0 0.0
    %2776 = vmatprep.subr.mxu0 0.0
    %2777 = vmatpush2.msra.mxu0 0.0
    %2778 = vmatprep.subr.mxu0 0.0
    %2779 = vmatpush2.msra.mxu0 0.0
    %2780 = vmatprep.subr.mxu0 0.0
    %2781 = vmatpush2.msra.mxu0 0.0
    %2782 = vmatprep.subr.mxu0 0.0
    %2783 = vmatpush2.msra.mxu0 0.0
    %2784 = vmatprep.subr.mxu0 0.0
    %2785 = vmatpush2.msra.mxu0 0.0
    %2786 = vmatprep.subr.mxu0 0.0
    %2787 = vmatpush2.msra.mxu0 0.0
    %2788 = vmatprep.subr.mxu0 0.0
    %2789 = vmatpush2.msra.mxu0 0.0
    %2790 = vmatprep.subr.mxu0 0.0
    %2791 = vmatpush2.msra.mxu0 0.0
    %2792 = vmatprep.subr.mxu0 0.0
    %2793 = vmatpush2.msra.mxu0 0.0
    %2794 = vmatprep.subr.mxu0 0.0
    %2795 = vmatpush2.msra.mxu0 0.0
    %2796 = vmatprep.subr.mxu0 0.0
    %2797 = vmatpush2.msra.mxu0 0.0
    %2798 = vmatprep.subr.mxu0 0.0
    %2799 = vmatpush2.msra.mxu0 0.0
    %2800 = vmatprep.mubr.f32.mxu0 0.0
    %2801 = vmatmul.mubr.f32.gmra.mxu0 %v2728
    %v2802 = vpop.f32.mrf.mxu0
    %v2803 = vadd.f32 %v2309, %v2802
    %v2804 = vpop.f32.mrf.mxu0
    %2805 = vmatprep.mubr.f32.mxu0 0.0
    %2806 = vmatmul.mubr.f32.gmra.mxu0 %v2730
    %v2807 = vpop.f32.mrf.mxu0
    %v2808 = vadd.f32 %v2309, %v2807
    %v2809 = vpop.f32.mrf.mxu0
    %2810 = vmatprep.mubr.f32.mxu0 0.0
    %2811 = vmatmul.mubr.f32.gmra.mxu0 %v2732
    %v2812 = vpop.f32.mrf.mxu0
    %v2813 = vadd.f32 %v2309, %v2812
    %v2814 = vpop.f32.mrf.mxu0
    %2815 = vmatprep.mubr.f32.mxu0 0.0
    %2816 = vmatmul.mubr.f32.gmra.mxu0 %v2734
    %v2817 = vpop.f32.mrf.mxu0
    %v2818 = vadd.f32 %v2309, %v2817
    %v2819 = vpop.f32.mrf.mxu0
    %2820 = vdwg.mxu0
    %v2821 = vadd.f32 %v2248, %v2803
    %v2822 = vadd.f32 %v2253, %v2808
    %v2823 = vadd.f32 %v2288, %v2813
    %v2824 = vadd.f32 %v2293, %v2818
    %v2825 = vxor.u32 %v2821, 2147483648
    %v2826 = vxor.u32 %v2822, 2147483648
    %v2827 = vxor.u32 %v2823, 2147483648
    %v2828 = vxor.u32 %v2824, 2147483648
    %v2829 = vmul.f32 %v2825, 1.442695
    %v2830 = vpow.pop %v2829
    %v2831 = vmul.f32 %v2826, 1.442695
    %v2832 = vpow.pop %v2831
    %v2833 = vmul.f32 %v2827, 1.442695
    %v2834 = vpow.pop %v2833
    %v2835 = vmul.f32 %v2828, 1.442695
    %v2836 = vpow.pop %v2835
    %v2837 = vadd.f32 %v2830, 1.0
    %v2838 = vadd.f32 %v2832, 1.0
    %v2839 = vadd.f32 %v2834, 1.0
    %v2840 = vadd.f32 %v2836, 1.0
    %v2841 = vrcp.pop %v2837
    %v2842 = vmul.f32 1.0, %v2841
    %v2843 = vrcp.pop %v2838
    %v2844 = vmul.f32 1.0, %v2843
    %v2845 = vrcp.pop %v2839
    %v2846 = vmul.f32 1.0, %v2845
    %v2847 = vrcp.pop %v2840
    %v2848 = vmul.f32 1.0, %v2847
    %2853 = vrot.lane.b32.xlu0 %v2803, 64
    %v2854 = vpop.permute.xlu0 %2853
    %2855 = vrot.lane.b32.xlu0 %v2808, 64
    %v2856 = vpop.permute.xlu0 %2855
    %2857 = vrot.lane.b32.xlu0 %v2813, 64
    %v2858 = vpop.permute.xlu0 %2857
    %2859 = vrot.lane.b32.xlu0 %v2818, 64
    %v2860 = vpop.permute.xlu0 %2859
    %v2865 = vmul.f32 %v2842, %v2854
    %v2866 = vmul.f32 %v2844, %v2856
    %v2867 = vmul.f32 %v2846, %v2858
    %v2868 = vmul.f32 %v2848, %v2860
    %2873 = vrot.lane.b32.xlu0 %v2865, 64
    %v2874 = vpop.permute.xlu0 %2873
    %2875 = vrot.lane.b32.xlu0 %v2866, 64
    %v2876 = vpop.permute.xlu0 %2875
    %2877 = vrot.lane.b32.xlu0 %v2867, 64
    %v2878 = vpop.permute.xlu0 %2877
    %2879 = vrot.lane.b32.xlu0 %v2868, 64
    %v2880 = vpop.permute.xlu0 %2879
    %v2885 = vadd.f32 %v2248, %v2874
    %v2886 = vadd.f32 %v2253, %v2876
    %v2887 = vadd.f32 %v2288, %v2878
    %v2888 = vadd.f32 %v2293, %v2880
    %v2889 = vtanh.pop %v2885
    %v2890 = vtanh.pop %v2886
    %v2891 = vtanh.pop %v2887
    %v2892 = vtanh.pop %v2888
    %v2893 = vsub.f32 1.0, %v2842
    %v2894 = vsub.f32 1.0, %v2844
    %v2895 = vsub.f32 1.0, %v2846
    %v2896 = vsub.f32 1.0, %v2848
    %2901 = vrot.lane.b32.xlu0 %v2889, 96
    %v2902 = vpop.permute.xlu0 %2901
    %2903 = vrot.lane.b32.xlu0 %v2890, 96
    %v2904 = vpop.permute.xlu0 %2903
    %2905 = vrot.lane.b32.xlu0 %v2891, 96
    %v2906 = vpop.permute.xlu0 %2905
    %2907 = vrot.lane.b32.xlu0 %v2892, 96
    %v2908 = vpop.permute.xlu0 %2907
    %v2913 = vmul.f32 %v2893, %v2902
    %v2914 = vmul.f32 %v2894, %v2904
    %v2915 = vmul.f32 %v2895, %v2906
    %v2916 = vmul.f32 %v2896, %v2908
    %v2917 = vmul.f32 %v2842, %v2708
    %v2918 = vmul.f32 %v2844, %v2709
    %v2919 = vmul.f32 %v2846, %v2710
    %v2920 = vmul.f32 %v2848, %v2711
    %v2921 = vadd.f32 %v2913, %v2917
    %v2922 = vadd.f32 %v2914, %v2918
    %v2923 = vadd.f32 %v2915, %v2919
    %v2924 = vadd.f32 %v2916, %v2920
    %v2925 = vadd.f32 %v2712, %v2921
    %v2926 = vadd.f32 %v2713, %v2922
    %v2927 = vadd.f32 %v2714, %v2923
    %v2928 = vadd.f32 %v2715, %v2924
    %2933 = vrot.lane.b32.xlu0 %v2921, 96
    %v2934 = vpop.permute.xlu0 %2933
    %2935 = vrot.lane.b32.xlu0 %v2922, 96
    %v2936 = vpop.permute.xlu0 %2935
    %2937 = vrot.lane.b32.xlu0 %v2923, 96
    %v2938 = vpop.permute.xlu0 %2937
    %2939 = vrot.lane.b32.xlu0 %v2924, 96
    %v2940 = vpop.permute.xlu0 %2939
    %v2941 = vsel %vm636, %v2934, 0
    %v2943 = vsel %vm636, %v2936, 0
    %v2945 = vsel %vm636, %v2938, 0
    %v2947 = vsel %vm636, %v2940, 0
    %2949 = vmatprep.subr.mxu0 0.0
    %2950 = vmatpush1.msra.mxu0 0.0
    %2951 = vmatprep.subr.mxu0 0.0
    %2952 = vmatpush1.msra.mxu0 0.0
    %2953 = vmatprep.subr.mxu0 0.0
    %2954 = vmatpush1.msra.mxu0 0.0
    %2955 = vmatprep.subr.mxu0 0.0
    %2956 = vmatpush1.msra.mxu0 0.0
    %2957 = vmatprep.subr.mxu0 0.0
    %2958 = vmatpush1.msra.mxu0 0.0
    %2959 = vmatprep.subr.mxu0 0.0
    %2960 = vmatpush1.msra.mxu0 0.0
    %2961 = vmatprep.subr.mxu0 0.0
    %2962 = vmatpush1.msra.mxu0 0.0
    %2963 = vmatprep.subr.mxu0 0.0
    %2964 = vmatpush1.msra.mxu0 0.0
    %2965 = vmatprep.subr.mxu0 0.0
    %2966 = vmatpush1.msra.mxu0 0.0
    %2967 = vmatprep.subr.mxu0 0.0
    %2968 = vmatpush1.msra.mxu0 0.0
    %2969 = vmatprep.subr.mxu0 0.0
    %2970 = vmatpush1.msra.mxu0 0.0
    %2971 = vmatprep.subr.mxu0 0.0
    %2972 = vmatpush1.msra.mxu0 0.0
    %2973 = vmatprep.subr.mxu0 0.0
    %2974 = vmatpush1.msra.mxu0 %v1684
    %2975 = vmatprep.subr.mxu0 0.0
    %2976 = vmatpush1.msra.mxu0 %v1683
    %2977 = vmatprep.subr.mxu0 0.0
    %2978 = vmatpush1.msra.mxu0 %v1682
    %2979 = vmatprep.subr.mxu0 0.0
    %2980 = vmatpush1.msra.mxu0 %v1681
    %2981 = vmatprep.subr.mxu0 0.0
    %2982 = vmatpush2.msra.mxu0 0.0
    %2983 = vmatprep.subr.mxu0 0.0
    %2984 = vmatpush2.msra.mxu0 0.0
    %2985 = vmatprep.subr.mxu0 0.0
    %2986 = vmatpush2.msra.mxu0 0.0
    %2987 = vmatprep.subr.mxu0 0.0
    %2988 = vmatpush2.msra.mxu0 0.0
    %2989 = vmatprep.subr.mxu0 0.0
    %2990 = vmatpush2.msra.mxu0 0.0
    %2991 = vmatprep.subr.mxu0 0.0
    %2992 = vmatpush2.msra.mxu0 0.0
    %2993 = vmatprep.subr.mxu0 0.0
    %2994 = vmatpush2.msra.mxu0 0.0
    %2995 = vmatprep.subr.mxu0 0.0
    %2996 = vmatpush2.msra.mxu0 0.0
    %2997 = vmatprep.subr.mxu0 0.0
    %2998 = vmatpush2.msra.mxu0 0.0
    %2999 = vmatprep.subr.mxu0 0.0
    %3000 = vmatpush2.msra.mxu0 0.0
    %3001 = vmatprep.subr.mxu0 0.0
    %3002 = vmatpush2.msra.mxu0 0.0
    %3003 = vmatprep.subr.mxu0 0.0
    %3004 = vmatpush2.msra.mxu0 0.0
    %3005 = vmatprep.subr.mxu0 0.0
    %3006 = vmatpush2.msra.mxu0 0.0
    %3007 = vmatprep.subr.mxu0 0.0
    %3008 = vmatpush2.msra.mxu0 0.0
    %3009 = vmatprep.subr.mxu0 0.0
    %3010 = vmatpush2.msra.mxu0 0.0
    %3011 = vmatprep.subr.mxu0 0.0
    %3012 = vmatpush2.msra.mxu0 0.0
    %3013 = vmatprep.mubr.f32.mxu0 0.0
    %3014 = vmatmul.mubr.f32.gmra.mxu0 %v2941
    %v3015 = vpop.f32.mrf.mxu0
    %v3016 = vadd.f32 %v2309, %v3015
    %v3017 = vpop.f32.mrf.mxu0
    %3018 = vmatprep.mubr.f32.mxu0 0.0
    %3019 = vmatmul.mubr.f32.gmra.mxu0 %v2943
    %v3020 = vpop.f32.mrf.mxu0
    %v3021 = vadd.f32 %v2309, %v3020
    %v3022 = vpop.f32.mrf.mxu0
    %3023 = vmatprep.mubr.f32.mxu0 0.0
    %3024 = vmatmul.mubr.f32.gmra.mxu0 %v2945
    %v3025 = vpop.f32.mrf.mxu0
    %v3026 = vadd.f32 %v2309, %v3025
    %v3027 = vpop.f32.mrf.mxu0
    %3028 = vmatprep.mubr.f32.mxu0 0.0
    %3029 = vmatmul.mubr.f32.gmra.mxu0 %v2947
    %v3030 = vpop.f32.mrf.mxu0
    %v3031 = vadd.f32 %v2309, %v3030
    %v3032 = vpop.f32.mrf.mxu0
    %3033 = vdwg.mxu0
    %v3034 = vadd.f32 %v2258, %v3016
    %v3035 = vadd.f32 %v2263, %v3021
    %v3036 = vadd.f32 %v2298, %v3026
    %v3037 = vadd.f32 %v2303, %v3031
    %v3038 = vxor.u32 %v3034, 2147483648
    %v3039 = vxor.u32 %v3035, 2147483648
    %v3040 = vxor.u32 %v3036, 2147483648
    %v3041 = vxor.u32 %v3037, 2147483648
    %v3042 = vmul.f32 %v3038, 1.442695
    %v3043 = vpow.pop %v3042
    %v3044 = vmul.f32 %v3039, 1.442695
    %v3045 = vpow.pop %v3044
    %v3046 = vmul.f32 %v3040, 1.442695
    %v3047 = vpow.pop %v3046
    %v3048 = vmul.f32 %v3041, 1.442695
    %v3049 = vpow.pop %v3048
    %v3050 = vadd.f32 %v3043, 1.0
    %v3051 = vadd.f32 %v3045, 1.0
    %v3052 = vadd.f32 %v3047, 1.0
    %v3053 = vadd.f32 %v3049, 1.0
    %v3054 = vrcp.pop %v3050
    %v3055 = vmul.f32 1.0, %v3054
    %v3056 = vrcp.pop %v3051
    %v3057 = vmul.f32 1.0, %v3056
    %v3058 = vrcp.pop %v3052
    %v3059 = vmul.f32 1.0, %v3058
    %v3060 = vrcp.pop %v3053
    %v3061 = vmul.f32 1.0, %v3060
    %3066 = vrot.lane.b32.xlu0 %v3016, 64
    %v3067 = vpop.permute.xlu0 %3066
    %3068 = vrot.lane.b32.xlu0 %v3021, 64
    %v3069 = vpop.permute.xlu0 %3068
    %3070 = vrot.lane.b32.xlu0 %v3026, 64
    %v3071 = vpop.permute.xlu0 %3070
    %3072 = vrot.lane.b32.xlu0 %v3031, 64
    %v3073 = vpop.permute.xlu0 %3072
    %v3078 = vmul.f32 %v3055, %v3067
    %v3079 = vmul.f32 %v3057, %v3069
    %v3080 = vmul.f32 %v3059, %v3071
    %v3081 = vmul.f32 %v3061, %v3073
    %3086 = vrot.lane.b32.xlu0 %v3078, 64
    %v3087 = vpop.permute.xlu0 %3086
    %3088 = vrot.lane.b32.xlu0 %v3079, 64
    %v3089 = vpop.permute.xlu0 %3088
    %3090 = vrot.lane.b32.xlu0 %v3080, 64
    %v3091 = vpop.permute.xlu0 %3090
    %3092 = vrot.lane.b32.xlu0 %v3081, 64
    %v3093 = vpop.permute.xlu0 %3092
    %v3098 = vadd.f32 %v2258, %v3087
    %v3099 = vadd.f32 %v2263, %v3089
    %v3100 = vadd.f32 %v2298, %v3091
    %v3101 = vadd.f32 %v2303, %v3093
    %v3102 = vtanh.pop %v3098
    %v3103 = vtanh.pop %v3099
    %v3104 = vtanh.pop %v3100
    %v3105 = vtanh.pop %v3101
    %v3106 = vsub.f32 1.0, %v3055
    %v3107 = vsub.f32 1.0, %v3057
    %v3108 = vsub.f32 1.0, %v3059
    %v3109 = vsub.f32 1.0, %v3061
    %3114 = vrot.lane.b32.xlu0 %v3102, 96
    %v3115 = vpop.permute.xlu0 %3114
    %3116 = vrot.lane.b32.xlu0 %v3103, 96
    %v3117 = vpop.permute.xlu0 %3116
    %3118 = vrot.lane.b32.xlu0 %v3104, 96
    %v3119 = vpop.permute.xlu0 %3118
    %3120 = vrot.lane.b32.xlu0 %v3105, 96
    %v3121 = vpop.permute.xlu0 %3120
    %v3126 = vmul.f32 %v3106, %v3115
    %v3127 = vmul.f32 %v3107, %v3117
    %v3128 = vmul.f32 %v3108, %v3119
    %v3129 = vmul.f32 %v3109, %v3121
    %v3130 = vmul.f32 %v3055, %v2921
    %v3131 = vmul.f32 %v3057, %v2922
    %v3132 = vmul.f32 %v3059, %v2923
    %v3133 = vmul.f32 %v3061, %v2924
    %v3134 = vadd.f32 %v3126, %v3130
    %v3135 = vadd.f32 %v3127, %v3131
    %v3136 = vadd.f32 %v3128, %v3132
    %v3137 = vadd.f32 %v3129, %v3133
    %v3138 = vadd.f32 %v2925, %v3134
    %v3139 = vadd.f32 %v2926, %v3135
    %v3140 = vadd.f32 %v2927, %v3136
    %v3141 = vadd.f32 %v2928, %v3137
    %v3142 = vmax.f32 %v3138, 0.0
    %v3143 = vmax.f32 %v3139, 0.0
    %v3144 = vmax.f32 %v3140, 0.0
    %v3145 = vmax.f32 %v3141, 0.0
    %3150 = vrot.lane.b32.xlu0 %v3142, 96
    %v3151 = vpop.permute.xlu0 %3150
    %3152 = vrot.lane.b32.xlu0 %v3143, 96
    %v3153 = vpop.permute.xlu0 %3152
    %3154 = vrot.lane.b32.xlu0 %v3144, 96
    %v3155 = vpop.permute.xlu0 %3154
    %3156 = vrot.lane.b32.xlu0 %v3145, 96
    %v3157 = vpop.permute.xlu0 %3156
    %3162 = vst.msk [vmem:[#allocation16] sm:$0xff] %vm636, %v3151
    %3163 = vst.msk [vmem:[#allocation16 + $0x8] sm:$0xff] %vm636, %v3153
    %3164 = vst.msk [vmem:[#allocation16 + $0x10] sm:$0xff] %vm636, %v3155
    %3165 = vst.msk [vmem:[#allocation16 + $0x18] sm:$0xff] %vm636, %v3157
    // Predicated region
    $region74: #{tpu_custom_call.1} parent=1 // pred_check
      _
    $region75: #{tpu_custom_call.1} parent=1 // pred_check_branch
      %3167 = sbr.rel (0) target = $region77
    $region76: #{tpu_custom_call.1} parent=1 // pred_region
      %s3169 = ssub.s32 512, 512
      %3170 = vsyncadd [#allocation4], %s3169
      %s3171 = sshll.u32 [#allocation16], 4
      %s3172 = int_to_ptr.vmem [resolvable:$true] %s3171
      %3177 = dma.vmem_to_hbm [thread:$0]  %s3172, 512, %s10, [#allocation4], 128, 128, 8
    $region77: #{tpu_custom_call.1} parent=1 // pred_fallthru
      _
    // Predicated region
    $region78: #{tpu_custom_call.1} parent=1 // pred_check
      _
    $region79: #{tpu_custom_call.1} parent=1 // pred_check_branch
      %3179 = sbr.rel (0) target = $region81
    $region80: #{tpu_custom_call.1} parent=1 // pred_region
      %3180 = dma.done [#allocation4], 512
    $region81: #{tpu_custom_call.1} parent=1 // pred_fallthru
      _
    %3181 = vsyncpa [#allocation3], 1
    %3182 = vsyncpa [#allocation6], 1
    %3183 = vsyncpa [#allocation9], 1
    %3184 = vsyncpa [#allocation12], 1
    %3185 = vsyncpa [#allocation15], 1
    %3186 = vsyncpa [#allocation4], 1

</llo_original>
